<compile_context>
chip_gen: v6e
topology: v6e:2x2x1
jax: 0.10.0
libtpu: 0.0.40
codegen_flags: <defaults>
</compile_context>

<pallas_src>
import functools

import numpy as np
import jax
import jax.numpy as jnp
from jax import lax
from jax.experimental import pallas as pl
from jax.experimental.pallas import tpu as pltpu

_NH1 = 256      # stage-1 pooled half width (14*16 = 224 valid, padded to 2 vregs)
_NH2 = 256      # stage-2 pooled half width (7*32  = 224 valid, padded to 2 vregs)
_NFC = 128      # FC output lanes (n_classes padded to a full vreg width)


# ---------------------------------------------------------------------------
# Pallas kernels
# ---------------------------------------------------------------------------
def _conv_relu_pool_kernel(xe_ref, xo_ref, w_ref, b_ref, out_ref, *, n_half):
    """Fused 3x3 'same' conv + bias + ReLU + 2x2 max-pool for one tile of images.

    xe_ref / xo_ref : (tb*Ho, 3K) bf16  even / odd 3-row input windows (kh stacked along K)
    w_ref           : (3K, 2*n_half)    bf16 stacked conv weight, columns = [even-w | odd-w]
    b_ref           : (1, n_half)       f32 bias (zero on padding columns)
    out_ref         : (tb*Ho, n_half)   bf16 pooled output
    """
    w = w_ref[...]
    y_even = jnp.dot(xe_ref[...], w, preferred_element_type=jnp.float32)
    y_odd = jnp.dot(xo_ref[...], w, preferred_element_type=jnp.float32)
    y = jnp.maximum(y_even, y_odd)                     # 2x2 max-pool, H direction
    y = jnp.maximum(y[:, :n_half], y[:, n_half:])      # 2x2 max-pool, W (128-aligned halves)
    y = jnp.maximum(y + b_ref[...], 0.0)               # bias + ReLU (commute with the pools)
    out_ref[...] = y.astype(out_ref.dtype)


def _fc_kernel(x_ref, w_ref, b_ref, o_ref):
    acc = jnp.dot(x_ref[...], w_ref[...], preferred_element_type=jnp.float32)
    o_ref[...] = (acc + b_ref[...]).astype(o_ref.dtype)


# ---------------------------------------------------------------------------
# pallas_call wrappers
# ---------------------------------------------------------------------------
def conv_relu_pool(xe, xo, wstack, brow, *, n_half, tm):
    m, k = xe.shape
    in_spec = pl.BlockSpec((tm, k), lambda i: (i, 0))
    return pl.pallas_call(
        functools.partial(_conv_relu_pool_kernel, n_half=n_half),
        out_shape=jax.ShapeDtypeStruct((m, n_half), jnp.bfloat16),
        grid=(m // tm,),
        in_specs=[in_spec, in_spec,
                  pl.BlockSpec(wstack.shape, lambda i: (0, 0)),
                  pl.BlockSpec(brow.shape, lambda i: (0, 0))],
        out_specs=pl.BlockSpec((tm, n_half), lambda i: (i, 0)),
        compiler_params=pltpu.CompilerParams(dimension_semantics=("parallel",)),
    )(xe, xo, wstack, brow)


def fc_matmul(x, w, b, *, tm):
    m, k = x.shape
    n = w.shape[1]
    return pl.pallas_call(
        _fc_kernel,
        out_shape=jax.ShapeDtypeStruct((m, n), jnp.float32),
        grid=(m // tm,),
        in_specs=[pl.BlockSpec((tm, k), lambda i: (i, 0)),
                  pl.BlockSpec((k, n), lambda i: (0, 0)),
                  pl.BlockSpec((1, n), lambda i: (0, 0))],
        out_specs=pl.BlockSpec((tm, n), lambda i: (i, 0)),
        compiler_params=pltpu.CompilerParams(dimension_semantics=("parallel",)),
    )(x, w, b)


# ---------------------------------------------------------------------------
# One-time weight preparation (hoisted out of the forward pass)
# ---------------------------------------------------------------------------
def _prep_conv_weight(w_pt, b_pt, *, W, Cin, Cout, n_half, shift, dtype=jnp.bfloat16):
    """Build the K-stacked matmul weight (3*Wp*Cin, 2*n_half) for the shifted-row conv.

    Rows:    kh*(Wp*Cin) + (w+kw)*Cin + ci                    (Wp = W+2 zero-padded width)
    Columns: (w%2)*n_half + (w//2 + shift)*Cout + c           ([even-w | odd-w] halves)
    `shift` bakes the *next* stage's W zero-padding directly into this stage's output
    columns, so the pooled output can be consumed as-is by the following conv.
    """
    Wp = W + 2
    K = Wp * Cin
    kh, kw, w, ci, co = np.meshgrid(np.arange(3), np.arange(3), np.arange(W),
                                    np.arange(Cin), np.arange(Cout), indexing="ij")
    rows = kh * K + (w + kw) * Cin + ci
    cols = (w % 2) * n_half + (w // 2 + shift) * Cout + co
    vals = jnp.asarray(w_pt)[co, ci, kh, kw]
    wstack = jnp.zeros((3 * K, 2 * n_half), jnp.float32).at[rows, cols].set(vals)
    p = np.arange(W // 2)
    bcols = ((p[:, None] + shift) * Cout + np.arange(Cout)[None, :]).reshape(-1)
    brow = jnp.zeros((1, n_half), jnp.float32).at[0, bcols].set(
        jnp.tile(jnp.asarray(b_pt), W // 2))
    return wstack.astype(dtype), brow


def _prep_fc_weight(w_fc, b_fc, *, Ho=7, Wo=7, C=32, row_stride=_NH2, n_pad=_NFC,
                    dtype=jnp.bfloat16):
    """Fold torch Flatten's (C,H,W) ordering and stage-2 column padding into the FC weight."""
    n_classes = w_fc.shape[0]
    h, w, c = np.meshgrid(np.arange(Ho), np.arange(Wo), np.arange(C), indexing="ij")
    dst = (h * row_stride + w * C + c).reshape(-1)       # index in our flattened a2
    src = (c * (Ho * Wo) + h * Wo + w).reshape(-1)       # torch-flatten index
    w_perm = jnp.zeros((Ho * row_stride, n_classes), jnp.float32).at[dst].set(
        jnp.asarray(w_fc).T[src])
    rhs = jnp.zeros((Ho * row_stride, n_pad), jnp.float32).at[:, :n_classes].set(w_perm)
    brow = jnp.zeros((1, n_pad), jnp.float32).at[0, :n_classes].set(jnp.asarray(b_fc))
    return rhs.astype(dtype), brow


def prepare_params(params):
    """Convert torch-layout parameters into kernel-ready matmul weights (run once)."""
    w1, b1 = _prep_conv_weight(params["w1"], params["b1"], W=28, Cin=1, Cout=16,
                               n_half=_NH1, shift=1)
    w2, b2 = _prep_conv_weight(params["w2"], params["b2"], W=14, Cin=16, Cout=32,
                               n_half=_NH2, shift=0)
    wfc, bfc = _prep_fc_weight(params["w_fc"], params["b_fc"])
    return {"w1": w1, "b1": b1, "w2": w2, "b2": b2, "wfc": wfc, "bfc": bfc}


# ---------------------------------------------------------------------------
# Wrapper glue
# ---------------------------------------------------------------------------
def _pick_tiles(b):
    """Pick the per-grid-step image tile tb (multiple of 8 so every M block is sublane
    aligned) and the zero-padded batch Bp (multiple of tb).  Prefer the largest tile with
    modest padding overhead that still leaves >= 2 grid steps (both v7x TensorCores busy)."""
    cands = [(tb, -(-b // tb) * tb) for tb in (64, 56, 48, 40, 32, 24, 16, 8)]
    for tb, bp in cands:
        if bp - b <= max(8, b // 8) and (bp // tb >= 2 or bp == tb == 8):
            return bp, tb
    return cands[-1][1], 8


def _row_windows(xp, *, ho):
    """Even/odd 3-row windows of the H-zero-padded input, flattened for batched-M matmuls.

    xp: (B, 2*ho + 2, K).  Row p of the result is the concatenation of padded rows
    (2p, 2p+1, 2p+2) [even conv rows] / (2p+1, 2p+2, 2p+3) [odd conv rows] -> (B*ho, 3K).
    """
    b, _, k = xp.shape

    def win(s):
        return jnp.concatenate(
            [xp[:, s:s + 2 * ho:2], xp[:, s + 1:s + 1 + 2 * ho:2],
             xp[:, s + 2:s + 2 + 2 * ho:2]], axis=-1).reshape(b * ho, 3 * k)

    return win(0), win(1)


def cnn_forward(x_nchw, prep, *, n_classes):
    B = x_nchw.shape[0]
    Bp, tb = _pick_tiles(B)

    # Stage 1: Conv(1->16, 3x3, pad 1) + ReLU + MaxPool2.
    x = x_nchw.reshape(B, 28, 28).astype(jnp.bfloat16)
    xp = jnp.pad(x, ((0, Bp - B), (1, 1), (1, 1)))                 # (Bp, 30, 30) bf16
    x1e, x1o = _row_windows(xp, ho=14)                             # (Bp*14, 90) each
    a1 = conv_relu_pool(x1e, x1o, prep["w1"], prep["b1"], n_half=_NH1, tm=tb * 14)
    # a1: (Bp*14, 256) bf16; its columns already carry stage-2's W zero-padding.

    # Stage 2: Conv(16->32, 3x3, pad 1) + ReLU + MaxPool2.
    a1p = jnp.pad(a1.reshape(Bp, 14, _NH1), ((0, 0), (1, 1), (0, 0)))   # H zero-pad rows
    x2e, x2o = _row_windows(a1p, ho=7)                             # (Bp*7, 768) each
    a2 = conv_relu_pool(x2e, x2o, prep["w2"], prep["b2"], n_half=_NH2, tm=tb * 7)

    # Flatten (torch (C,H,W) ordering folded into the FC weight) + Linear.
    logits = fc_matmul(a2.reshape(Bp, 7 * _NH2), prep["wfc"], prep["bfc"], tm=tb)
    return logits[:B, :n_classes]


# ---------------------------------------------------------------------------
# Pure-JAX reference & params
# ---------------------------------------------------------------------------
def _reference_forward(x, params):
    y = lax.conv_general_dilated(x, params["w1"], (1, 1), ((1, 1), (1, 1)),
                                 dimension_numbers=("NCHW", "OIHW", "NCHW"))
    y = jax.nn.relu(y + params["b1"][None, :, None, None])
    y = lax.reduce_window(y, -jnp.inf, lax.max, (1, 1, 2, 2), (1, 1, 2, 2), "VALID")
    y = lax.conv_general_dilated(y, params["w2"], (1, 1), ((1, 1), (1, 1)),
                                 dimension_numbers=("NCHW", "OIHW", "NCHW"))
    y = jax.nn.relu(y + params["b2"][None, :, None, None])
    y = lax.reduce_window(y, -jnp.inf, lax.max, (1, 1, 2, 2), (1, 1, 2, 2), "VALID")
    y = y.reshape(y.shape[0], -1)
    return y @ params["w_fc"].T + params["b_fc"]


def init_params(key, n_classes=10):
    ks = jax.random.split(key, 6)
    return {
        # torch layouts: conv (Cout, Cin, kh, kw), linear (out, in)
        "w1": jax.random.normal(ks[0], (16, 1, 3, 3), jnp.float32) * 0.1,
        "b1": jax.random.normal(ks[1], (16,), jnp.float32) * 0.01,
        "w2": jax.random.normal(ks[2], (32, 16, 3, 3), jnp.float32) * 0.05,
        "b2": jax.random.normal(ks[3], (32,), jnp.float32) * 0.01,
        "w_fc": jax.random.normal(ks[4], (n_classes, 32 * 7 * 7), jnp.float32) * 0.02,
        "b_fc": jax.random.normal(ks[5], (n_classes,), jnp.float32) * 0.01,
    }


if __name__ == "__main__":
    key = jax.random.PRNGKey(0)
    kx, kp = jax.random.split(key)
    # Linear(32*7*7) pins the 28x28 spatial size; keep the batch small for the smoke test.
    x = jax.random.normal(kx, (2, 1, 28, 28), jnp.float32)
    params = init_params(kp, n_classes=10)

    prep = prepare_params(params)                      # hoisted weight prep (runs once)
    fwd = jax.jit(functools.partial(cnn_forward, n_classes=10))
    logits = fwd(x, prep)
    jax.block_until_ready(logits)
    assert logits.shape == (2, 10)
    assert logits.dtype == jnp.float32

    ref = _reference_forward(x, params)
    err = float(jnp.max(jnp.abs(logits - ref)))
    # bf16 activations/weights end-to-end -> loose-ish absolute tolerance on O(0.3) logits.
    assert err < 1e-1, f"mismatch vs pure-JAX reference: max abs err {err}"
    print("KERNEL_OK")
</pallas_src>

<mosaic_0001>
module attributes {stable_mosaic.version = 11 : i64} {
  func.func @_conv_relu_pool_kernel(%arg0: i32, %arg1: memref<112x90xbf16, #tpu.memory_space<vmem>>, %arg2: memref<112x90xbf16, #tpu.memory_space<vmem>>, %arg3: memref<90x512xbf16, #tpu.memory_space<vmem>>, %arg4: memref<1x256xf32, #tpu.memory_space<vmem>>, %arg5: memref<112x256xbf16, #tpu.memory_space<vmem>>) attributes {dimension_semantics = [#tpu.dimension_semantics<parallel>], iteration_bounds = array<i64: 1>, scalar_prefetch = 0 : i64, scratch_operands = 0 : i64, tpu.core_type = #tpu.core_type<tc>, window_params = [{transform_indices = @transform_0, window_bounds = array<i64: 112, 90>}, {transform_indices = @transform_1, window_bounds = array<i64: 112, 90>}, {pipeline_mode = #tpu.pipeline_mode<synchronous>, transform_indices = @transform_2, window_bounds = array<i64: 90, 512>}, {pipeline_mode = #tpu.pipeline_mode<synchronous>, transform_indices = @transform_3, window_bounds = array<i64: 1, 256>}, {transform_indices = @transform_4, window_bounds = array<i64: 112, 256>}]} {
    %c0 = arith.constant 0 : index
    %c0_0 = arith.constant 0 : index
    %0 = vector.load %arg3[%c0, %c0_0] : memref<90x512xbf16, #tpu.memory_space<vmem>>, vector<90x512xbf16>
    %c0_1 = arith.constant 0 : index
    %c0_2 = arith.constant 0 : index
    %1 = vector.load %arg1[%c0_1, %c0_2] : memref<112x90xbf16, #tpu.memory_space<vmem>>, vector<112x90xbf16>
    %cst = arith.constant dense<0.000000e+00> : vector<112x512xf32>
    %2 = tpu.matmul %1, %0, %cst {dimension_numbers = #tpu.dot_dimension_numbers<[1], [0], [0], [1], [0, 0, 1, 1], [], []>} : vector<112x90xbf16>, vector<90x512xbf16>, vector<112x512xf32> -> vector<112x512xf32>
    %c0_3 = arith.constant 0 : index
    %c0_4 = arith.constant 0 : index
    %3 = vector.load %arg2[%c0_3, %c0_4] : memref<112x90xbf16, #tpu.memory_space<vmem>>, vector<112x90xbf16>
    %cst_5 = arith.constant dense<0.000000e+00> : vector<112x512xf32>
    %4 = tpu.matmul %3, %0, %cst_5 {dimension_numbers = #tpu.dot_dimension_numbers<[1], [0], [0], [1], [0, 0, 1, 1], [], []>} : vector<112x90xbf16>, vector<90x512xbf16>, vector<112x512xf32> -> vector<112x512xf32>
    %5 = arith.maximumf %2, %4 : vector<112x512xf32>
    %6 = vector.extract_strided_slice %5 {offsets = [0, 0], sizes = [112, 256], strides = [1, 1]} : vector<112x512xf32> to vector<112x256xf32>
    %7 = vector.extract_strided_slice %5 {offsets = [0, 256], sizes = [112, 256], strides = [1, 1]} : vector<112x512xf32> to vector<112x256xf32>
    %8 = arith.maximumf %6, %7 : vector<112x256xf32>
    %c0_6 = arith.constant 0 : index
    %c0_7 = arith.constant 0 : index
    %9 = vector.load %arg4[%c0_6, %c0_7] : memref<1x256xf32, #tpu.memory_space<vmem>>, vector<1x256xf32>
    %10 = vector.broadcast %9 : vector<1x256xf32> to vector<112x256xf32>
    %11 = arith.addf %8, %10 : vector<112x256xf32>
    %cst_8 = arith.constant 0.000000e+00 : f32
    %12 = vector.broadcast %cst_8 : f32 to vector<112x256xf32>
    %13 = arith.maximumf %11, %12 : vector<112x256xf32>
    %14 = arith.truncf %13 : vector<112x256xf32> to vector<112x256xbf16>
    %c0_9 = arith.constant 0 : index
    %c0_10 = arith.constant 0 : index
    %15 = vector.load %arg5[%c0_9, %c0_10] : memref<112x256xbf16, #tpu.memory_space<vmem>>, vector<112x256xbf16>
    tpu.vector_store %arg5[%c0_9, %c0_10], %14 {strides = array<i32>} : memref<112x256xbf16, #tpu.memory_space<vmem>>, vector<112x256xbf16>,
    return
  }
  func.func @transform_0(%arg0: i32) -> (i32, i32) {
    %c0_i32 = arith.constant 0 : i32
    %c0_i32_0 = arith.constant 0 : i32
    return %arg0, %c0_i32 : i32, i32
  }
  func.func @transform_1(%arg0: i32) -> (i32, i32) {
    %c0_i32 = arith.constant 0 : i32
    %c0_i32_0 = arith.constant 0 : i32
    return %arg0, %c0_i32 : i32, i32
  }
  func.func @transform_2(%arg0: i32) -> (i32, i32) {
    %c0_i32 = arith.constant 0 : i32
    %c0_i32_0 = arith.constant 0 : i32
    %c0_i32_1 = arith.constant 0 : i32
    return %c0_i32, %c0_i32_0 : i32, i32
  }
  func.func @transform_3(%arg0: i32) -> (i32, i32) {
    %c0_i32 = arith.constant 0 : i32
    %c0_i32_0 = arith.constant 0 : i32
    %c0_i32_1 = arith.constant 0 : i32
    return %c0_i32, %c0_i32_0 : i32, i32
  }
  func.func @transform_4(%arg0: i32) -> (i32, i32) {
    %c0_i32 = arith.constant 0 : i32
    %c0_i32_0 = arith.constant 0 : i32
    return %arg0, %c0_i32 : i32, i32
  }
}

module attributes {stable_mosaic.version = 11 : i64} {
  func.func @_conv_relu_pool_kernel(%arg0: i32, %arg1: memref<56x768xbf16, #tpu.memory_space<vmem>>, %arg2: memref<56x768xbf16, #tpu.memory_space<vmem>>, %arg3: memref<768x512xbf16, #tpu.memory_space<vmem>>, %arg4: memref<1x256xf32, #tpu.memory_space<vmem>>, %arg5: memref<56x256xbf16, #tpu.memory_space<vmem>>) attributes {dimension_semantics = [#tpu.dimension_semantics<parallel>], iteration_bounds = array<i64: 1>, scalar_prefetch = 0 : i64, scratch_operands = 0 : i64, tpu.core_type = #tpu.core_type<tc>, window_params = [{transform_indices = @transform_0, window_bounds = array<i64: 56, 768>}, {transform_indices = @transform_1, window_bounds = array<i64: 56, 768>}, {pipeline_mode = #tpu.pipeline_mode<synchronous>, transform_indices = @transform_2, window_bounds = array<i64: 768, 512>}, {pipeline_mode = #tpu.pipeline_mode<synchronous>, transform_indices = @transform_3, window_bounds = array<i64: 1, 256>}, {transform_indices = @transform_4, window_bounds = array<i64: 56, 256>}]} {
    %c0 = arith.constant 0 : index
    %c0_0 = arith.constant 0 : index
    %0 = vector.load %arg3[%c0, %c0_0] : memref<768x512xbf16, #tpu.memory_space<vmem>>, vector<768x512xbf16>
    %c0_1 = arith.constant 0 : index
    %c0_2 = arith.constant 0 : index
    %1 = vector.load %arg1[%c0_1, %c0_2] : memref<56x768xbf16, #tpu.memory_space<vmem>>, vector<56x768xbf16>
    %cst = arith.constant dense<0.000000e+00> : vector<56x512xf32>
    %2 = tpu.matmul %1, %0, %cst {dimension_numbers = #tpu.dot_dimension_numbers<[1], [0], [0], [1], [0, 0, 1, 1], [], []>} : vector<56x768xbf16>, vector<768x512xbf16>, vector<56x512xf32> -> vector<56x512xf32>
    %c0_3 = arith.constant 0 : index
    %c0_4 = arith.constant 0 : index
    %3 = vector.load %arg2[%c0_3, %c0_4] : memref<56x768xbf16, #tpu.memory_space<vmem>>, vector<56x768xbf16>
    %cst_5 = arith.constant dense<0.000000e+00> : vector<56x512xf32>
    %4 = tpu.matmul %3, %0, %cst_5 {dimension_numbers = #tpu.dot_dimension_numbers<[1], [0], [0], [1], [0, 0, 1, 1], [], []>} : vector<56x768xbf16>, vector<768x512xbf16>, vector<56x512xf32> -> vector<56x512xf32>
    %5 = arith.maximumf %2, %4 : vector<56x512xf32>
    %6 = vector.extract_strided_slice %5 {offsets = [0, 0], sizes = [56, 256], strides = [1, 1]} : vector<56x512xf32> to vector<56x256xf32>
    %7 = vector.extract_strided_slice %5 {offsets = [0, 256], sizes = [56, 256], strides = [1, 1]} : vector<56x512xf32> to vector<56x256xf32>
    %8 = arith.maximumf %6, %7 : vector<56x256xf32>
    %c0_6 = arith.constant 0 : index
    %c0_7 = arith.constant 0 : index
    %9 = vector.load %arg4[%c0_6, %c0_7] : memref<1x256xf32, #tpu.memory_space<vmem>>, vector<1x256xf32>
    %10 = vector.broadcast %9 : vector<1x256xf32> to vector<56x256xf32>
    %11 = arith.addf %8, %10 : vector<56x256xf32>
    %cst_8 = arith.constant 0.000000e+00 : f32
    %12 = vector.broadcast %cst_8 : f32 to vector<56x256xf32>
    %13 = arith.maximumf %11, %12 : vector<56x256xf32>
    %14 = arith.truncf %13 : vector<56x256xf32> to vector<56x256xbf16>
    %c0_9 = arith.constant 0 : index
    %c0_10 = arith.constant 0 : index
    %15 = vector.load %arg5[%c0_9, %c0_10] : memref<56x256xbf16, #tpu.memory_space<vmem>>, vector<56x256xbf16>
    tpu.vector_store %arg5[%c0_9, %c0_10], %14 {strides = array<i32>} : memref<56x256xbf16, #tpu.memory_space<vmem>>, vector<56x256xbf16>,
    return
  }
  func.func @transform_0(%arg0: i32) -> (i32, i32) {
    %c0_i32 = arith.constant 0 : i32
    %c0_i32_0 = arith.constant 0 : i32
    return %arg0, %c0_i32 : i32, i32
  }
  func.func @transform_1(%arg0: i32) -> (i32, i32) {
    %c0_i32 = arith.constant 0 : i32
    %c0_i32_0 = arith.constant 0 : i32
    return %arg0, %c0_i32 : i32, i32
  }
  func.func @transform_2(%arg0: i32) -> (i32, i32) {
    %c0_i32 = arith.constant 0 : i32
    %c0_i32_0 = arith.constant 0 : i32
    %c0_i32_1 = arith.constant 0 : i32
    return %c0_i32, %c0_i32_0 : i32, i32
  }
  func.func @transform_3(%arg0: i32) -> (i32, i32) {
    %c0_i32 = arith.constant 0 : i32
    %c0_i32_0 = arith.constant 0 : i32
    %c0_i32_1 = arith.constant 0 : i32
    return %c0_i32, %c0_i32_0 : i32, i32
  }
  func.func @transform_4(%arg0: i32) -> (i32, i32) {
    %c0_i32 = arith.constant 0 : i32
    %c0_i32_0 = arith.constant 0 : i32
    return %arg0, %c0_i32 : i32, i32
  }
}

module attributes {stable_mosaic.version = 11 : i64} {
  func.func @_fc_kernel(%arg0: i32, %arg1: memref<8x1792xbf16, #tpu.memory_space<vmem>>, %arg2: memref<1792x128xbf16, #tpu.memory_space<vmem>>, %arg3: memref<1x128xf32, #tpu.memory_space<vmem>>, %arg4: memref<8x128xf32, #tpu.memory_space<vmem>>) attributes {dimension_semantics = [#tpu.dimension_semantics<parallel>], iteration_bounds = array<i64: 1>, scalar_prefetch = 0 : i64, scratch_operands = 0 : i64, tpu.core_type = #tpu.core_type<tc>, window_params = [{transform_indices = @transform_0, window_bounds = array<i64: 8, 1792>}, {pipeline_mode = #tpu.pipeline_mode<synchronous>, transform_indices = @transform_1, window_bounds = array<i64: 1792, 128>}, {pipeline_mode = #tpu.pipeline_mode<synchronous>, transform_indices = @transform_2, window_bounds = array<i64: 1, 128>}, {transform_indices = @transform_3, window_bounds = array<i64: 8, 128>}]} {
    %c0 = arith.constant 0 : index
    %c0_0 = arith.constant 0 : index
    %0 = vector.load %arg1[%c0, %c0_0] : memref<8x1792xbf16, #tpu.memory_space<vmem>>, vector<8x1792xbf16>
    %c0_1 = arith.constant 0 : index
    %c0_2 = arith.constant 0 : index
    %1 = vector.load %arg2[%c0_1, %c0_2] : memref<1792x128xbf16, #tpu.memory_space<vmem>>, vector<1792x128xbf16>
    %cst = arith.constant dense<0.000000e+00> : vector<8x128xf32>
    %2 = tpu.matmul %0, %1, %cst {dimension_numbers = #tpu.dot_dimension_numbers<[1], [0], [0], [1], [0, 0, 1, 1], [], []>} : vector<8x1792xbf16>, vector<1792x128xbf16>, vector<8x128xf32> -> vector<8x128xf32>
    %c0_3 = arith.constant 0 : index
    %c0_4 = arith.constant 0 : index
    %3 = vector.load %arg3[%c0_3, %c0_4] : memref<1x128xf32, #tpu.memory_space<vmem>>, vector<1x128xf32>
    %4 = vector.broadcast %3 : vector<1x128xf32> to vector<8x128xf32>
    %5 = arith.addf %2, %4 : vector<8x128xf32>
    %c0_5 = arith.constant 0 : index
    %c0_6 = arith.constant 0 : index
    %6 = vector.load %arg4[%c0_5, %c0_6] : memref<8x128xf32, #tpu.memory_space<vmem>>, vector<8x128xf32>
    tpu.vector_store %arg4[%c0_5, %c0_6], %5 {strides = array<i32>} : memref<8x128xf32, #tpu.memory_space<vmem>>, vector<8x128xf32>,
    return
  }
  func.func @transform_0(%arg0: i32) -> (i32, i32) {
    %c0_i32 = arith.constant 0 : i32
    %c0_i32_0 = arith.constant 0 : i32
    return %arg0, %c0_i32 : i32, i32
  }
  func.func @transform_1(%arg0: i32) -> (i32, i32) {
    %c0_i32 = arith.constant 0 : i32
    %c0_i32_0 = arith.constant 0 : i32
    %c0_i32_1 = arith.constant 0 : i32
    return %c0_i32, %c0_i32_0 : i32, i32
  }
  func.func @transform_2(%arg0: i32) -> (i32, i32) {
    %c0_i32 = arith.constant 0 : i32
    %c0_i32_0 = arith.constant 0 : i32
    %c0_i32_1 = arith.constant 0 : i32
    return %c0_i32, %c0_i32_0 : i32, i32
  }
  func.func @transform_3(%arg0: i32) -> (i32, i32) {
    %c0_i32 = arith.constant 0 : i32
    %c0_i32_0 = arith.constant 0 : i32
    return %arg0, %c0_i32 : i32, i32
  }
}

</mosaic_0001>

<llo_original>
// kernel: cnn_forward.3
$region0: #{cnn_forward.3}
  #allocation0 [shape = 'u32[]', space=smem, size = 0x4, offset = 0x4, fixed_abs, tag = 'smem constant byte address 0x4 - core index']
  #allocation1 [shape = 'u32[144,128]{1,0:T(1,128)}', space=vmem, size = 0x12000, scoped, tag = 'internal scratch']
  %s0 = inlined_call_operand.vmem [shape: bf16[112,90], index: 0, kind: input, shape index: {}]
  %s1 = inlined_call_operand.vmem [shape: bf16[112,90], index: 1, kind: input, shape index: {}]
  %s2 = inlined_call_operand.vmem [shape: bf16[90,512], index: 2, kind: input, shape index: {}]
  %s3 = inlined_call_operand.vmem [shape: f32[1,256], index: 3, kind: input, shape index: {}]
  %s4 = inlined_call_operand.vmem [shape: bf16[112,256], index: 4, kind: output, shape index: {}]
  %s5 = sld [smem:[#allocation0]]
  $region26: #{cnn_forward.3} parent=0
    _
  %s7 = ssub.s32 1, %s5
  %s8 = scalar_select 0, %s7, %s5
  // Predicated region
  $region2: #{cnn_forward.3} parent=0 // pred_check
    _
  $region3: #{cnn_forward.3} parent=0 // pred_check_branch
    %10 = sbr.rel (0) target = $region5
  $region4: #{cnn_forward.3} parent=0 // pred_region
    _
  $region5: #{cnn_forward.3} parent=0 // pred_fallthru
    _
  // Predicated region
  $region6: #{cnn_forward.3} parent=0 // pred_check
    _
  $region7: #{cnn_forward.3} parent=0 // pred_check_branch
    %12 = sbr.rel (0) target = $region9
  $region8: #{cnn_forward.3} parent=0 // pred_region
    _
  $region9: #{cnn_forward.3} parent=0 // pred_fallthru
    _
  // Predicated region
  $region10: #{cnn_forward.3} parent=0 // pred_check
    _
  $region11: #{cnn_forward.3} parent=0 // pred_check_branch
    %14 = sbr.rel (0) target = $region13
  $region12: #{cnn_forward.3} parent=0 // pred_region
    _
  $region13: #{cnn_forward.3} parent=0 // pred_fallthru
    _
  // Predicated region
  $region14: #{cnn_forward.3} parent=0 // pred_check
    _
  $region15: #{cnn_forward.3} parent=0 // pred_check_branch
    %16 = sbr.rel (0) target = $region17
  $region16: #{cnn_forward.3} parent=0 // pred_region
    _
  $region17: #{cnn_forward.3} parent=0 // pred_fallthru
    _
  %v18 = vld [vmem:[%s2] sm:$0xff]
  %v19 = vld [vmem:[%s2 + $0x8] sm:$0xff]
  %v20 = vld [vmem:[%s2 + $0x10] sm:$0xff]
  %v21 = vld [vmem:[%s2 + $0x18] sm:$0xff]
  %v22 = vld [vmem:[%s2 + $0x20] sm:$0xff]
  %v23 = vld [vmem:[%s2 + $0x28] sm:$0xff]
  %v24 = vld [vmem:[%s2 + $0x30] sm:$0xff]
  %v25 = vld [vmem:[%s2 + $0x38] sm:$0xff]
  %v26 = vld [vmem:[%s2 + $0x40] sm:$0xff]
  %v27 = vld [vmem:[%s2 + $0x48] sm:$0xff]
  %v28 = vld [vmem:[%s2 + $0x50] sm:$0xff]
  %v29 = vld [vmem:[%s2 + $0x58] sm:$0xff]
  %v30 = vld [vmem:[%s2 + $0x60] sm:$0xff]
  %v31 = vld [vmem:[%s2 + $0x68] sm:$0xff]
  %v32 = vld [vmem:[%s2 + $0x70] sm:$0xff]
  %v33 = vld [vmem:[%s2 + $0x78] sm:$0xff]
  %v34 = vld [vmem:[%s2 + $0x80] sm:$0xff]
  %v35 = vld [vmem:[%s2 + $0x88] sm:$0xff]
  %v36 = vld [vmem:[%s2 + $0x90] sm:$0xff]
  %v37 = vld [vmem:[%s2 + $0x98] sm:$0xff]
  %v38 = vld [vmem:[%s2 + $0xa0] sm:$0xff]
  %v39 = vld [vmem:[%s2 + $0xa8] sm:$0xff]
  %v40 = vld [vmem:[%s2 + $0xb0] sm:$0x11]
  %v41 = vld [vmem:[%s2 + $0xb8] sm:$0x11]
  %v42 = vld [vmem:[%s0] sm:$0xf]
  %v43 = vld [vmem:[%s0 + $0x4] sm:$0xf]
  %v44 = vld [vmem:[%s0 + $0x8] sm:$0xf]
  %v45 = vld [vmem:[%s0 + $0xc] sm:$0xf]
  %v46 = vld [vmem:[%s0 + $0x10] sm:$0xf]
  %v47 = vld [vmem:[%s0 + $0x14] sm:$0xf]
  %v48 = vld [vmem:[%s0 + $0x18] sm:$0xf]
  %v49 = vld [vmem:[%s0 + $0x1c] sm:$0xf]
  %v50 = vld [vmem:[%s0 + $0x20] sm:$0xf]
  %v51 = vld [vmem:[%s0 + $0x24] sm:$0xf]
  %v52 = vld [vmem:[%s0 + $0x28] sm:$0xf]
  %v53 = vld [vmem:[%s0 + $0x2c] sm:$0xf]
  %v54 = vld [vmem:[%s0 + $0x30] sm:$0xf]
  %v55 = vld [vmem:[%s0 + $0x34] sm:$0xf]
  %v70 = vunpack.c.l.b16 %v42
  %v71 = vunpack.c.l.b16 %v43
  %v72 = vunpack.c.l.b16 %v44
  %v73 = vunpack.c.l.b16 %v45
  %v74 = vunpack.c.l.b16 %v46
  %v75 = vunpack.c.l.b16 %v47
  %v76 = vunpack.c.l.b16 %v48
  %v77 = vunpack.c.l.b16 %v49
  %v78 = vunpack.c.l.b16 %v50
  %v79 = vunpack.c.l.b16 %v51
  %v80 = vunpack.c.l.b16 %v52
  %v81 = vunpack.c.l.b16 %v53
  %v82 = vunpack.c.l.b16 %v54
  %v83 = vunpack.c.l.b16 %v55
  %v84 = vpack.c.b16 %v71, %v70
  %v85 = vpack.c.b16 %v73, %v72
  %v86 = vpack.c.b16 %v75, %v74
  %v87 = vpack.c.b16 %v77, %v76
  %v88 = vpack.c.b16 %v79, %v78
  %v89 = vpack.c.b16 %v81, %v80
  %v90 = vpack.c.b16 %v83, %v82
  %v115 = vunpack.c.l.b16 %v18
  %v116 = vunpack.c.h.b16 %v18
  %v117 = vunpack.c.l.b16 %v19
  %v118 = vunpack.c.h.b16 %v19
  %v119 = vunpack.c.l.b16 %v20
  %v120 = vunpack.c.h.b16 %v20
  %v121 = vunpack.c.l.b16 %v21
  %v122 = vunpack.c.h.b16 %v21
  %v123 = vunpack.c.l.b16 %v22
  %v124 = vunpack.c.h.b16 %v22
  %v125 = vunpack.c.l.b16 %v23
  %v126 = vunpack.c.h.b16 %v23
  %v127 = vunpack.c.l.b16 %v24
  %v128 = vunpack.c.h.b16 %v24
  %v129 = vunpack.c.l.b16 %v25
  %v130 = vunpack.c.h.b16 %v25
  %v131 = vunpack.c.l.b16 %v26
  %v132 = vunpack.c.h.b16 %v26
  %v133 = vunpack.c.l.b16 %v27
  %v134 = vunpack.c.h.b16 %v27
  %v135 = vunpack.c.l.b16 %v28
  %v136 = vunpack.c.h.b16 %v28
  %v137 = vunpack.c.l.b16 %v29
  %v138 = vunpack.c.h.b16 %v29
  %v139 = vunpack.c.l.b16 %v30
  %v140 = vunpack.c.h.b16 %v30
  %v141 = vunpack.c.l.b16 %v31
  %v142 = vunpack.c.h.b16 %v31
  %v143 = vunpack.c.l.b16 %v32
  %v144 = vunpack.c.h.b16 %v32
  %v145 = vunpack.c.l.b16 %v33
  %v146 = vunpack.c.h.b16 %v33
  %v147 = vunpack.c.l.b16 %v34
  %v148 = vunpack.c.h.b16 %v34
  %v149 = vunpack.c.l.b16 %v35
  %v150 = vunpack.c.h.b16 %v35
  %v151 = vunpack.c.l.b16 %v36
  %v152 = vunpack.c.h.b16 %v36
  %v153 = vunpack.c.l.b16 %v37
  %v154 = vunpack.c.h.b16 %v37
  %v155 = vunpack.c.l.b16 %v38
  %v156 = vunpack.c.h.b16 %v38
  %v157 = vunpack.c.l.b16 %v39
  %v158 = vunpack.c.h.b16 %v39
  %v159 = vunpack.c.l.b16 %v40
  %v160 = vunpack.c.h.b16 %v40
  %v161 = vunpack.c.l.b16 %v41
  %v162 = vunpack.c.h.b16 %v41
  %v163 = vpack.c.b16 %v119, %v115
  %v164 = vpack.c.b16 %v120, %v116
  %v165 = vpack.c.b16 %v121, %v117
  %v166 = vpack.c.b16 %v122, %v118
  %v167 = vpack.c.b16 %v127, %v123
  %v168 = vpack.c.b16 %v128, %v124
  %v169 = vpack.c.b16 %v129, %v125
  %v170 = vpack.c.b16 %v130, %v126
  %v171 = vpack.c.b16 %v135, %v131
  %v172 = vpack.c.b16 %v136, %v132
  %v173 = vpack.c.b16 %v137, %v133
  %v174 = vpack.c.b16 %v138, %v134
  %v175 = vpack.c.b16 %v143, %v139
  %v176 = vpack.c.b16 %v144, %v140
  %v177 = vpack.c.b16 %v145, %v141
  %v178 = vpack.c.b16 %v146, %v142
  %v179 = vpack.c.b16 %v151, %v147
  %v180 = vpack.c.b16 %v152, %v148
  %v181 = vpack.c.b16 %v153, %v149
  %v182 = vpack.c.b16 %v154, %v150
  %v183 = vpack.c.b16 %v159, %v155
  %v184 = vpack.c.b16 %v160, %v156
  %v185 = vpack.c.b16 %v161, %v157
  %v186 = vpack.c.b16 %v162, %v158
  %vm207 = vcmask 736256
  %v209 = vsel %vm207, %v84, 0
  %v212 = vsel %vm207, %v85, 0
  %v215 = vsel %vm207, %v86, 0
  %v218 = vsel %vm207, %v87, 0
  %v221 = vsel %vm207, %v88, 0
  %v224 = vsel %vm207, %v89, 0
  %v227 = vsel %vm207, %v90, 0
  %vm229 = vcmask 1044480
  %v231 = vsel %vm229, %v183, 0
  %v234 = vsel %vm229, %v184, 0
  %v237 = vsel %vm229, %v185, 0
  %v240 = vsel %vm229, %v186, 0
  %242 = vmatprep.subr.bf16.mxu0 0
  %243 = vmatpush1.bf16.msra.mxu0 0
  %244 = vmatprep.subr.bf16.mxu0 0
  %245 = vmatpush1.bf16.msra.mxu0 0
  %246 = vmatprep.subr.bf16.mxu0 %v234
  %247 = vmatpush1.bf16.msra.mxu0 %v231
  %248 = vmatprep.subr.bf16.mxu0 %v180
  %249 = vmatpush1.bf16.msra.mxu0 %v179
  %250 = vmatprep.subr.bf16.mxu0 %v176
  %251 = vmatpush1.bf16.msra.mxu0 %v175
  %252 = vmatprep.subr.bf16.mxu0 %v172
  %253 = vmatpush1.bf16.msra.mxu0 %v171
  %254 = vmatprep.subr.bf16.mxu0 %v168
  %255 = vmatpush1.bf16.msra.mxu0 %v167
  %256 = vmatprep.subr.bf16.mxu0 %v164
  %257 = vmatpush1.bf16.msra.mxu0 %v163
  %258 = vmatprep.subr.bf16.mxu0 0
  %259 = vmatpush2.bf16.msra.mxu0 0
  %260 = vmatprep.subr.bf16.mxu0 0
  %261 = vmatpush2.bf16.msra.mxu0 0
  %262 = vmatprep.subr.bf16.mxu0 0
  %263 = vmatpush2.bf16.msra.mxu0 0
  %264 = vmatprep.subr.bf16.mxu0 0
  %265 = vmatpush2.bf16.msra.mxu0 0
  %266 = vmatprep.subr.bf16.mxu0 0
  %267 = vmatpush2.bf16.msra.mxu0 0
  %268 = vmatprep.subr.bf16.mxu0 0
  %269 = vmatpush2.bf16.msra.mxu0 0
  %270 = vmatprep.subr.bf16.mxu0 0
  %271 = vmatpush2.bf16.msra.mxu0 0
  %272 = vmatprep.subr.bf16.mxu0 0
  %273 = vmatpush2.bf16.msra.mxu0 0
  %274 = vmatprep.mubr.bf16.mxu0 0
  %275 = vmatmul.mubr.bf16.gmra.mxu0 %v209
  %v276 = vpop.f32.mrf.mxu0
  %v277 = vadd.f32 0.0, %v276
  %v278 = vpop.f32.mrf.mxu0
  %v279 = vadd.f32 0.0, %v278
  %v280 = vpop.f32.mrf.mxu0
  %v281 = vadd.f32 0.0, %v280
  %v282 = vpop.f32.mrf.mxu0
  %v283 = vadd.f32 0.0, %v282
  %284 = vmatprep.mubr.bf16.mxu0 0
  %285 = vmatmul.mubr.bf16.gmra.mxu0 %v212
  %v286 = vpop.f32.mrf.mxu0
  %v287 = vadd.f32 0.0, %v286
  %v288 = vpop.f32.mrf.mxu0
  %v289 = vadd.f32 0.0, %v288
  %v290 = vpop.f32.mrf.mxu0
  %v291 = vadd.f32 0.0, %v290
  %v292 = vpop.f32.mrf.mxu0
  %v293 = vadd.f32 0.0, %v292
  %294 = vmatprep.mubr.bf16.mxu0 0
  %295 = vmatmul.mubr.bf16.gmra.mxu0 %v215
  %v296 = vpop.f32.mrf.mxu0
  %v297 = vadd.f32 0.0, %v296
  %v298 = vpop.f32.mrf.mxu0
  %v299 = vadd.f32 0.0, %v298
  %v300 = vpop.f32.mrf.mxu0
  %v301 = vadd.f32 0.0, %v300
  %v302 = vpop.f32.mrf.mxu0
  %v303 = vadd.f32 0.0, %v302
  %304 = vmatprep.mubr.bf16.mxu0 0
  %305 = vmatmul.mubr.bf16.gmra.mxu0 %v218
  %v306 = vpop.f32.mrf.mxu0
  %v307 = vadd.f32 0.0, %v306
  %v308 = vpop.f32.mrf.mxu0
  %v309 = vadd.f32 0.0, %v308
  %v310 = vpop.f32.mrf.mxu0
  %v311 = vadd.f32 0.0, %v310
  %v312 = vpop.f32.mrf.mxu0
  %v313 = vadd.f32 0.0, %v312
  %314 = vmatprep.mubr.bf16.mxu0 0
  %315 = vmatmul.mubr.bf16.gmra.mxu0 %v221
  %v316 = vpop.f32.mrf.mxu0
  %v317 = vadd.f32 0.0, %v316
  %v318 = vpop.f32.mrf.mxu0
  %v319 = vadd.f32 0.0, %v318
  %v320 = vpop.f32.mrf.mxu0
  %v321 = vadd.f32 0.0, %v320
  %v322 = vpop.f32.mrf.mxu0
  %v323 = vadd.f32 0.0, %v322
  %324 = vmatprep.mubr.bf16.mxu0 0
  %325 = vmatmul.mubr.bf16.gmra.mxu0 %v224
  %v326 = vpop.f32.mrf.mxu0
  %v327 = vadd.f32 0.0, %v326
  %v328 = vpop.f32.mrf.mxu0
  %v329 = vadd.f32 0.0, %v328
  %v330 = vpop.f32.mrf.mxu0
  %v331 = vadd.f32 0.0, %v330
  %v332 = vpop.f32.mrf.mxu0
  %v333 = vadd.f32 0.0, %v332
  %334 = vmatprep.mubr.bf16.mxu0 0
  %335 = vmatmul.mubr.bf16.gmra.mxu0 %v227
  %v336 = vpop.f32.mrf.mxu0
  %v337 = vadd.f32 0.0, %v336
  %v338 = vpop.f32.mrf.mxu0
  %v339 = vadd.f32 0.0, %v338
  %v340 = vpop.f32.mrf.mxu0
  %v341 = vadd.f32 0.0, %v340
  %v342 = vpop.f32.mrf.mxu0
  %v343 = vadd.f32 0.0, %v342
  %344 = vdwg.mxu0
  %345 = vmatprep.subr.bf16.mxu0 0
  %346 = vmatpush1.bf16.msra.mxu0 0
  %347 = vmatprep.subr.bf16.mxu0 0
  %348 = vmatpush1.bf16.msra.mxu0 0
  %349 = vmatprep.subr.bf16.mxu0 %v240
  %350 = vmatpush1.bf16.msra.mxu0 %v237
  %351 = vmatprep.subr.bf16.mxu0 %v182
  %352 = vmatpush1.bf16.msra.mxu0 %v181
  %353 = vmatprep.subr.bf16.mxu0 %v178
  %354 = vmatpush1.bf16.msra.mxu0 %v177
  %355 = vmatprep.subr.bf16.mxu0 %v174
  %356 = vmatpush1.bf16.msra.mxu0 %v173
  %357 = vmatprep.subr.bf16.mxu0 %v170
  %358 = vmatpush1.bf16.msra.mxu0 %v169
  %359 = vmatprep.subr.bf16.mxu0 %v166
  %360 = vmatpush1.bf16.msra.mxu0 %v165
  %361 = vmatprep.subr.bf16.mxu0 0
  %362 = vmatpush2.bf16.msra.mxu0 0
  %363 = vmatprep.subr.bf16.mxu0 0
  %364 = vmatpush2.bf16.msra.mxu0 0
  %365 = vmatprep.subr.bf16.mxu0 0
  %366 = vmatpush2.bf16.msra.mxu0 0
  %367 = vmatprep.subr.bf16.mxu0 0
  %368 = vmatpush2.bf16.msra.mxu0 0
  %369 = vmatprep.subr.bf16.mxu0 0
  %370 = vmatpush2.bf16.msra.mxu0 0
  %371 = vmatprep.subr.bf16.mxu0 0
  %372 = vmatpush2.bf16.msra.mxu0 0
  %373 = vmatprep.subr.bf16.mxu0 0
  %374 = vmatpush2.bf16.msra.mxu0 0
  %375 = vmatprep.subr.bf16.mxu0 0
  %376 = vmatpush2.bf16.msra.mxu0 0
  %377 = vmatprep.mubr.bf16.mxu0 0
  %378 = vmatmul.mubr.bf16.gmra.mxu0 %v209
  %v379 = vpop.f32.mrf.mxu0
  %v380 = vadd.f32 0.0, %v379
  %v381 = vpop.f32.mrf.mxu0
  %v382 = vadd.f32 0.0, %v381
  %v383 = vpop.f32.mrf.mxu0
  %v384 = vadd.f32 0.0, %v383
  %v385 = vpop.f32.mrf.mxu0
  %v386 = vadd.f32 0.0, %v385
  %387 = vmatprep.mubr.bf16.mxu0 0
  %388 = vmatmul.mubr.bf16.gmra.mxu0 %v212
  %v389 = vpop.f32.mrf.mxu0
  %v390 = vadd.f32 0.0, %v389
  %v391 = vpop.f32.mrf.mxu0
  %v392 = vadd.f32 0.0, %v391
  %v393 = vpop.f32.mrf.mxu0
  %v394 = vadd.f32 0.0, %v393
  %v395 = vpop.f32.mrf.mxu0
  %v396 = vadd.f32 0.0, %v395
  %397 = vmatprep.mubr.bf16.mxu0 0
  %398 = vmatmul.mubr.bf16.gmra.mxu0 %v215
  %v399 = vpop.f32.mrf.mxu0
  %v400 = vadd.f32 0.0, %v399
  %v401 = vpop.f32.mrf.mxu0
  %v402 = vadd.f32 0.0, %v401
  %v403 = vpop.f32.mrf.mxu0
  %v404 = vadd.f32 0.0, %v403
  %v405 = vpop.f32.mrf.mxu0
  %v406 = vadd.f32 0.0, %v405
  %407 = vmatprep.mubr.bf16.mxu0 0
  %408 = vmatmul.mubr.bf16.gmra.mxu0 %v218
  %v409 = vpop.f32.mrf.mxu0
  %v410 = vadd.f32 0.0, %v409
  %v411 = vpop.f32.mrf.mxu0
  %v412 = vadd.f32 0.0, %v411
  %v413 = vpop.f32.mrf.mxu0
  %v414 = vadd.f32 0.0, %v413
  %v415 = vpop.f32.mrf.mxu0
  %v416 = vadd.f32 0.0, %v415
  %417 = vmatprep.mubr.bf16.mxu0 0
  %418 = vmatmul.mubr.bf16.gmra.mxu0 %v221
  %v419 = vpop.f32.mrf.mxu0
  %v420 = vadd.f32 0.0, %v419
  %v421 = vpop.f32.mrf.mxu0
  %v422 = vadd.f32 0.0, %v421
  %v423 = vpop.f32.mrf.mxu0
  %v424 = vadd.f32 0.0, %v423
  %v425 = vpop.f32.mrf.mxu0
  %v426 = vadd.f32 0.0, %v425
  %427 = vmatprep.mubr.bf16.mxu0 0
  %428 = vmatmul.mubr.bf16.gmra.mxu0 %v224
  %v429 = vpop.f32.mrf.mxu0
  %v430 = vadd.f32 0.0, %v429
  %v431 = vpop.f32.mrf.mxu0
  %v432 = vadd.f32 0.0, %v431
  %v433 = vpop.f32.mrf.mxu0
  %v434 = vadd.f32 0.0, %v433
  %v435 = vpop.f32.mrf.mxu0
  %v436 = vadd.f32 0.0, %v435
  %437 = vmatprep.mubr.bf16.mxu0 0
  %438 = vmatmul.mubr.bf16.gmra.mxu0 %v227
  %v439 = vpop.f32.mrf.mxu0
  %v440 = vadd.f32 0.0, %v439
  %v441 = vpop.f32.mrf.mxu0
  %v442 = vadd.f32 0.0, %v441
  %v443 = vpop.f32.mrf.mxu0
  %v444 = vadd.f32 0.0, %v443
  %v445 = vpop.f32.mrf.mxu0
  %v446 = vadd.f32 0.0, %v445
  %447 = vdwg.mxu0
  %v448 = vld [vmem:[%s1] sm:$0xf]
  %v449 = vld [vmem:[%s1 + $0x4] sm:$0xf]
  %v450 = vld [vmem:[%s1 + $0x8] sm:$0xf]
  %v451 = vld [vmem:[%s1 + $0xc] sm:$0xf]
  %v452 = vld [vmem:[%s1 + $0x10] sm:$0xf]
  %v453 = vld [vmem:[%s1 + $0x14] sm:$0xf]
  %v454 = vld [vmem:[%s1 + $0x18] sm:$0xf]
  %v455 = vld [vmem:[%s1 + $0x1c] sm:$0xf]
  %v456 = vld [vmem:[%s1 + $0x20] sm:$0xf]
  %v457 = vld [vmem:[%s1 + $0x24] sm:$0xf]
  %v458 = vld [vmem:[%s1 + $0x28] sm:$0xf]
  %v459 = vld [vmem:[%s1 + $0x2c] sm:$0xf]
  %v460 = vld [vmem:[%s1 + $0x30] sm:$0xf]
  %v461 = vld [vmem:[%s1 + $0x34] sm:$0xf]
  %v476 = vunpack.c.l.b16 %v448
  %v477 = vunpack.c.l.b16 %v449
  %v478 = vunpack.c.l.b16 %v450
  %v479 = vunpack.c.l.b16 %v451
  %v480 = vunpack.c.l.b16 %v452
  %v481 = vunpack.c.l.b16 %v453
  %v482 = vunpack.c.l.b16 %v454
  %v483 = vunpack.c.l.b16 %v455
  %v484 = vunpack.c.l.b16 %v456
  %v485 = vunpack.c.l.b16 %v457
  %v486 = vunpack.c.l.b16 %v458
  %v487 = vunpack.c.l.b16 %v459
  %v488 = vunpack.c.l.b16 %v460
  %v489 = vunpack.c.l.b16 %v461
  %v490 = vpack.c.b16 %v477, %v476
  %v491 = vpack.c.b16 %v479, %v478
  %v492 = vpack.c.b16 %v481, %v480
  %v493 = vpack.c.b16 %v483, %v482
  %v494 = vpack.c.b16 %v485, %v484
  %v495 = vpack.c.b16 %v487, %v486
  %v496 = vpack.c.b16 %v489, %v488
  %v498 = vsel %vm207, %v490, 0
  %v501 = vsel %vm207, %v491, 0
  %v504 = vsel %vm207, %v492, 0
  %v507 = vsel %vm207, %v493, 0
  %v510 = vsel %vm207, %v494, 0
  %v513 = vsel %vm207, %v495, 0
  %v516 = vsel %vm207, %v496, 0
  %518 = vmatprep.subr.bf16.mxu0 0
  %519 = vmatpush1.bf16.msra.mxu0 0
  %520 = vmatprep.subr.bf16.mxu0 0
  %521 = vmatpush1.bf16.msra.mxu0 0
  %522 = vmatprep.subr.bf16.mxu0 %v234
  %523 = vmatpush1.bf16.msra.mxu0 %v231
  %524 = vmatprep.subr.bf16.mxu0 %v180
  %525 = vmatpush1.bf16.msra.mxu0 %v179
  %526 = vmatprep.subr.bf16.mxu0 %v176
  %527 = vmatpush1.bf16.msra.mxu0 %v175
  %528 = vmatprep.subr.bf16.mxu0 %v172
  %529 = vmatpush1.bf16.msra.mxu0 %v171
  %530 = vmatprep.subr.bf16.mxu0 %v168
  %531 = vmatpush1.bf16.msra.mxu0 %v167
  %532 = vmatprep.subr.bf16.mxu0 %v164
  %533 = vmatpush1.bf16.msra.mxu0 %v163
  %534 = vmatprep.subr.bf16.mxu0 0
  %535 = vmatpush2.bf16.msra.mxu0 0
  %536 = vmatprep.subr.bf16.mxu0 0
  %537 = vmatpush2.bf16.msra.mxu0 0
  %538 = vmatprep.subr.bf16.mxu0 0
  %539 = vmatpush2.bf16.msra.mxu0 0
  %540 = vmatprep.subr.bf16.mxu0 0
  %541 = vmatpush2.bf16.msra.mxu0 0
  %542 = vmatprep.subr.bf16.mxu0 0
  %543 = vmatpush2.bf16.msra.mxu0 0
  %544 = vmatprep.subr.bf16.mxu0 0
  %545 = vmatpush2.bf16.msra.mxu0 0
  %546 = vmatprep.subr.bf16.mxu0 0
  %547 = vmatpush2.bf16.msra.mxu0 0
  %548 = vmatprep.subr.bf16.mxu0 0
  %549 = vmatpush2.bf16.msra.mxu0 0
  %550 = vmatprep.mubr.bf16.mxu0 0
  %551 = vmatmul.mubr.bf16.gmra.mxu0 %v498
  %v552 = vpop.f32.mrf.mxu0
  %v553 = vadd.f32 0.0, %v552
  %v554 = vpop.f32.mrf.mxu0
  %v555 = vadd.f32 0.0, %v554
  %v556 = vpop.f32.mrf.mxu0
  %v557 = vadd.f32 0.0, %v556
  %v558 = vpop.f32.mrf.mxu0
  %v559 = vadd.f32 0.0, %v558
  %560 = vmatprep.mubr.bf16.mxu0 0
  %561 = vmatmul.mubr.bf16.gmra.mxu0 %v501
  %v562 = vpop.f32.mrf.mxu0
  %v563 = vadd.f32 0.0, %v562
  %v564 = vpop.f32.mrf.mxu0
  %v565 = vadd.f32 0.0, %v564
  %v566 = vpop.f32.mrf.mxu0
  %v567 = vadd.f32 0.0, %v566
  %v568 = vpop.f32.mrf.mxu0
  %v569 = vadd.f32 0.0, %v568
  %570 = vmatprep.mubr.bf16.mxu0 0
  %571 = vmatmul.mubr.bf16.gmra.mxu0 %v504
  %v572 = vpop.f32.mrf.mxu0
  %v573 = vadd.f32 0.0, %v572
  %v574 = vpop.f32.mrf.mxu0
  %v575 = vadd.f32 0.0, %v574
  %v576 = vpop.f32.mrf.mxu0
  %v577 = vadd.f32 0.0, %v576
  %v578 = vpop.f32.mrf.mxu0
  %v579 = vadd.f32 0.0, %v578
  %580 = vmatprep.mubr.bf16.mxu0 0
  %581 = vmatmul.mubr.bf16.gmra.mxu0 %v507
  %v582 = vpop.f32.mrf.mxu0
  %v583 = vadd.f32 0.0, %v582
  %v584 = vpop.f32.mrf.mxu0
  %v585 = vadd.f32 0.0, %v584
  %v586 = vpop.f32.mrf.mxu0
  %v587 = vadd.f32 0.0, %v586
  %v588 = vpop.f32.mrf.mxu0
  %v589 = vadd.f32 0.0, %v588
  %590 = vmatprep.mubr.bf16.mxu0 0
  %591 = vmatmul.mubr.bf16.gmra.mxu0 %v510
  %v592 = vpop.f32.mrf.mxu0
  %v593 = vadd.f32 0.0, %v592
  %v594 = vpop.f32.mrf.mxu0
  %v595 = vadd.f32 0.0, %v594
  %v596 = vpop.f32.mrf.mxu0
  %v597 = vadd.f32 0.0, %v596
  %v598 = vpop.f32.mrf.mxu0
  %v599 = vadd.f32 0.0, %v598
  %600 = vmatprep.mubr.bf16.mxu0 0
  %601 = vmatmul.mubr.bf16.gmra.mxu0 %v513
  %v602 = vpop.f32.mrf.mxu0
  %v603 = vadd.f32 0.0, %v602
  %v604 = vpop.f32.mrf.mxu0
  %v605 = vadd.f32 0.0, %v604
  %v606 = vpop.f32.mrf.mxu0
  %v607 = vadd.f32 0.0, %v606
  %v608 = vpop.f32.mrf.mxu0
  %v609 = vadd.f32 0.0, %v608
  %610 = vmatprep.mubr.bf16.mxu0 0
  %611 = vmatmul.mubr.bf16.gmra.mxu0 %v516
  %v612 = vpop.f32.mrf.mxu0
  %v613 = vadd.f32 0.0, %v612
  %v614 = vpop.f32.mrf.mxu0
  %v615 = vadd.f32 0.0, %v614
  %v616 = vpop.f32.mrf.mxu0
  %v617 = vadd.f32 0.0, %v616
  %v618 = vpop.f32.mrf.mxu0
  %v619 = vadd.f32 0.0, %v618
  %620 = vdwg.mxu0
  %621 = vmatprep.subr.bf16.mxu0 0
  %622 = vmatpush1.bf16.msra.mxu0 0
  %623 = vmatprep.subr.bf16.mxu0 0
  %624 = vmatpush1.bf16.msra.mxu0 0
  %625 = vmatprep.subr.bf16.mxu0 %v240
  %626 = vmatpush1.bf16.msra.mxu0 %v237
  %627 = vmatprep.subr.bf16.mxu0 %v182
  %628 = vmatpush1.bf16.msra.mxu0 %v181
  %629 = vmatprep.subr.bf16.mxu0 %v178
  %630 = vmatpush1.bf16.msra.mxu0 %v177
  %631 = vmatprep.subr.bf16.mxu0 %v174
  %632 = vmatpush1.bf16.msra.mxu0 %v173
  %633 = vmatprep.subr.bf16.mxu0 %v170
  %634 = vmatpush1.bf16.msra.mxu0 %v169
  %635 = vmatprep.subr.bf16.mxu0 %v166
  %636 = vmatpush1.bf16.msra.mxu0 %v165
  %637 = vmatprep.subr.bf16.mxu0 0
  %638 = vmatpush2.bf16.msra.mxu0 0
  %639 = vmatprep.subr.bf16.mxu0 0
  %640 = vmatpush2.bf16.msra.mxu0 0
  %641 = vmatprep.subr.bf16.mxu0 0
  %642 = vmatpush2.bf16.msra.mxu0 0
  %643 = vmatprep.subr.bf16.mxu0 0
  %644 = vmatpush2.bf16.msra.mxu0 0
  %645 = vmatprep.subr.bf16.mxu0 0
  %646 = vmatpush2.bf16.msra.mxu0 0
  %647 = vmatprep.subr.bf16.mxu0 0
  %648 = vmatpush2.bf16.msra.mxu0 0
  %649 = vmatprep.subr.bf16.mxu0 0
  %650 = vmatpush2.bf16.msra.mxu0 0
  %651 = vmatprep.subr.bf16.mxu0 0
  %652 = vmatpush2.bf16.msra.mxu0 0
  %653 = vmatprep.mubr.bf16.mxu0 0
  %654 = vmatmul.mubr.bf16.gmra.mxu0 %v498
  %v655 = vpop.f32.mrf.mxu0
  %v656 = vadd.f32 0.0, %v655
  %v657 = vpop.f32.mrf.mxu0
  %v658 = vadd.f32 0.0, %v657
  %v659 = vpop.f32.mrf.mxu0
  %v660 = vadd.f32 0.0, %v659
  %v661 = vpop.f32.mrf.mxu0
  %v662 = vadd.f32 0.0, %v661
  %663 = vmatprep.mubr.bf16.mxu0 0
  %664 = vmatmul.mubr.bf16.gmra.mxu0 %v501
  %v665 = vpop.f32.mrf.mxu0
  %v666 = vadd.f32 0.0, %v665
  %v667 = vpop.f32.mrf.mxu0
  %v668 = vadd.f32 0.0, %v667
  %v669 = vpop.f32.mrf.mxu0
  %v670 = vadd.f32 0.0, %v669
  %v671 = vpop.f32.mrf.mxu0
  %v672 = vadd.f32 0.0, %v671
  %673 = vmatprep.mubr.bf16.mxu0 0
  %674 = vmatmul.mubr.bf16.gmra.mxu0 %v504
  %v675 = vpop.f32.mrf.mxu0
  %v676 = vadd.f32 0.0, %v675
  %v677 = vpop.f32.mrf.mxu0
  %v678 = vadd.f32 0.0, %v677
  %v679 = vpop.f32.mrf.mxu0
  %v680 = vadd.f32 0.0, %v679
  %v681 = vpop.f32.mrf.mxu0
  %v682 = vadd.f32 0.0, %v681
  %683 = vmatprep.mubr.bf16.mxu0 0
  %684 = vmatmul.mubr.bf16.gmra.mxu0 %v507
  %v685 = vpop.f32.mrf.mxu0
  %v686 = vadd.f32 0.0, %v685
  %v687 = vpop.f32.mrf.mxu0
  %v688 = vadd.f32 0.0, %v687
  %v689 = vpop.f32.mrf.mxu0
  %v690 = vadd.f32 0.0, %v689
  %v691 = vpop.f32.mrf.mxu0
  %v692 = vadd.f32 0.0, %v691
  %693 = vmatprep.mubr.bf16.mxu0 0
  %694 = vmatmul.mubr.bf16.gmra.mxu0 %v510
  %v695 = vpop.f32.mrf.mxu0
  %v696 = vadd.f32 0.0, %v695
  %v697 = vpop.f32.mrf.mxu0
  %v698 = vadd.f32 0.0, %v697
  %v699 = vpop.f32.mrf.mxu0
  %v700 = vadd.f32 0.0, %v699
  %v701 = vpop.f32.mrf.mxu0
  %v702 = vadd.f32 0.0, %v701
  %703 = vmatprep.mubr.bf16.mxu0 0
  %704 = vmatmul.mubr.bf16.gmra.mxu0 %v513
  %v705 = vpop.f32.mrf.mxu0
  %v706 = vadd.f32 0.0, %v705
  %v707 = vpop.f32.mrf.mxu0
  %v708 = vadd.f32 0.0, %v707
  %v709 = vpop.f32.mrf.mxu0
  %v710 = vadd.f32 0.0, %v709
  %v711 = vpop.f32.mrf.mxu0
  %v712 = vadd.f32 0.0, %v711
  %713 = vmatprep.mubr.bf16.mxu0 0
  %714 = vmatmul.mubr.bf16.gmra.mxu0 %v516
  %v715 = vpop.f32.mrf.mxu0
  %v716 = vadd.f32 0.0, %v715
  %v717 = vpop.f32.mrf.mxu0
  %v718 = vadd.f32 0.0, %v717
  %v719 = vpop.f32.mrf.mxu0
  %v720 = vadd.f32 0.0, %v719
  %v721 = vpop.f32.mrf.mxu0
  %v722 = vadd.f32 0.0, %v721
  %723 = vdwg.mxu0
  %v724 = vmax.f32 %v277, %v553
  %v725 = vmax.f32 %v279, %v555
  %v726 = vmax.f32 %v380, %v656
  %v727 = vmax.f32 %v382, %v658
  %v728 = vmax.f32 %v281, %v557
  %v729 = vmax.f32 %v283, %v559
  %v730 = vmax.f32 %v384, %v660
  %v731 = vmax.f32 %v386, %v662
  %v732 = vmax.f32 %v287, %v563
  %v733 = vmax.f32 %v289, %v565
  %v734 = vmax.f32 %v390, %v666
  %v735 = vmax.f32 %v392, %v668
  %v736 = vmax.f32 %v291, %v567
  %v737 = vmax.f32 %v293, %v569
  %v738 = vmax.f32 %v394, %v670
  %v739 = vmax.f32 %v396, %v672
  %v740 = vmax.f32 %v297, %v573
  %v741 = vmax.f32 %v299, %v575
  %v742 = vmax.f32 %v400, %v676
  %v743 = vmax.f32 %v402, %v678
  %v744 = vmax.f32 %v301, %v577
  %v745 = vmax.f32 %v303, %v579
  %v746 = vmax.f32 %v404, %v680
  %v747 = vmax.f32 %v406, %v682
  %v748 = vmax.f32 %v307, %v583
  %v749 = vmax.f32 %v309, %v585
  %v750 = vmax.f32 %v410, %v686
  %v751 = vmax.f32 %v412, %v688
  %v752 = vmax.f32 %v311, %v587
  %v753 = vmax.f32 %v313, %v589
  %v754 = vmax.f32 %v414, %v690
  %v755 = vmax.f32 %v416, %v692
  %v756 = vmax.f32 %v317, %v593
  %v757 = vmax.f32 %v319, %v595
  %v758 = vmax.f32 %v420, %v696
  %v759 = vmax.f32 %v422, %v698
  %v760 = vmax.f32 %v321, %v597
  %v761 = vmax.f32 %v323, %v599
  %v762 = vmax.f32 %v424, %v700
  %v763 = vmax.f32 %v426, %v702
  %v764 = vmax.f32 %v327, %v603
  %v765 = vmax.f32 %v329, %v605
  %v766 = vmax.f32 %v430, %v706
  %v767 = vmax.f32 %v432, %v708
  %v768 = vmax.f32 %v331, %v607
  %v769 = vmax.f32 %v333, %v609
  %v770 = vmax.f32 %v434, %v710
  %v771 = vmax.f32 %v436, %v712
  %v772 = vmax.f32 %v337, %v613
  %v773 = vmax.f32 %v339, %v615
  %v774 = vmax.f32 %v440, %v716
  %v775 = vmax.f32 %v442, %v718
  %v776 = vmax.f32 %v341, %v617
  %v777 = vmax.f32 %v343, %v619
  %v778 = vmax.f32 %v444, %v720
  %v779 = vmax.f32 %v446, %v722
  %v780 = vmax.f32 %v724, %v726
  %v781 = vmax.f32 %v725, %v727
  %v782 = vmax.f32 %v728, %v730
  %v783 = vmax.f32 %v729, %v731
  %v784 = vmax.f32 %v732, %v734
  %v785 = vmax.f32 %v733, %v735
  %v786 = vmax.f32 %v736, %v738
  %v787 = vmax.f32 %v737, %v739
  %v788 = vmax.f32 %v740, %v742
  %v789 = vmax.f32 %v741, %v743
  %v790 = vmax.f32 %v744, %v746
  %v791 = vmax.f32 %v745, %v747
  %v792 = vmax.f32 %v748, %v750
  %v793 = vmax.f32 %v749, %v751
  %v794 = vmax.f32 %v752, %v754
  %v795 = vmax.f32 %v753, %v755
  %v796 = vmax.f32 %v756, %v758
  %v797 = vmax.f32 %v757, %v759
  %v798 = vmax.f32 %v760, %v762
  %v799 = vmax.f32 %v761, %v763
  %v800 = vmax.f32 %v764, %v766
  %v801 = vmax.f32 %v765, %v767
  %v802 = vmax.f32 %v768, %v770
  %v803 = vmax.f32 %v769, %v771
  %v804 = vmax.f32 %v772, %v774
  %v805 = vmax.f32 %v773, %v775
  %v806 = vmax.f32 %v776, %v778
  %v807 = vmax.f32 %v777, %v779
  %v808 = vld [vmem:[%s3] sm:$0x3]
  %v810 = vlaneseq
  %v811 = vshrl.u32 %v810, 7
  %v812 = vsub.s32 0, %v811
  %v813 = vrot.slane %v808, %v812
  %v814 = vlaneseq
  %v815 = vshrl.u32 %v814, 7
  %v816 = vsub.s32 1, %v815
  %v817 = vrot.slane %v808, %v816
  %v820 = vadd.f32 %v780, %v813
  %v821 = vadd.f32 %v781, %v817
  %v822 = vadd.f32 %v782, %v813
  %v823 = vadd.f32 %v783, %v817
  %v824 = vadd.f32 %v784, %v813
  %v825 = vadd.f32 %v785, %v817
  %v826 = vadd.f32 %v786, %v813
  %v827 = vadd.f32 %v787, %v817
  %v828 = vadd.f32 %v788, %v813
  %v829 = vadd.f32 %v789, %v817
  %v830 = vadd.f32 %v790, %v813
  %v831 = vadd.f32 %v791, %v817
  %v832 = vadd.f32 %v792, %v813
  %v833 = vadd.f32 %v793, %v817
  %v834 = vadd.f32 %v794, %v813
  %v835 = vadd.f32 %v795, %v817
  %v836 = vadd.f32 %v796, %v813
  %v837 = vadd.f32 %v797, %v817
  %v838 = vadd.f32 %v798, %v813
  %v839 = vadd.f32 %v799, %v817
  %v840 = vadd.f32 %v800, %v813
  %v841 = vadd.f32 %v801, %v817
  %v842 = vadd.f32 %v802, %v813
  %v843 = vadd.f32 %v803, %v817
  %v844 = vadd.f32 %v804, %v813
  %v845 = vadd.f32 %v805, %v817
  %v846 = vadd.f32 %v806, %v813
  %v847 = vadd.f32 %v807, %v817
  %v848 = vmax.f32 %v820, 0.0
  %v849 = vmax.f32 %v821, 0.0
  %v850 = vmax.f32 %v822, 0.0
  %v851 = vmax.f32 %v823, 0.0
  %v852 = vmax.f32 %v824, 0.0
  %v853 = vmax.f32 %v825, 0.0
  %v854 = vmax.f32 %v826, 0.0
  %v855 = vmax.f32 %v827, 0.0
  %v856 = vmax.f32 %v828, 0.0
  %v857 = vmax.f32 %v829, 0.0
  %v858 = vmax.f32 %v830, 0.0
  %v859 = vmax.f32 %v831, 0.0
  %v860 = vmax.f32 %v832, 0.0
  %v861 = vmax.f32 %v833, 0.0
  %v862 = vmax.f32 %v834, 0.0
  %v863 = vmax.f32 %v835, 0.0
  %v864 = vmax.f32 %v836, 0.0
  %v865 = vmax.f32 %v837, 0.0
  %v866 = vmax.f32 %v838, 0.0
  %v867 = vmax.f32 %v839, 0.0
  %v868 = vmax.f32 %v840, 0.0
  %v869 = vmax.f32 %v841, 0.0
  %v870 = vmax.f32 %v842, 0.0
  %v871 = vmax.f32 %v843, 0.0
  %v872 = vmax.f32 %v844, 0.0
  %v873 = vmax.f32 %v845, 0.0
  %v874 = vmax.f32 %v846, 0.0
  %v875 = vmax.f32 %v847, 0.0
  %v876 = vpack.c.bf16 %v850, %v848
  %v877 = vpack.c.bf16 %v851, %v849
  %v878 = vpack.c.bf16 %v854, %v852
  %v879 = vpack.c.bf16 %v855, %v853
  %v880 = vpack.c.bf16 %v858, %v856
  %v881 = vpack.c.bf16 %v859, %v857
  %v882 = vpack.c.bf16 %v862, %v860
  %v883 = vpack.c.bf16 %v863, %v861
  %v884 = vpack.c.bf16 %v866, %v864
  %v885 = vpack.c.bf16 %v867, %v865
  %v886 = vpack.c.bf16 %v870, %v868
  %v887 = vpack.c.bf16 %v871, %v869
  %v888 = vpack.c.bf16 %v874, %v872
  %v889 = vpack.c.bf16 %v875, %v873
  %v904 = vunpack.c.l.b16 %v876
  %v905 = vunpack.c.l.b16 %v877
  %v906 = vunpack.c.h.b16 %v876
  %v907 = vunpack.c.h.b16 %v877
  %v908 = vunpack.c.l.b16 %v878
  %v909 = vunpack.c.l.b16 %v879
  %v910 = vunpack.c.h.b16 %v878
  %v911 = vunpack.c.h.b16 %v879
  %v912 = vunpack.c.l.b16 %v880
  %v913 = vunpack.c.l.b16 %v881
  %v914 = vunpack.c.h.b16 %v880
  %v915 = vunpack.c.h.b16 %v881
  %v916 = vunpack.c.l.b16 %v882
  %v917 = vunpack.c.l.b16 %v883
  %v918 = vunpack.c.h.b16 %v882
  %v919 = vunpack.c.h.b16 %v883
  %v920 = vunpack.c.l.b16 %v884
  %v921 = vunpack.c.l.b16 %v885
  %v922 = vunpack.c.h.b16 %v884
  %v923 = vunpack.c.h.b16 %v885
  %v924 = vunpack.c.l.b16 %v886
  %v925 = vunpack.c.l.b16 %v887
  %v926 = vunpack.c.h.b16 %v886
  %v927 = vunpack.c.h.b16 %v887
  %v928 = vunpack.c.l.b16 %v888
  %v929 = vunpack.c.l.b16 %v889
  %v930 = vunpack.c.h.b16 %v888
  %v931 = vunpack.c.h.b16 %v889
  %v932 = vpack.c.b16 %v905, %v904
  %v933 = vpack.c.b16 %v907, %v906
  %v934 = vpack.c.b16 %v909, %v908
  %v935 = vpack.c.b16 %v911, %v910
  %v936 = vpack.c.b16 %v913, %v912
  %v937 = vpack.c.b16 %v915, %v914
  %v938 = vpack.c.b16 %v917, %v916
  %v939 = vpack.c.b16 %v919, %v918
  %v940 = vpack.c.b16 %v921, %v920
  %v941 = vpack.c.b16 %v923, %v922
  %v942 = vpack.c.b16 %v925, %v924
  %v943 = vpack.c.b16 %v927, %v926
  %v944 = vpack.c.b16 %v929, %v928
  %v945 = vpack.c.b16 %v931, %v930
  %960 = vst [vmem:[%s4] sm:$0xff] %v932
  %961 = vst [vmem:[%s4 + $0x8] sm:$0xff] %v933
  %962 = vst [vmem:[%s4 + $0x10] sm:$0xff] %v934
  %963 = vst [vmem:[%s4 + $0x18] sm:$0xff] %v935
  %964 = vst [vmem:[%s4 + $0x20] sm:$0xff] %v936
  %965 = vst [vmem:[%s4 + $0x28] sm:$0xff] %v937
  %966 = vst [vmem:[%s4 + $0x30] sm:$0xff] %v938
  %967 = vst [vmem:[%s4 + $0x38] sm:$0xff] %v939
  %968 = vst [vmem:[%s4 + $0x40] sm:$0xff] %v940
  %969 = vst [vmem:[%s4 + $0x48] sm:$0xff] %v941
  %970 = vst [vmem:[%s4 + $0x50] sm:$0xff] %v942
  %971 = vst [vmem:[%s4 + $0x58] sm:$0xff] %v943
  %972 = vst [vmem:[%s4 + $0x60] sm:$0xff] %v944
  %973 = vst [vmem:[%s4 + $0x68] sm:$0xff] %v945
  // Predicated region
  $region18: #{cnn_forward.3} parent=0 // pred_check
    _
  $region19: #{cnn_forward.3} parent=0 // pred_check_branch
    %975 = sbr.rel (0) target = $region21
  $region20: #{cnn_forward.3} parent=0 // pred_region
    _
  $region21: #{cnn_forward.3} parent=0 // pred_fallthru
    _
  // Predicated region
  $region22: #{cnn_forward.3} parent=0 // pred_check
    _
  $region23: #{cnn_forward.3} parent=0 // pred_check_branch
    %977 = sbr.rel (0) target = $region25
  $region24: #{cnn_forward.3} parent=0 // pred_region
    _
  $region25: #{cnn_forward.3} parent=0 // pred_fallthru
    _

// kernel: cnn_forward.5
$region0: #{cnn_forward.5}
  #allocation0 [shape = 'u32[]', space=smem, size = 0x4, offset = 0x4, fixed_abs, tag = 'smem constant byte address 0x4 - core index']
  #allocation1 [shape = 'u32[144,128]{1,0:T(1,128)}', space=vmem, size = 0x12000, scoped, tag = 'internal scratch']
  %s0 = inlined_call_operand.vmem [shape: bf16[8,1792], index: 0, kind: input, shape index: {}]
  %s1 = inlined_call_operand.vmem [shape: bf16[1792,128], index: 1, kind: input, shape index: {}]
  %s2 = inlined_call_operand.vmem [shape: f32[1,128], index: 2, kind: input, shape index: {}]
  %s3 = inlined_call_operand.vmem [shape: f32[8,128], index: 3, kind: output, shape index: {}]
  %s4 = sld [smem:[#allocation0]]
  $region22: #{cnn_forward.5} parent=0
    _
  %s6 = ssub.s32 1, %s4
  %s7 = scalar_select 0, %s6, %s4
  // Predicated region
  $region2: #{cnn_forward.5} parent=0 // pred_check
    _
  $region3: #{cnn_forward.5} parent=0 // pred_check_branch
    %9 = sbr.rel (0) target = $region5
  $region4: #{cnn_forward.5} parent=0 // pred_region
    _
  $region5: #{cnn_forward.5} parent=0 // pred_fallthru
    _
  // Predicated region
  $region6: #{cnn_forward.5} parent=0 // pred_check
    _
  $region7: #{cnn_forward.5} parent=0 // pred_check_branch
    %11 = sbr.rel (0) target = $region9
  $region8: #{cnn_forward.5} parent=0 // pred_region
    _
  $region9: #{cnn_forward.5} parent=0 // pred_fallthru
    _
  // Predicated region
  $region10: #{cnn_forward.5} parent=0 // pred_check
    _
  $region11: #{cnn_forward.5} parent=0 // pred_check_branch
    %13 = sbr.rel (0) target = $region13
  $region12: #{cnn_forward.5} parent=0 // pred_region
    _
  $region13: #{cnn_forward.5} parent=0 // pred_fallthru
    _
  %v15 = vld [vmem:[%s0] sm:$0xff]
  %v16 = vld [vmem:[%s0 + $0x8] sm:$0xff]
  %v17 = vld [vmem:[%s0 + $0x10] sm:$0xff]
  %v18 = vld [vmem:[%s0 + $0x18] sm:$0xff]
  %v19 = vld [vmem:[%s0 + $0x20] sm:$0xff]
  %v20 = vld [vmem:[%s0 + $0x28] sm:$0xff]
  %v21 = vld [vmem:[%s0 + $0x30] sm:$0xff]
  %v22 = vld [vmem:[%s1] sm:$0xf]
  %v23 = vld [vmem:[%s1 + $0x4] sm:$0xf]
  %v24 = vld [vmem:[%s1 + $0x8] sm:$0xf]
  %v25 = vld [vmem:[%s1 + $0xc] sm:$0xf]
  %v26 = vld [vmem:[%s1 + $0x10] sm:$0xf]
  %v27 = vld [vmem:[%s1 + $0x14] sm:$0xf]
  %v28 = vld [vmem:[%s1 + $0x18] sm:$0xf]
  %v29 = vld [vmem:[%s1 + $0x1c] sm:$0xf]
  %v30 = vld [vmem:[%s1 + $0x20] sm:$0xf]
  %v31 = vld [vmem:[%s1 + $0x24] sm:$0xf]
  %v32 = vld [vmem:[%s1 + $0x28] sm:$0xf]
  %v33 = vld [vmem:[%s1 + $0x2c] sm:$0xf]
  %v34 = vld [vmem:[%s1 + $0x30] sm:$0xf]
  %v35 = vld [vmem:[%s1 + $0x34] sm:$0xf]
  %v36 = vld [vmem:[%s1 + $0x38] sm:$0xf]
  %v37 = vld [vmem:[%s1 + $0x3c] sm:$0xf]
  %v38 = vld [vmem:[%s1 + $0x40] sm:$0xf]
  %v39 = vld [vmem:[%s1 + $0x44] sm:$0xf]
  %v40 = vld [vmem:[%s1 + $0x48] sm:$0xf]
  %v41 = vld [vmem:[%s1 + $0x4c] sm:$0xf]
  %v42 = vld [vmem:[%s1 + $0x50] sm:$0xf]
  %v43 = vld [vmem:[%s1 + $0x54] sm:$0xf]
  %v44 = vld [vmem:[%s1 + $0x58] sm:$0xf]
  %v45 = vld [vmem:[%s1 + $0x5c] sm:$0xf]
  %v46 = vld [vmem:[%s1 + $0x60] sm:$0xf]
  %v47 = vld [vmem:[%s1 + $0x64] sm:$0xf]
  %v48 = vld [vmem:[%s1 + $0x68] sm:$0xf]
  %v49 = vld [vmem:[%s1 + $0x6c] sm:$0xf]
  %v50 = vld [vmem:[%s1 + $0x70] sm:$0xf]
  %v51 = vld [vmem:[%s1 + $0x74] sm:$0xf]
  %v52 = vld [vmem:[%s1 + $0x78] sm:$0xf]
  %v53 = vld [vmem:[%s1 + $0x7c] sm:$0xf]
  %v54 = vld [vmem:[%s1 + $0x80] sm:$0xf]
  %v55 = vld [vmem:[%s1 + $0x84] sm:$0xf]
  %v56 = vld [vmem:[%s1 + $0x88] sm:$0xf]
  %v57 = vld [vmem:[%s1 + $0x8c] sm:$0xf]
  %v58 = vld [vmem:[%s1 + $0x90] sm:$0xf]
  %v59 = vld [vmem:[%s1 + $0x94] sm:$0xf]
  %v60 = vld [vmem:[%s1 + $0x98] sm:$0xf]
  %v61 = vld [vmem:[%s1 + $0x9c] sm:$0xf]
  %v62 = vld [vmem:[%s1 + $0xa0] sm:$0xf]
  %v63 = vld [vmem:[%s1 + $0xa4] sm:$0xf]
  %v64 = vld [vmem:[%s1 + $0xa8] sm:$0xf]
  %v65 = vld [vmem:[%s1 + $0xac] sm:$0xf]
  %v66 = vld [vmem:[%s1 + $0xb0] sm:$0xf]
  %v67 = vld [vmem:[%s1 + $0xb4] sm:$0xf]
  %v68 = vld [vmem:[%s1 + $0xb8] sm:$0xf]
  %v69 = vld [vmem:[%s1 + $0xbc] sm:$0xf]
  %v70 = vld [vmem:[%s1 + $0xc0] sm:$0xf]
  %v71 = vld [vmem:[%s1 + $0xc4] sm:$0xf]
  %v72 = vld [vmem:[%s1 + $0xc8] sm:$0xf]
  %v73 = vld [vmem:[%s1 + $0xcc] sm:$0xf]
  %v74 = vld [vmem:[%s1 + $0xd0] sm:$0xf]
  %v75 = vld [vmem:[%s1 + $0xd4] sm:$0xf]
  %v76 = vld [vmem:[%s1 + $0xd8] sm:$0xf]
  %v77 = vld [vmem:[%s1 + $0xdc] sm:$0xf]
  %v78 = vld [vmem:[%s1 + $0xe0] sm:$0xf]
  %v79 = vld [vmem:[%s1 + $0xe4] sm:$0xf]
  %v80 = vld [vmem:[%s1 + $0xe8] sm:$0xf]
  %v81 = vld [vmem:[%s1 + $0xec] sm:$0xf]
  %v82 = vld [vmem:[%s1 + $0xf0] sm:$0xf]
  %v83 = vld [vmem:[%s1 + $0xf4] sm:$0xf]
  %v84 = vld [vmem:[%s1 + $0xf8] sm:$0xf]
  %v85 = vld [vmem:[%s1 + $0xfc] sm:$0xf]
  %v86 = vld [vmem:[%s1 + $0x100] sm:$0xf]
  %v87 = vld [vmem:[%s1 + $0x104] sm:$0xf]
  %v88 = vld [vmem:[%s1 + $0x108] sm:$0xf]
  %v89 = vld [vmem:[%s1 + $0x10c] sm:$0xf]
  %v90 = vld [vmem:[%s1 + $0x110] sm:$0xf]
  %v91 = vld [vmem:[%s1 + $0x114] sm:$0xf]
  %v92 = vld [vmem:[%s1 + $0x118] sm:$0xf]
  %v93 = vld [vmem:[%s1 + $0x11c] sm:$0xf]
  %v94 = vld [vmem:[%s1 + $0x120] sm:$0xf]
  %v95 = vld [vmem:[%s1 + $0x124] sm:$0xf]
  %v96 = vld [vmem:[%s1 + $0x128] sm:$0xf]
  %v97 = vld [vmem:[%s1 + $0x12c] sm:$0xf]
  %v98 = vld [vmem:[%s1 + $0x130] sm:$0xf]
  %v99 = vld [vmem:[%s1 + $0x134] sm:$0xf]
  %v100 = vld [vmem:[%s1 + $0x138] sm:$0xf]
  %v101 = vld [vmem:[%s1 + $0x13c] sm:$0xf]
  %v102 = vld [vmem:[%s1 + $0x140] sm:$0xf]
  %v103 = vld [vmem:[%s1 + $0x144] sm:$0xf]
  %v104 = vld [vmem:[%s1 + $0x148] sm:$0xf]
  %v105 = vld [vmem:[%s1 + $0x14c] sm:$0xf]
  %v106 = vld [vmem:[%s1 + $0x150] sm:$0xf]
  %v107 = vld [vmem:[%s1 + $0x154] sm:$0xf]
  %v108 = vld [vmem:[%s1 + $0x158] sm:$0xf]
  %v109 = vld [vmem:[%s1 + $0x15c] sm:$0xf]
  %v110 = vld [vmem:[%s1 + $0x160] sm:$0xf]
  %v111 = vld [vmem:[%s1 + $0x164] sm:$0xf]
  %v112 = vld [vmem:[%s1 + $0x168] sm:$0xf]
  %v113 = vld [vmem:[%s1 + $0x16c] sm:$0xf]
  %v114 = vld [vmem:[%s1 + $0x170] sm:$0xf]
  %v115 = vld [vmem:[%s1 + $0x174] sm:$0xf]
  %v116 = vld [vmem:[%s1 + $0x178] sm:$0xf]
  %v117 = vld [vmem:[%s1 + $0x17c] sm:$0xf]
  %v118 = vld [vmem:[%s1 + $0x180] sm:$0xf]
  %v119 = vld [vmem:[%s1 + $0x184] sm:$0xf]
  %v120 = vld [vmem:[%s1 + $0x188] sm:$0xf]
  %v121 = vld [vmem:[%s1 + $0x18c] sm:$0xf]
  %v122 = vld [vmem:[%s1 + $0x190] sm:$0xf]
  %v123 = vld [vmem:[%s1 + $0x194] sm:$0xf]
  %v124 = vld [vmem:[%s1 + $0x198] sm:$0xf]
  %v125 = vld [vmem:[%s1 + $0x19c] sm:$0xf]
  %v126 = vld [vmem:[%s1 + $0x1a0] sm:$0xf]
  %v127 = vld [vmem:[%s1 + $0x1a4] sm:$0xf]
  %v128 = vld [vmem:[%s1 + $0x1a8] sm:$0xf]
  %v129 = vld [vmem:[%s1 + $0x1ac] sm:$0xf]
  %v130 = vld [vmem:[%s1 + $0x1b0] sm:$0xf]
  %v131 = vld [vmem:[%s1 + $0x1b4] sm:$0xf]
  %v132 = vld [vmem:[%s1 + $0x1b8] sm:$0xf]
  %v133 = vld [vmem:[%s1 + $0x1bc] sm:$0xf]
  %v134 = vld [vmem:[%s1 + $0x1c0] sm:$0xf]
  %v135 = vld [vmem:[%s1 + $0x1c4] sm:$0xf]
  %v136 = vld [vmem:[%s1 + $0x1c8] sm:$0xf]
  %v137 = vld [vmem:[%s1 + $0x1cc] sm:$0xf]
  %v138 = vld [vmem:[%s1 + $0x1d0] sm:$0xf]
  %v139 = vld [vmem:[%s1 + $0x1d4] sm:$0xf]
  %v140 = vld [vmem:[%s1 + $0x1d8] sm:$0xf]
  %v141 = vld [vmem:[%s1 + $0x1dc] sm:$0xf]
  %v142 = vld [vmem:[%s1 + $0x1e0] sm:$0xf]
  %v143 = vld [vmem:[%s1 + $0x1e4] sm:$0xf]
  %v144 = vld [vmem:[%s1 + $0x1e8] sm:$0xf]
  %v145 = vld [vmem:[%s1 + $0x1ec] sm:$0xf]
  %v146 = vld [vmem:[%s1 + $0x1f0] sm:$0xf]
  %v147 = vld [vmem:[%s1 + $0x1f4] sm:$0xf]
  %v148 = vld [vmem:[%s1 + $0x1f8] sm:$0xf]
  %v149 = vld [vmem:[%s1 + $0x1fc] sm:$0xf]
  %v150 = vld [vmem:[%s1 + $0x200] sm:$0xf]
  %v151 = vld [vmem:[%s1 + $0x204] sm:$0xf]
  %v152 = vld [vmem:[%s1 + $0x208] sm:$0xf]
  %v153 = vld [vmem:[%s1 + $0x20c] sm:$0xf]
  %v154 = vld [vmem:[%s1 + $0x210] sm:$0xf]
  %v155 = vld [vmem:[%s1 + $0x214] sm:$0xf]
  %v156 = vld [vmem:[%s1 + $0x218] sm:$0xf]
  %v157 = vld [vmem:[%s1 + $0x21c] sm:$0xf]
  %v158 = vld [vmem:[%s1 + $0x220] sm:$0xf]
  %v159 = vld [vmem:[%s1 + $0x224] sm:$0xf]
  %v160 = vld [vmem:[%s1 + $0x228] sm:$0xf]
  %v161 = vld [vmem:[%s1 + $0x22c] sm:$0xf]
  %v162 = vld [vmem:[%s1 + $0x230] sm:$0xf]
  %v163 = vld [vmem:[%s1 + $0x234] sm:$0xf]
  %v164 = vld [vmem:[%s1 + $0x238] sm:$0xf]
  %v165 = vld [vmem:[%s1 + $0x23c] sm:$0xf]
  %v166 = vld [vmem:[%s1 + $0x240] sm:$0xf]
  %v167 = vld [vmem:[%s1 + $0x244] sm:$0xf]
  %v168 = vld [vmem:[%s1 + $0x248] sm:$0xf]
  %v169 = vld [vmem:[%s1 + $0x24c] sm:$0xf]
  %v170 = vld [vmem:[%s1 + $0x250] sm:$0xf]
  %v171 = vld [vmem:[%s1 + $0x254] sm:$0xf]
  %v172 = vld [vmem:[%s1 + $0x258] sm:$0xf]
  %v173 = vld [vmem:[%s1 + $0x25c] sm:$0xf]
  %v174 = vld [vmem:[%s1 + $0x260] sm:$0xf]
  %v175 = vld [vmem:[%s1 + $0x264] sm:$0xf]
  %v176 = vld [vmem:[%s1 + $0x268] sm:$0xf]
  %v177 = vld [vmem:[%s1 + $0x26c] sm:$0xf]
  %v178 = vld [vmem:[%s1 + $0x270] sm:$0xf]
  %v179 = vld [vmem:[%s1 + $0x274] sm:$0xf]
  %v180 = vld [vmem:[%s1 + $0x278] sm:$0xf]
  %v181 = vld [vmem:[%s1 + $0x27c] sm:$0xf]
  %v182 = vld [vmem:[%s1 + $0x280] sm:$0xf]
  %v183 = vld [vmem:[%s1 + $0x284] sm:$0xf]
  %v184 = vld [vmem:[%s1 + $0x288] sm:$0xf]
  %v185 = vld [vmem:[%s1 + $0x28c] sm:$0xf]
  %v186 = vld [vmem:[%s1 + $0x290] sm:$0xf]
  %v187 = vld [vmem:[%s1 + $0x294] sm:$0xf]
  %v188 = vld [vmem:[%s1 + $0x298] sm:$0xf]
  %v189 = vld [vmem:[%s1 + $0x29c] sm:$0xf]
  %v190 = vld [vmem:[%s1 + $0x2a0] sm:$0xf]
  %v191 = vld [vmem:[%s1 + $0x2a4] sm:$0xf]
  %v192 = vld [vmem:[%s1 + $0x2a8] sm:$0xf]
  %v193 = vld [vmem:[%s1 + $0x2ac] sm:$0xf]
  %v194 = vld [vmem:[%s1 + $0x2b0] sm:$0xf]
  %v195 = vld [vmem:[%s1 + $0x2b4] sm:$0xf]
  %v196 = vld [vmem:[%s1 + $0x2b8] sm:$0xf]
  %v197 = vld [vmem:[%s1 + $0x2bc] sm:$0xf]
  %v198 = vld [vmem:[%s1 + $0x2c0] sm:$0xf]
  %v199 = vld [vmem:[%s1 + $0x2c4] sm:$0xf]
  %v200 = vld [vmem:[%s1 + $0x2c8] sm:$0xf]
  %v201 = vld [vmem:[%s1 + $0x2cc] sm:$0xf]
  %v202 = vld [vmem:[%s1 + $0x2d0] sm:$0xf]
  %v203 = vld [vmem:[%s1 + $0x2d4] sm:$0xf]
  %v204 = vld [vmem:[%s1 + $0x2d8] sm:$0xf]
  %v205 = vld [vmem:[%s1 + $0x2dc] sm:$0xf]
  %v206 = vld [vmem:[%s1 + $0x2e0] sm:$0xf]
  %v207 = vld [vmem:[%s1 + $0x2e4] sm:$0xf]
  %v208 = vld [vmem:[%s1 + $0x2e8] sm:$0xf]
  %v209 = vld [vmem:[%s1 + $0x2ec] sm:$0xf]
  %v210 = vld [vmem:[%s1 + $0x2f0] sm:$0xf]
  %v211 = vld [vmem:[%s1 + $0x2f4] sm:$0xf]
  %v212 = vld [vmem:[%s1 + $0x2f8] sm:$0xf]
  %v213 = vld [vmem:[%s1 + $0x2fc] sm:$0xf]
  %v214 = vld [vmem:[%s1 + $0x300] sm:$0xf]
  %v215 = vld [vmem:[%s1 + $0x304] sm:$0xf]
  %v216 = vld [vmem:[%s1 + $0x308] sm:$0xf]
  %v217 = vld [vmem:[%s1 + $0x30c] sm:$0xf]
  %v218 = vld [vmem:[%s1 + $0x310] sm:$0xf]
  %v219 = vld [vmem:[%s1 + $0x314] sm:$0xf]
  %v220 = vld [vmem:[%s1 + $0x318] sm:$0xf]
  %v221 = vld [vmem:[%s1 + $0x31c] sm:$0xf]
  %v222 = vld [vmem:[%s1 + $0x320] sm:$0xf]
  %v223 = vld [vmem:[%s1 + $0x324] sm:$0xf]
  %v224 = vld [vmem:[%s1 + $0x328] sm:$0xf]
  %v225 = vld [vmem:[%s1 + $0x32c] sm:$0xf]
  %v226 = vld [vmem:[%s1 + $0x330] sm:$0xf]
  %v227 = vld [vmem:[%s1 + $0x334] sm:$0xf]
  %v228 = vld [vmem:[%s1 + $0x338] sm:$0xf]
  %v229 = vld [vmem:[%s1 + $0x33c] sm:$0xf]
  %v230 = vld [vmem:[%s1 + $0x340] sm:$0xf]
  %v231 = vld [vmem:[%s1 + $0x344] sm:$0xf]
  %v232 = vld [vmem:[%s1 + $0x348] sm:$0xf]
  %v233 = vld [vmem:[%s1 + $0x34c] sm:$0xf]
  %v234 = vld [vmem:[%s1 + $0x350] sm:$0xf]
  %v235 = vld [vmem:[%s1 + $0x354] sm:$0xf]
  %v236 = vld [vmem:[%s1 + $0x358] sm:$0xf]
  %v237 = vld [vmem:[%s1 + $0x35c] sm:$0xf]
  %v238 = vld [vmem:[%s1 + $0x360] sm:$0xf]
  %v239 = vld [vmem:[%s1 + $0x364] sm:$0xf]
  %v240 = vld [vmem:[%s1 + $0x368] sm:$0xf]
  %v241 = vld [vmem:[%s1 + $0x36c] sm:$0xf]
  %v242 = vld [vmem:[%s1 + $0x370] sm:$0xf]
  %v243 = vld [vmem:[%s1 + $0x374] sm:$0xf]
  %v244 = vld [vmem:[%s1 + $0x378] sm:$0xf]
  %v245 = vld [vmem:[%s1 + $0x37c] sm:$0xf]
  %v246 = vld [vmem:[%s2] sm:$0x1]
  %v248 = vlaneseq
  %v249 = vshrl.u32 %v248, 7
  %v250 = vsub.s32 0, %v249
  %v251 = vrot.slane %v246, %v250
  %v260 = vunpack.c.l.b16 %v15
  %v261 = vunpack.c.h.b16 %v15
  %v262 = vunpack.c.l.b16 %v16
  %v263 = vunpack.c.h.b16 %v16
  %v264 = vunpack.c.l.b16 %v17
  %v265 = vunpack.c.h.b16 %v17
  %v266 = vunpack.c.l.b16 %v18
  %v267 = vunpack.c.h.b16 %v18
  %v268 = vunpack.c.l.b16 %v19
  %v269 = vunpack.c.h.b16 %v19
  %v270 = vunpack.c.l.b16 %v20
  %v271 = vunpack.c.h.b16 %v20
  %v272 = vunpack.c.l.b16 %v21
  %v273 = vunpack.c.h.b16 %v21
  %v274 = vpack.c.b16 %v260, %v260
  %v275 = vpack.c.b16 %v261, %v261
  %v276 = vpack.c.b16 %v262, %v262
  %v277 = vpack.c.b16 %v263, %v263
  %v278 = vpack.c.b16 %v264, %v264
  %v279 = vpack.c.b16 %v265, %v265
  %v280 = vpack.c.b16 %v266, %v266
  %v281 = vpack.c.b16 %v267, %v267
  %v282 = vpack.c.b16 %v268, %v268
  %v283 = vpack.c.b16 %v269, %v269
  %v284 = vpack.c.b16 %v270, %v270
  %v285 = vpack.c.b16 %v271, %v271
  %v286 = vpack.c.b16 %v272, %v272
  %v287 = vpack.c.b16 %v273, %v273
  %v526 = vunpack.c.l.b16 %v22
  %v527 = vunpack.c.l.b16 %v23
  %v528 = vunpack.c.l.b16 %v24
  %v529 = vunpack.c.l.b16 %v25
  %v530 = vunpack.c.l.b16 %v26
  %v531 = vunpack.c.l.b16 %v27
  %v532 = vunpack.c.l.b16 %v28
  %v533 = vunpack.c.l.b16 %v29
  %v534 = vunpack.c.l.b16 %v30
  %v535 = vunpack.c.l.b16 %v31
  %v536 = vunpack.c.l.b16 %v32
  %v537 = vunpack.c.l.b16 %v33
  %v538 = vunpack.c.l.b16 %v34
  %v539 = vunpack.c.l.b16 %v35
  %v540 = vunpack.c.l.b16 %v36
  %v541 = vunpack.c.l.b16 %v37
  %v542 = vunpack.c.l.b16 %v38
  %v543 = vunpack.c.l.b16 %v39
  %v544 = vunpack.c.l.b16 %v40
  %v545 = vunpack.c.l.b16 %v41
  %v546 = vunpack.c.l.b16 %v42
  %v547 = vunpack.c.l.b16 %v43
  %v548 = vunpack.c.l.b16 %v44
  %v549 = vunpack.c.l.b16 %v45
  %v550 = vunpack.c.l.b16 %v46
  %v551 = vunpack.c.l.b16 %v47
  %v552 = vunpack.c.l.b16 %v48
  %v553 = vunpack.c.l.b16 %v49
  %v554 = vunpack.c.l.b16 %v50
  %v555 = vunpack.c.l.b16 %v51
  %v556 = vunpack.c.l.b16 %v52
  %v557 = vunpack.c.l.b16 %v53
  %v558 = vunpack.c.l.b16 %v54
  %v559 = vunpack.c.l.b16 %v55
  %v560 = vunpack.c.l.b16 %v56
  %v561 = vunpack.c.l.b16 %v57
  %v562 = vunpack.c.l.b16 %v58
  %v563 = vunpack.c.l.b16 %v59
  %v564 = vunpack.c.l.b16 %v60
  %v565 = vunpack.c.l.b16 %v61
  %v566 = vunpack.c.l.b16 %v62
  %v567 = vunpack.c.l.b16 %v63
  %v568 = vunpack.c.l.b16 %v64
  %v569 = vunpack.c.l.b16 %v65
  %v570 = vunpack.c.l.b16 %v66
  %v571 = vunpack.c.l.b16 %v67
  %v572 = vunpack.c.l.b16 %v68
  %v573 = vunpack.c.l.b16 %v69
  %v574 = vunpack.c.l.b16 %v70
  %v575 = vunpack.c.l.b16 %v71
  %v576 = vunpack.c.l.b16 %v72
  %v577 = vunpack.c.l.b16 %v73
  %v578 = vunpack.c.l.b16 %v74
  %v579 = vunpack.c.l.b16 %v75
  %v580 = vunpack.c.l.b16 %v76
  %v581 = vunpack.c.l.b16 %v77
  %v582 = vunpack.c.l.b16 %v78
  %v583 = vunpack.c.l.b16 %v79
  %v584 = vunpack.c.l.b16 %v80
  %v585 = vunpack.c.l.b16 %v81
  %v586 = vunpack.c.l.b16 %v82
  %v587 = vunpack.c.l.b16 %v83
  %v588 = vunpack.c.l.b16 %v84
  %v589 = vunpack.c.l.b16 %v85
  %v590 = vunpack.c.l.b16 %v86
  %v591 = vunpack.c.l.b16 %v87
  %v592 = vunpack.c.l.b16 %v88
  %v593 = vunpack.c.l.b16 %v89
  %v594 = vunpack.c.l.b16 %v90
  %v595 = vunpack.c.l.b16 %v91
  %v596 = vunpack.c.l.b16 %v92
  %v597 = vunpack.c.l.b16 %v93
  %v598 = vunpack.c.l.b16 %v94
  %v599 = vunpack.c.l.b16 %v95
  %v600 = vunpack.c.l.b16 %v96
  %v601 = vunpack.c.l.b16 %v97
  %v602 = vunpack.c.l.b16 %v98
  %v603 = vunpack.c.l.b16 %v99
  %v604 = vunpack.c.l.b16 %v100
  %v605 = vunpack.c.l.b16 %v101
  %v606 = vunpack.c.l.b16 %v102
  %v607 = vunpack.c.l.b16 %v103
  %v608 = vunpack.c.l.b16 %v104
  %v609 = vunpack.c.l.b16 %v105
  %v610 = vunpack.c.l.b16 %v106
  %v611 = vunpack.c.l.b16 %v107
  %v612 = vunpack.c.l.b16 %v108
  %v613 = vunpack.c.l.b16 %v109
  %v614 = vunpack.c.l.b16 %v110
  %v615 = vunpack.c.l.b16 %v111
  %v616 = vunpack.c.l.b16 %v112
  %v617 = vunpack.c.l.b16 %v113
  %v618 = vunpack.c.l.b16 %v114
  %v619 = vunpack.c.l.b16 %v115
  %v620 = vunpack.c.l.b16 %v116
  %v621 = vunpack.c.l.b16 %v117
  %v622 = vunpack.c.l.b16 %v118
  %v623 = vunpack.c.l.b16 %v119
  %v624 = vunpack.c.l.b16 %v120
  %v625 = vunpack.c.l.b16 %v121
  %v626 = vunpack.c.l.b16 %v122
  %v627 = vunpack.c.l.b16 %v123
  %v628 = vunpack.c.l.b16 %v124
  %v629 = vunpack.c.l.b16 %v125
  %v630 = vunpack.c.l.b16 %v126
  %v631 = vunpack.c.l.b16 %v127
  %v632 = vunpack.c.l.b16 %v128
  %v633 = vunpack.c.l.b16 %v129
  %v634 = vunpack.c.l.b16 %v130
  %v635 = vunpack.c.l.b16 %v131
  %v636 = vunpack.c.l.b16 %v132
  %v637 = vunpack.c.l.b16 %v133
  %v638 = vunpack.c.l.b16 %v134
  %v639 = vunpack.c.l.b16 %v135
  %v640 = vunpack.c.l.b16 %v136
  %v641 = vunpack.c.l.b16 %v137
  %v642 = vunpack.c.l.b16 %v138
  %v643 = vunpack.c.l.b16 %v139
  %v644 = vunpack.c.l.b16 %v140
  %v645 = vunpack.c.l.b16 %v141
  %v646 = vunpack.c.l.b16 %v142
  %v647 = vunpack.c.l.b16 %v143
  %v648 = vunpack.c.l.b16 %v144
  %v649 = vunpack.c.l.b16 %v145
  %v650 = vunpack.c.l.b16 %v146
  %v651 = vunpack.c.l.b16 %v147
  %v652 = vunpack.c.l.b16 %v148
  %v653 = vunpack.c.l.b16 %v149
  %v654 = vunpack.c.l.b16 %v150
  %v655 = vunpack.c.l.b16 %v151
  %v656 = vunpack.c.l.b16 %v152
  %v657 = vunpack.c.l.b16 %v153
  %v658 = vunpack.c.l.b16 %v154
  %v659 = vunpack.c.l.b16 %v155
  %v660 = vunpack.c.l.b16 %v156
  %v661 = vunpack.c.l.b16 %v157
  %v662 = vunpack.c.l.b16 %v158
  %v663 = vunpack.c.l.b16 %v159
  %v664 = vunpack.c.l.b16 %v160
  %v665 = vunpack.c.l.b16 %v161
  %v666 = vunpack.c.l.b16 %v162
  %v667 = vunpack.c.l.b16 %v163
  %v668 = vunpack.c.l.b16 %v164
  %v669 = vunpack.c.l.b16 %v165
  %v670 = vunpack.c.l.b16 %v166
  %v671 = vunpack.c.l.b16 %v167
  %v672 = vunpack.c.l.b16 %v168
  %v673 = vunpack.c.l.b16 %v169
  %v674 = vunpack.c.l.b16 %v170
  %v675 = vunpack.c.l.b16 %v171
  %v676 = vunpack.c.l.b16 %v172
  %v677 = vunpack.c.l.b16 %v173
  %v678 = vunpack.c.l.b16 %v174
  %v679 = vunpack.c.l.b16 %v175
  %v680 = vunpack.c.l.b16 %v176
  %v681 = vunpack.c.l.b16 %v177
  %v682 = vunpack.c.l.b16 %v178
  %v683 = vunpack.c.l.b16 %v179
  %v684 = vunpack.c.l.b16 %v180
  %v685 = vunpack.c.l.b16 %v181
  %v686 = vunpack.c.l.b16 %v182
  %v687 = vunpack.c.l.b16 %v183
  %v688 = vunpack.c.l.b16 %v184
  %v689 = vunpack.c.l.b16 %v185
  %v690 = vunpack.c.l.b16 %v186
  %v691 = vunpack.c.l.b16 %v187
  %v692 = vunpack.c.l.b16 %v188
  %v693 = vunpack.c.l.b16 %v189
  %v694 = vunpack.c.l.b16 %v190
  %v695 = vunpack.c.l.b16 %v191
  %v696 = vunpack.c.l.b16 %v192
  %v697 = vunpack.c.l.b16 %v193
  %v698 = vunpack.c.l.b16 %v194
  %v699 = vunpack.c.l.b16 %v195
  %v700 = vunpack.c.l.b16 %v196
  %v701 = vunpack.c.l.b16 %v197
  %v702 = vunpack.c.l.b16 %v198
  %v703 = vunpack.c.l.b16 %v199
  %v704 = vunpack.c.l.b16 %v200
  %v705 = vunpack.c.l.b16 %v201
  %v706 = vunpack.c.l.b16 %v202
  %v707 = vunpack.c.l.b16 %v203
  %v708 = vunpack.c.l.b16 %v204
  %v709 = vunpack.c.l.b16 %v205
  %v710 = vunpack.c.l.b16 %v206
  %v711 = vunpack.c.l.b16 %v207
  %v712 = vunpack.c.l.b16 %v208
  %v713 = vunpack.c.l.b16 %v209
  %v714 = vunpack.c.l.b16 %v210
  %v715 = vunpack.c.l.b16 %v211
  %v716 = vunpack.c.l.b16 %v212
  %v717 = vunpack.c.l.b16 %v213
  %v718 = vunpack.c.l.b16 %v214
  %v719 = vunpack.c.l.b16 %v215
  %v720 = vunpack.c.l.b16 %v216
  %v721 = vunpack.c.l.b16 %v217
  %v722 = vunpack.c.l.b16 %v218
  %v723 = vunpack.c.l.b16 %v219
  %v724 = vunpack.c.l.b16 %v220
  %v725 = vunpack.c.l.b16 %v221
  %v726 = vunpack.c.l.b16 %v222
  %v727 = vunpack.c.l.b16 %v223
  %v728 = vunpack.c.l.b16 %v224
  %v729 = vunpack.c.l.b16 %v225
  %v730 = vunpack.c.l.b16 %v226
  %v731 = vunpack.c.l.b16 %v227
  %v732 = vunpack.c.l.b16 %v228
  %v733 = vunpack.c.l.b16 %v229
  %v734 = vunpack.c.l.b16 %v230
  %v735 = vunpack.c.l.b16 %v231
  %v736 = vunpack.c.l.b16 %v232
  %v737 = vunpack.c.l.b16 %v233
  %v738 = vunpack.c.l.b16 %v234
  %v739 = vunpack.c.l.b16 %v235
  %v740 = vunpack.c.l.b16 %v236
  %v741 = vunpack.c.l.b16 %v237
  %v742 = vunpack.c.l.b16 %v238
  %v743 = vunpack.c.l.b16 %v239
  %v744 = vunpack.c.l.b16 %v240
  %v745 = vunpack.c.l.b16 %v241
  %v746 = vunpack.c.l.b16 %v242
  %v747 = vunpack.c.l.b16 %v243
  %v748 = vunpack.c.l.b16 %v244
  %v749 = vunpack.c.l.b16 %v245
  %v750 = vpack.c.b16 %v527, %v526
  %v751 = vpack.c.b16 %v529, %v528
  %v752 = vpack.c.b16 %v531, %v530
  %v753 = vpack.c.b16 %v533, %v532
  %v754 = vpack.c.b16 %v535, %v534
  %v755 = vpack.c.b16 %v537, %v536
  %v756 = vpack.c.b16 %v539, %v538
  %v757 = vpack.c.b16 %v541, %v540
  %v758 = vpack.c.b16 %v543, %v542
  %v759 = vpack.c.b16 %v545, %v544
  %v760 = vpack.c.b16 %v547, %v546
  %v761 = vpack.c.b16 %v549, %v548
  %v762 = vpack.c.b16 %v551, %v550
  %v763 = vpack.c.b16 %v553, %v552
  %v764 = vpack.c.b16 %v555, %v554
  %v765 = vpack.c.b16 %v557, %v556
  %v766 = vpack.c.b16 %v559, %v558
  %v767 = vpack.c.b16 %v561, %v560
  %v768 = vpack.c.b16 %v563, %v562
  %v769 = vpack.c.b16 %v565, %v564
  %v770 = vpack.c.b16 %v567, %v566
  %v771 = vpack.c.b16 %v569, %v568
  %v772 = vpack.c.b16 %v571, %v570
  %v773 = vpack.c.b16 %v573, %v572
  %v774 = vpack.c.b16 %v575, %v574
  %v775 = vpack.c.b16 %v577, %v576
  %v776 = vpack.c.b16 %v579, %v578
  %v777 = vpack.c.b16 %v581, %v580
  %v778 = vpack.c.b16 %v583, %v582
  %v779 = vpack.c.b16 %v585, %v584
  %v780 = vpack.c.b16 %v587, %v586
  %v781 = vpack.c.b16 %v589, %v588
  %v782 = vpack.c.b16 %v591, %v590
  %v783 = vpack.c.b16 %v593, %v592
  %v784 = vpack.c.b16 %v595, %v594
  %v785 = vpack.c.b16 %v597, %v596
  %v786 = vpack.c.b16 %v599, %v598
  %v787 = vpack.c.b16 %v601, %v600
  %v788 = vpack.c.b16 %v603, %v602
  %v789 = vpack.c.b16 %v605, %v604
  %v790 = vpack.c.b16 %v607, %v606
  %v791 = vpack.c.b16 %v609, %v608
  %v792 = vpack.c.b16 %v611, %v610
  %v793 = vpack.c.b16 %v613, %v612
  %v794 = vpack.c.b16 %v615, %v614
  %v795 = vpack.c.b16 %v617, %v616
  %v796 = vpack.c.b16 %v619, %v618
  %v797 = vpack.c.b16 %v621, %v620
  %v798 = vpack.c.b16 %v623, %v622
  %v799 = vpack.c.b16 %v625, %v624
  %v800 = vpack.c.b16 %v627, %v626
  %v801 = vpack.c.b16 %v629, %v628
  %v802 = vpack.c.b16 %v631, %v630
  %v803 = vpack.c.b16 %v633, %v632
  %v804 = vpack.c.b16 %v635, %v634
  %v805 = vpack.c.b16 %v637, %v636
  %v806 = vpack.c.b16 %v639, %v638
  %v807 = vpack.c.b16 %v641, %v640
  %v808 = vpack.c.b16 %v643, %v642
  %v809 = vpack.c.b16 %v645, %v644
  %v810 = vpack.c.b16 %v647, %v646
  %v811 = vpack.c.b16 %v649, %v648
  %v812 = vpack.c.b16 %v651, %v650
  %v813 = vpack.c.b16 %v653, %v652
  %v814 = vpack.c.b16 %v655, %v654
  %v815 = vpack.c.b16 %v657, %v656
  %v816 = vpack.c.b16 %v659, %v658
  %v817 = vpack.c.b16 %v661, %v660
  %v818 = vpack.c.b16 %v663, %v662
  %v819 = vpack.c.b16 %v665, %v664
  %v820 = vpack.c.b16 %v667, %v666
  %v821 = vpack.c.b16 %v669, %v668
  %v822 = vpack.c.b16 %v671, %v670
  %v823 = vpack.c.b16 %v673, %v672
  %v824 = vpack.c.b16 %v675, %v674
  %v825 = vpack.c.b16 %v677, %v676
  %v826 = vpack.c.b16 %v679, %v678
  %v827 = vpack.c.b16 %v681, %v680
  %v828 = vpack.c.b16 %v683, %v682
  %v829 = vpack.c.b16 %v685, %v684
  %v830 = vpack.c.b16 %v687, %v686
  %v831 = vpack.c.b16 %v689, %v688
  %v832 = vpack.c.b16 %v691, %v690
  %v833 = vpack.c.b16 %v693, %v692
  %v834 = vpack.c.b16 %v695, %v694
  %v835 = vpack.c.b16 %v697, %v696
  %v836 = vpack.c.b16 %v699, %v698
  %v837 = vpack.c.b16 %v701, %v700
  %v838 = vpack.c.b16 %v703, %v702
  %v839 = vpack.c.b16 %v705, %v704
  %v840 = vpack.c.b16 %v707, %v706
  %v841 = vpack.c.b16 %v709, %v708
  %v842 = vpack.c.b16 %v711, %v710
  %v843 = vpack.c.b16 %v713, %v712
  %v844 = vpack.c.b16 %v715, %v714
  %v845 = vpack.c.b16 %v717, %v716
  %v846 = vpack.c.b16 %v719, %v718
  %v847 = vpack.c.b16 %v721, %v720
  %v848 = vpack.c.b16 %v723, %v722
  %v849 = vpack.c.b16 %v725, %v724
  %v850 = vpack.c.b16 %v727, %v726
  %v851 = vpack.c.b16 %v729, %v728
  %v852 = vpack.c.b16 %v731, %v730
  %v853 = vpack.c.b16 %v733, %v732
  %v854 = vpack.c.b16 %v735, %v734
  %v855 = vpack.c.b16 %v737, %v736
  %v856 = vpack.c.b16 %v739, %v738
  %v857 = vpack.c.b16 %v741, %v740
  %v858 = vpack.c.b16 %v743, %v742
  %v859 = vpack.c.b16 %v745, %v744
  %v860 = vpack.c.b16 %v747, %v746
  %v861 = vpack.c.b16 %v749, %v748
  %974 = vmatprep.subr.bf16.mxu0 0
  %975 = vmatpush1.bf16.msra.mxu0 %v757
  %976 = vmatprep.subr.bf16.mxu0 0
  %977 = vmatpush1.bf16.msra.mxu0 %v756
  %978 = vmatprep.subr.bf16.mxu0 0
  %979 = vmatpush1.bf16.msra.mxu0 %v755
  %980 = vmatprep.subr.bf16.mxu0 0
  %981 = vmatpush1.bf16.msra.mxu0 %v754
  %982 = vmatprep.subr.bf16.mxu0 0
  %983 = vmatpush1.bf16.msra.mxu0 %v753
  %984 = vmatprep.subr.bf16.mxu0 0
  %985 = vmatpush1.bf16.msra.mxu0 %v752
  %986 = vmatprep.subr.bf16.mxu0 0
  %987 = vmatpush1.bf16.msra.mxu0 %v751
  %988 = vmatprep.subr.bf16.mxu0 0
  %989 = vmatpush1.bf16.msra.mxu0 %v750
  %990 = vmatprep.subr.bf16.mxu0 0
  %991 = vmatpush2.bf16.msra.mxu0 %v765
  %992 = vmatprep.subr.bf16.mxu0 0
  %993 = vmatpush2.bf16.msra.mxu0 %v764
  %994 = vmatprep.subr.bf16.mxu0 0
  %995 = vmatpush2.bf16.msra.mxu0 %v763
  %996 = vmatprep.subr.bf16.mxu0 0
  %997 = vmatpush2.bf16.msra.mxu0 %v762
  %998 = vmatprep.subr.bf16.mxu0 0
  %999 = vmatpush2.bf16.msra.mxu0 %v761
  %1000 = vmatprep.subr.bf16.mxu0 0
  %1001 = vmatpush2.bf16.msra.mxu0 %v760
  %1002 = vmatprep.subr.bf16.mxu0 0
  %1003 = vmatpush2.bf16.msra.mxu0 %v759
  %1004 = vmatprep.subr.bf16.mxu0 0
  %1005 = vmatpush2.bf16.msra.mxu0 %v758
  %1006 = vmatprep.mubr.bf16.mxu0 %v275
  %1007 = vmatmul.mubr.bf16.gmra.mxu0 %v274
  %v1008 = vpop.f32.mrf.mxu0
  %v1009 = vadd.f32 %v251, %v1008
  %v1010 = vpop.f32.mrf.mxu0
  %v1011 = vpop.f32.mrf.mxu0
  %v1012 = vpop.f32.mrf.mxu0
  %1013 = vdwg.mxu0
  %1014 = vmatprep.subr.bf16.mxu0 0
  %1015 = vmatpush1.bf16.msra.mxu0 %v773
  %1016 = vmatprep.subr.bf16.mxu0 0
  %1017 = vmatpush1.bf16.msra.mxu0 %v772
  %1018 = vmatprep.subr.bf16.mxu0 0
  %1019 = vmatpush1.bf16.msra.mxu0 %v771
  %1020 = vmatprep.subr.bf16.mxu0 0
  %1021 = vmatpush1.bf16.msra.mxu0 %v770
  %1022 = vmatprep.subr.bf16.mxu0 0
  %1023 = vmatpush1.bf16.msra.mxu0 %v769
  %1024 = vmatprep.subr.bf16.mxu0 0
  %1025 = vmatpush1.bf16.msra.mxu0 %v768
  %1026 = vmatprep.subr.bf16.mxu0 0
  %1027 = vmatpush1.bf16.msra.mxu0 %v767
  %1028 = vmatprep.subr.bf16.mxu0 0
  %1029 = vmatpush1.bf16.msra.mxu0 %v766
  %1030 = vmatprep.subr.bf16.mxu0 0
  %1031 = vmatpush2.bf16.msra.mxu0 %v781
  %1032 = vmatprep.subr.bf16.mxu0 0
  %1033 = vmatpush2.bf16.msra.mxu0 %v780
  %1034 = vmatprep.subr.bf16.mxu0 0
  %1035 = vmatpush2.bf16.msra.mxu0 %v779
  %1036 = vmatprep.subr.bf16.mxu0 0
  %1037 = vmatpush2.bf16.msra.mxu0 %v778
  %1038 = vmatprep.subr.bf16.mxu0 0
  %1039 = vmatpush2.bf16.msra.mxu0 %v777
  %1040 = vmatprep.subr.bf16.mxu0 0
  %1041 = vmatpush2.bf16.msra.mxu0 %v776
  %1042 = vmatprep.subr.bf16.mxu0 0
  %1043 = vmatpush2.bf16.msra.mxu0 %v775
  %1044 = vmatprep.subr.bf16.mxu0 0
  %1045 = vmatpush2.bf16.msra.mxu0 %v774
  %1046 = vmatprep.mubr.bf16.mxu0 %v277
  %1047 = vmatmul.mubr.bf16.gmra.mxu0 %v276
  %v1048 = vpop.f32.mrf.mxu0
  %v1049 = vadd.f32 %v1009, %v1048
  %v1050 = vpop.f32.mrf.mxu0
  %v1051 = vpop.f32.mrf.mxu0
  %v1052 = vpop.f32.mrf.mxu0
  %1053 = vdwg.mxu0
  %1054 = vmatprep.subr.bf16.mxu0 0
  %1055 = vmatpush1.bf16.msra.mxu0 %v789
  %1056 = vmatprep.subr.bf16.mxu0 0
  %1057 = vmatpush1.bf16.msra.mxu0 %v788
  %1058 = vmatprep.subr.bf16.mxu0 0
  %1059 = vmatpush1.bf16.msra.mxu0 %v787
  %1060 = vmatprep.subr.bf16.mxu0 0
  %1061 = vmatpush1.bf16.msra.mxu0 %v786
  %1062 = vmatprep.subr.bf16.mxu0 0
  %1063 = vmatpush1.bf16.msra.mxu0 %v785
  %1064 = vmatprep.subr.bf16.mxu0 0
  %1065 = vmatpush1.bf16.msra.mxu0 %v784
  %1066 = vmatprep.subr.bf16.mxu0 0
  %1067 = vmatpush1.bf16.msra.mxu0 %v783
  %1068 = vmatprep.subr.bf16.mxu0 0
  %1069 = vmatpush1.bf16.msra.mxu0 %v782
  %1070 = vmatprep.subr.bf16.mxu0 0
  %1071 = vmatpush2.bf16.msra.mxu0 %v797
  %1072 = vmatprep.subr.bf16.mxu0 0
  %1073 = vmatpush2.bf16.msra.mxu0 %v796
  %1074 = vmatprep.subr.bf16.mxu0 0
  %1075 = vmatpush2.bf16.msra.mxu0 %v795
  %1076 = vmatprep.subr.bf16.mxu0 0
  %1077 = vmatpush2.bf16.msra.mxu0 %v794
  %1078 = vmatprep.subr.bf16.mxu0 0
  %1079 = vmatpush2.bf16.msra.mxu0 %v793
  %1080 = vmatprep.subr.bf16.mxu0 0
  %1081 = vmatpush2.bf16.msra.mxu0 %v792
  %1082 = vmatprep.subr.bf16.mxu0 0
  %1083 = vmatpush2.bf16.msra.mxu0 %v791
  %1084 = vmatprep.subr.bf16.mxu0 0
  %1085 = vmatpush2.bf16.msra.mxu0 %v790
  %1086 = vmatprep.mubr.bf16.mxu0 %v279
  %1087 = vmatmul.mubr.bf16.gmra.mxu0 %v278
  %v1088 = vpop.f32.mrf.mxu0
  %v1089 = vadd.f32 %v1049, %v1088
  %v1090 = vpop.f32.mrf.mxu0
  %v1091 = vpop.f32.mrf.mxu0
  %v1092 = vpop.f32.mrf.mxu0
  %1093 = vdwg.mxu0
  %1094 = vmatprep.subr.bf16.mxu0 0
  %1095 = vmatpush1.bf16.msra.mxu0 %v805
  %1096 = vmatprep.subr.bf16.mxu0 0
  %1097 = vmatpush1.bf16.msra.mxu0 %v804
  %1098 = vmatprep.subr.bf16.mxu0 0
  %1099 = vmatpush1.bf16.msra.mxu0 %v803
  %1100 = vmatprep.subr.bf16.mxu0 0
  %1101 = vmatpush1.bf16.msra.mxu0 %v802
  %1102 = vmatprep.subr.bf16.mxu0 0
  %1103 = vmatpush1.bf16.msra.mxu0 %v801
  %1104 = vmatprep.subr.bf16.mxu0 0
  %1105 = vmatpush1.bf16.msra.mxu0 %v800
  %1106 = vmatprep.subr.bf16.mxu0 0
  %1107 = vmatpush1.bf16.msra.mxu0 %v799
  %1108 = vmatprep.subr.bf16.mxu0 0
  %1109 = vmatpush1.bf16.msra.mxu0 %v798
  %1110 = vmatprep.subr.bf16.mxu0 0
  %1111 = vmatpush2.bf16.msra.mxu0 %v813
  %1112 = vmatprep.subr.bf16.mxu0 0
  %1113 = vmatpush2.bf16.msra.mxu0 %v812
  %1114 = vmatprep.subr.bf16.mxu0 0
  %1115 = vmatpush2.bf16.msra.mxu0 %v811
  %1116 = vmatprep.subr.bf16.mxu0 0
  %1117 = vmatpush2.bf16.msra.mxu0 %v810
  %1118 = vmatprep.subr.bf16.mxu0 0
  %1119 = vmatpush2.bf16.msra.mxu0 %v809
  %1120 = vmatprep.subr.bf16.mxu0 0
  %1121 = vmatpush2.bf16.msra.mxu0 %v808
  %1122 = vmatprep.subr.bf16.mxu0 0
  %1123 = vmatpush2.bf16.msra.mxu0 %v807
  %1124 = vmatprep.subr.bf16.mxu0 0
  %1125 = vmatpush2.bf16.msra.mxu0 %v806
  %1126 = vmatprep.mubr.bf16.mxu0 %v281
  %1127 = vmatmul.mubr.bf16.gmra.mxu0 %v280
  %v1128 = vpop.f32.mrf.mxu0
  %v1129 = vadd.f32 %v1089, %v1128
  %v1130 = vpop.f32.mrf.mxu0
  %v1131 = vpop.f32.mrf.mxu0
  %v1132 = vpop.f32.mrf.mxu0
  %1133 = vdwg.mxu0
  %1134 = vmatprep.subr.bf16.mxu0 0
  %1135 = vmatpush1.bf16.msra.mxu0 %v821
  %1136 = vmatprep.subr.bf16.mxu0 0
  %1137 = vmatpush1.bf16.msra.mxu0 %v820
  %1138 = vmatprep.subr.bf16.mxu0 0
  %1139 = vmatpush1.bf16.msra.mxu0 %v819
  %1140 = vmatprep.subr.bf16.mxu0 0
  %1141 = vmatpush1.bf16.msra.mxu0 %v818
  %1142 = vmatprep.subr.bf16.mxu0 0
  %1143 = vmatpush1.bf16.msra.mxu0 %v817
  %1144 = vmatprep.subr.bf16.mxu0 0
  %1145 = vmatpush1.bf16.msra.mxu0 %v816
  %1146 = vmatprep.subr.bf16.mxu0 0
  %1147 = vmatpush1.bf16.msra.mxu0 %v815
  %1148 = vmatprep.subr.bf16.mxu0 0
  %1149 = vmatpush1.bf16.msra.mxu0 %v814
  %1150 = vmatprep.subr.bf16.mxu0 0
  %1151 = vmatpush2.bf16.msra.mxu0 %v829
  %1152 = vmatprep.subr.bf16.mxu0 0
  %1153 = vmatpush2.bf16.msra.mxu0 %v828
  %1154 = vmatprep.subr.bf16.mxu0 0
  %1155 = vmatpush2.bf16.msra.mxu0 %v827
  %1156 = vmatprep.subr.bf16.mxu0 0
  %1157 = vmatpush2.bf16.msra.mxu0 %v826
  %1158 = vmatprep.subr.bf16.mxu0 0
  %1159 = vmatpush2.bf16.msra.mxu0 %v825
  %1160 = vmatprep.subr.bf16.mxu0 0
  %1161 = vmatpush2.bf16.msra.mxu0 %v824
  %1162 = vmatprep.subr.bf16.mxu0 0
  %1163 = vmatpush2.bf16.msra.mxu0 %v823
  %1164 = vmatprep.subr.bf16.mxu0 0
  %1165 = vmatpush2.bf16.msra.mxu0 %v822
  %1166 = vmatprep.mubr.bf16.mxu0 %v283
  %1167 = vmatmul.mubr.bf16.gmra.mxu0 %v282
  %v1168 = vpop.f32.mrf.mxu0
  %v1169 = vadd.f32 %v1129, %v1168
  %v1170 = vpop.f32.mrf.mxu0
  %v1171 = vpop.f32.mrf.mxu0
  %v1172 = vpop.f32.mrf.mxu0
  %1173 = vdwg.mxu0
  %1174 = vmatprep.subr.bf16.mxu0 0
  %1175 = vmatpush1.bf16.msra.mxu0 %v837
  %1176 = vmatprep.subr.bf16.mxu0 0
  %1177 = vmatpush1.bf16.msra.mxu0 %v836
  %1178 = vmatprep.subr.bf16.mxu0 0
  %1179 = vmatpush1.bf16.msra.mxu0 %v835
  %1180 = vmatprep.subr.bf16.mxu0 0
  %1181 = vmatpush1.bf16.msra.mxu0 %v834
  %1182 = vmatprep.subr.bf16.mxu0 0
  %1183 = vmatpush1.bf16.msra.mxu0 %v833
  %1184 = vmatprep.subr.bf16.mxu0 0
  %1185 = vmatpush1.bf16.msra.mxu0 %v832
  %1186 = vmatprep.subr.bf16.mxu0 0
  %1187 = vmatpush1.bf16.msra.mxu0 %v831
  %1188 = vmatprep.subr.bf16.mxu0 0
  %1189 = vmatpush1.bf16.msra.mxu0 %v830
  %1190 = vmatprep.subr.bf16.mxu0 0
  %1191 = vmatpush2.bf16.msra.mxu0 %v845
  %1192 = vmatprep.subr.bf16.mxu0 0
  %1193 = vmatpush2.bf16.msra.mxu0 %v844
  %1194 = vmatprep.subr.bf16.mxu0 0
  %1195 = vmatpush2.bf16.msra.mxu0 %v843
  %1196 = vmatprep.subr.bf16.mxu0 0
  %1197 = vmatpush2.bf16.msra.mxu0 %v842
  %1198 = vmatprep.subr.bf16.mxu0 0
  %1199 = vmatpush2.bf16.msra.mxu0 %v841
  %1200 = vmatprep.subr.bf16.mxu0 0
  %1201 = vmatpush2.bf16.msra.mxu0 %v840
  %1202 = vmatprep.subr.bf16.mxu0 0
  %1203 = vmatpush2.bf16.msra.mxu0 %v839
  %1204 = vmatprep.subr.bf16.mxu0 0
  %1205 = vmatpush2.bf16.msra.mxu0 %v838
  %1206 = vmatprep.mubr.bf16.mxu0 %v285
  %1207 = vmatmul.mubr.bf16.gmra.mxu0 %v284
  %v1208 = vpop.f32.mrf.mxu0
  %v1209 = vadd.f32 %v1169, %v1208
  %v1210 = vpop.f32.mrf.mxu0
  %v1211 = vpop.f32.mrf.mxu0
  %v1212 = vpop.f32.mrf.mxu0
  %1213 = vdwg.mxu0
  %1214 = vmatprep.subr.bf16.mxu0 0
  %1215 = vmatpush1.bf16.msra.mxu0 %v853
  %1216 = vmatprep.subr.bf16.mxu0 0
  %1217 = vmatpush1.bf16.msra.mxu0 %v852
  %1218 = vmatprep.subr.bf16.mxu0 0
  %1219 = vmatpush1.bf16.msra.mxu0 %v851
  %1220 = vmatprep.subr.bf16.mxu0 0
  %1221 = vmatpush1.bf16.msra.mxu0 %v850
  %1222 = vmatprep.subr.bf16.mxu0 0
  %1223 = vmatpush1.bf16.msra.mxu0 %v849
  %1224 = vmatprep.subr.bf16.mxu0 0
  %1225 = vmatpush1.bf16.msra.mxu0 %v848
  %1226 = vmatprep.subr.bf16.mxu0 0
  %1227 = vmatpush1.bf16.msra.mxu0 %v847
  %1228 = vmatprep.subr.bf16.mxu0 0
  %1229 = vmatpush1.bf16.msra.mxu0 %v846
  %1230 = vmatprep.subr.bf16.mxu0 0
  %1231 = vmatpush2.bf16.msra.mxu0 %v861
  %1232 = vmatprep.subr.bf16.mxu0 0
  %1233 = vmatpush2.bf16.msra.mxu0 %v860
  %1234 = vmatprep.subr.bf16.mxu0 0
  %1235 = vmatpush2.bf16.msra.mxu0 %v859
  %1236 = vmatprep.subr.bf16.mxu0 0
  %1237 = vmatpush2.bf16.msra.mxu0 %v858
  %1238 = vmatprep.subr.bf16.mxu0 0
  %1239 = vmatpush2.bf16.msra.mxu0 %v857
  %1240 = vmatprep.subr.bf16.mxu0 0
  %1241 = vmatpush2.bf16.msra.mxu0 %v856
  %1242 = vmatprep.subr.bf16.mxu0 0
  %1243 = vmatpush2.bf16.msra.mxu0 %v855
  %1244 = vmatprep.subr.bf16.mxu0 0
  %1245 = vmatpush2.bf16.msra.mxu0 %v854
  %1246 = vmatprep.mubr.bf16.mxu0 %v287
  %1247 = vmatmul.mubr.bf16.gmra.mxu0 %v286
  %v1248 = vpop.f32.mrf.mxu0
  %v1249 = vadd.f32 %v1209, %v1248
  %v1250 = vpop.f32.mrf.mxu0
  %v1251 = vpop.f32.mrf.mxu0
  %v1252 = vpop.f32.mrf.mxu0
  %1253 = vdwg.mxu0
  %1254 = vst [vmem:[%s3] sm:$0xff] %v1249
  // Predicated region
  $region14: #{cnn_forward.5} parent=0 // pred_check
    _
  $region15: #{cnn_forward.5} parent=0 // pred_check_branch
    %1256 = sbr.rel (0) target = $region17
  $region16: #{cnn_forward.5} parent=0 // pred_region
    _
  $region17: #{cnn_forward.5} parent=0 // pred_fallthru
    _
  // Predicated region
  $region18: #{cnn_forward.5} parent=0 // pred_check
    _
  $region19: #{cnn_forward.5} parent=0 // pred_check_branch
    %1258 = sbr.rel (0) target = $region21
  $region20: #{cnn_forward.5} parent=0 // pred_region
    _
  $region21: #{cnn_forward.5} parent=0 // pred_fallthru
    _

// kernel: cnn_forward.4
$region0: #{cnn_forward.4}
  #allocation0 [shape = 'u32[]', space=smem, size = 0x4, offset = 0x4, fixed_abs, tag = 'smem constant byte address 0x4 - core index']
  #allocation1 [shape = 'u32[144,128]{1,0:T(1,128)}', space=vmem, size = 0x12000, scoped, tag = 'internal scratch']
  %s0 = inlined_call_operand.vmem [shape: bf16[56,768], index: 0, kind: input, shape index: {}]
  %s1 = inlined_call_operand.vmem [shape: bf16[56,768], index: 1, kind: input, shape index: {}]
  %s2 = inlined_call_operand.vmem [shape: bf16[768,512], index: 2, kind: input, shape index: {}]
  %s3 = inlined_call_operand.vmem [shape: f32[1,256], index: 3, kind: input, shape index: {}]
  %s4 = inlined_call_operand.vmem [shape: bf16[56,256], index: 4, kind: output, shape index: {}]
  %s5 = sld [smem:[#allocation0]]
  $region26: #{cnn_forward.4} parent=0
    _
  %s7 = ssub.s32 1, %s5
  %s8 = scalar_select 0, %s7, %s5
  // Predicated region
  $region2: #{cnn_forward.4} parent=0 // pred_check
    _
  $region3: #{cnn_forward.4} parent=0 // pred_check_branch
    %10 = sbr.rel (0) target = $region5
  $region4: #{cnn_forward.4} parent=0 // pred_region
    _
  $region5: #{cnn_forward.4} parent=0 // pred_fallthru
    _
  // Predicated region
  $region6: #{cnn_forward.4} parent=0 // pred_check
    _
  $region7: #{cnn_forward.4} parent=0 // pred_check_branch
    %12 = sbr.rel (0) target = $region9
  $region8: #{cnn_forward.4} parent=0 // pred_region
    _
  $region9: #{cnn_forward.4} parent=0 // pred_fallthru
    _
  // Predicated region
  $region10: #{cnn_forward.4} parent=0 // pred_check
    _
  $region11: #{cnn_forward.4} parent=0 // pred_check_branch
    %14 = sbr.rel (0) target = $region13
  $region12: #{cnn_forward.4} parent=0 // pred_region
    _
  $region13: #{cnn_forward.4} parent=0 // pred_fallthru
    _
  // Predicated region
  $region14: #{cnn_forward.4} parent=0 // pred_check
    _
  $region15: #{cnn_forward.4} parent=0 // pred_check_branch
    %16 = sbr.rel (0) target = $region17
  $region16: #{cnn_forward.4} parent=0 // pred_region
    _
  $region17: #{cnn_forward.4} parent=0 // pred_fallthru
    _
  %v17 = vld [vmem:[%s2] sm:$0xff]
  %v18 = vld [vmem:[%s2 + $0x8] sm:$0xff]
  %v19 = vld [vmem:[%s2 + $0x10] sm:$0xff]
  %v20 = vld [vmem:[%s2 + $0x18] sm:$0xff]
  %v21 = vld [vmem:[%s2 + $0x20] sm:$0xff]
  %v22 = vld [vmem:[%s2 + $0x28] sm:$0xff]
  %v23 = vld [vmem:[%s2 + $0x30] sm:$0xff]
  %v24 = vld [vmem:[%s2 + $0x38] sm:$0xff]
  %v25 = vld [vmem:[%s2 + $0x40] sm:$0xff]
  %v26 = vld [vmem:[%s2 + $0x48] sm:$0xff]
  %v27 = vld [vmem:[%s2 + $0x50] sm:$0xff]
  %v28 = vld [vmem:[%s2 + $0x58] sm:$0xff]
  %v29 = vld [vmem:[%s2 + $0x60] sm:$0xff]
  %v30 = vld [vmem:[%s2 + $0x68] sm:$0xff]
  %v31 = vld [vmem:[%s2 + $0x70] sm:$0xff]
  %v32 = vld [vmem:[%s2 + $0x78] sm:$0xff]
  %v33 = vld [vmem:[%s2 + $0x80] sm:$0xff]
  %v34 = vld [vmem:[%s2 + $0x88] sm:$0xff]
  %v35 = vld [vmem:[%s2 + $0x90] sm:$0xff]
  %v36 = vld [vmem:[%s2 + $0x98] sm:$0xff]
  %v37 = vld [vmem:[%s2 + $0xa0] sm:$0xff]
  %v38 = vld [vmem:[%s2 + $0xa8] sm:$0xff]
  %v39 = vld [vmem:[%s2 + $0xb0] sm:$0xff]
  %v40 = vld [vmem:[%s2 + $0xb8] sm:$0xff]
  %v41 = vld [vmem:[%s2 + $0xc0] sm:$0xff]
  %v42 = vld [vmem:[%s2 + $0xc8] sm:$0xff]
  %v43 = vld [vmem:[%s2 + $0xd0] sm:$0xff]
  %v44 = vld [vmem:[%s2 + $0xd8] sm:$0xff]
  %v45 = vld [vmem:[%s2 + $0xe0] sm:$0xff]
  %v46 = vld [vmem:[%s2 + $0xe8] sm:$0xff]
  %v47 = vld [vmem:[%s2 + $0xf0] sm:$0xff]
  %v48 = vld [vmem:[%s2 + $0xf8] sm:$0xff]
  %v49 = vld [vmem:[%s2 + $0x100] sm:$0xff]
  %v50 = vld [vmem:[%s2 + $0x108] sm:$0xff]
  %v51 = vld [vmem:[%s2 + $0x110] sm:$0xff]
  %v52 = vld [vmem:[%s2 + $0x118] sm:$0xff]
  %v53 = vld [vmem:[%s2 + $0x120] sm:$0xff]
  %v54 = vld [vmem:[%s2 + $0x128] sm:$0xff]
  %v55 = vld [vmem:[%s2 + $0x130] sm:$0xff]
  %v56 = vld [vmem:[%s2 + $0x138] sm:$0xff]
  %v57 = vld [vmem:[%s2 + $0x140] sm:$0xff]
  %v58 = vld [vmem:[%s2 + $0x148] sm:$0xff]
  %v59 = vld [vmem:[%s2 + $0x150] sm:$0xff]
  %v60 = vld [vmem:[%s2 + $0x158] sm:$0xff]
  %v61 = vld [vmem:[%s2 + $0x160] sm:$0xff]
  %v62 = vld [vmem:[%s2 + $0x168] sm:$0xff]
  %v63 = vld [vmem:[%s2 + $0x170] sm:$0xff]
  %v64 = vld [vmem:[%s2 + $0x178] sm:$0xff]
  %v65 = vld [vmem:[%s2 + $0x180] sm:$0xff]
  %v66 = vld [vmem:[%s2 + $0x188] sm:$0xff]
  %v67 = vld [vmem:[%s2 + $0x190] sm:$0xff]
  %v68 = vld [vmem:[%s2 + $0x198] sm:$0xff]
  %v69 = vld [vmem:[%s2 + $0x1a0] sm:$0xff]
  %v70 = vld [vmem:[%s2 + $0x1a8] sm:$0xff]
  %v71 = vld [vmem:[%s2 + $0x1b0] sm:$0xff]
  %v72 = vld [vmem:[%s2 + $0x1b8] sm:$0xff]
  %v73 = vld [vmem:[%s2 + $0x1c0] sm:$0xff]
  %v74 = vld [vmem:[%s2 + $0x1c8] sm:$0xff]
  %v75 = vld [vmem:[%s2 + $0x1d0] sm:$0xff]
  %v76 = vld [vmem:[%s2 + $0x1d8] sm:$0xff]
  %v77 = vld [vmem:[%s2 + $0x1e0] sm:$0xff]
  %v78 = vld [vmem:[%s2 + $0x1e8] sm:$0xff]
  %v79 = vld [vmem:[%s2 + $0x1f0] sm:$0xff]
  %v80 = vld [vmem:[%s2 + $0x1f8] sm:$0xff]
  %v81 = vld [vmem:[%s2 + $0x200] sm:$0xff]
  %v82 = vld [vmem:[%s2 + $0x208] sm:$0xff]
  %v83 = vld [vmem:[%s2 + $0x210] sm:$0xff]
  %v84 = vld [vmem:[%s2 + $0x218] sm:$0xff]
  %v85 = vld [vmem:[%s2 + $0x220] sm:$0xff]
  %v86 = vld [vmem:[%s2 + $0x228] sm:$0xff]
  %v87 = vld [vmem:[%s2 + $0x230] sm:$0xff]
  %v88 = vld [vmem:[%s2 + $0x238] sm:$0xff]
  %v89 = vld [vmem:[%s2 + $0x240] sm:$0xff]
  %v90 = vld [vmem:[%s2 + $0x248] sm:$0xff]
  %v91 = vld [vmem:[%s2 + $0x250] sm:$0xff]
  %v92 = vld [vmem:[%s2 + $0x258] sm:$0xff]
  %v93 = vld [vmem:[%s2 + $0x260] sm:$0xff]
  %v94 = vld [vmem:[%s2 + $0x268] sm:$0xff]
  %v95 = vld [vmem:[%s2 + $0x270] sm:$0xff]
  %v96 = vld [vmem:[%s2 + $0x278] sm:$0xff]
  %v97 = vld [vmem:[%s2 + $0x280] sm:$0xff]
  %v98 = vld [vmem:[%s2 + $0x288] sm:$0xff]
  %v99 = vld [vmem:[%s2 + $0x290] sm:$0xff]
  %v100 = vld [vmem:[%s2 + $0x298] sm:$0xff]
  %v101 = vld [vmem:[%s2 + $0x2a0] sm:$0xff]
  %v102 = vld [vmem:[%s2 + $0x2a8] sm:$0xff]
  %v103 = vld [vmem:[%s2 + $0x2b0] sm:$0xff]
  %v104 = vld [vmem:[%s2 + $0x2b8] sm:$0xff]
  %v105 = vld [vmem:[%s2 + $0x2c0] sm:$0xff]
  %v106 = vld [vmem:[%s2 + $0x2c8] sm:$0xff]
  %v107 = vld [vmem:[%s2 + $0x2d0] sm:$0xff]
  %v108 = vld [vmem:[%s2 + $0x2d8] sm:$0xff]
  %v109 = vld [vmem:[%s2 + $0x2e0] sm:$0xff]
  %v110 = vld [vmem:[%s2 + $0x2e8] sm:$0xff]
  %v111 = vld [vmem:[%s2 + $0x2f0] sm:$0xff]
  %v112 = vld [vmem:[%s2 + $0x2f8] sm:$0xff]
  %v113 = vld [vmem:[%s2 + $0x300] sm:$0xff]
  %v114 = vld [vmem:[%s2 + $0x308] sm:$0xff]
  %v115 = vld [vmem:[%s2 + $0x310] sm:$0xff]
  %v116 = vld [vmem:[%s2 + $0x318] sm:$0xff]
  %v117 = vld [vmem:[%s2 + $0x320] sm:$0xff]
  %v118 = vld [vmem:[%s2 + $0x328] sm:$0xff]
  %v119 = vld [vmem:[%s2 + $0x330] sm:$0xff]
  %v120 = vld [vmem:[%s2 + $0x338] sm:$0xff]
  %v121 = vld [vmem:[%s2 + $0x340] sm:$0xff]
  %v122 = vld [vmem:[%s2 + $0x348] sm:$0xff]
  %v123 = vld [vmem:[%s2 + $0x350] sm:$0xff]
  %v124 = vld [vmem:[%s2 + $0x358] sm:$0xff]
  %v125 = vld [vmem:[%s2 + $0x360] sm:$0xff]
  %v126 = vld [vmem:[%s2 + $0x368] sm:$0xff]
  %v127 = vld [vmem:[%s2 + $0x370] sm:$0xff]
  %v128 = vld [vmem:[%s2 + $0x378] sm:$0xff]
  %v129 = vld [vmem:[%s2 + $0x380] sm:$0xff]
  %v130 = vld [vmem:[%s2 + $0x388] sm:$0xff]
  %v131 = vld [vmem:[%s2 + $0x390] sm:$0xff]
  %v132 = vld [vmem:[%s2 + $0x398] sm:$0xff]
  %v133 = vld [vmem:[%s2 + $0x3a0] sm:$0xff]
  %v134 = vld [vmem:[%s2 + $0x3a8] sm:$0xff]
  %v135 = vld [vmem:[%s2 + $0x3b0] sm:$0xff]
  %v136 = vld [vmem:[%s2 + $0x3b8] sm:$0xff]
  %v137 = vld [vmem:[%s2 + $0x3c0] sm:$0xff]
  %v138 = vld [vmem:[%s2 + $0x3c8] sm:$0xff]
  %v139 = vld [vmem:[%s2 + $0x3d0] sm:$0xff]
  %v140 = vld [vmem:[%s2 + $0x3d8] sm:$0xff]
  %v141 = vld [vmem:[%s2 + $0x3e0] sm:$0xff]
  %v142 = vld [vmem:[%s2 + $0x3e8] sm:$0xff]
  %v143 = vld [vmem:[%s2 + $0x3f0] sm:$0xff]
  %v144 = vld [vmem:[%s2 + $0x3f8] sm:$0xff]
  %v145 = vld [vmem:[%s2 + $0x400] sm:$0xff]
  %v146 = vld [vmem:[%s2 + $0x408] sm:$0xff]
  %v147 = vld [vmem:[%s2 + $0x410] sm:$0xff]
  %v148 = vld [vmem:[%s2 + $0x418] sm:$0xff]
  %v149 = vld [vmem:[%s2 + $0x420] sm:$0xff]
  %v150 = vld [vmem:[%s2 + $0x428] sm:$0xff]
  %v151 = vld [vmem:[%s2 + $0x430] sm:$0xff]
  %v152 = vld [vmem:[%s2 + $0x438] sm:$0xff]
  %v153 = vld [vmem:[%s2 + $0x440] sm:$0xff]
  %v154 = vld [vmem:[%s2 + $0x448] sm:$0xff]
  %v155 = vld [vmem:[%s2 + $0x450] sm:$0xff]
  %v156 = vld [vmem:[%s2 + $0x458] sm:$0xff]
  %v157 = vld [vmem:[%s2 + $0x460] sm:$0xff]
  %v158 = vld [vmem:[%s2 + $0x468] sm:$0xff]
  %v159 = vld [vmem:[%s2 + $0x470] sm:$0xff]
  %v160 = vld [vmem:[%s2 + $0x478] sm:$0xff]
  %v161 = vld [vmem:[%s2 + $0x480] sm:$0xff]
  %v162 = vld [vmem:[%s2 + $0x488] sm:$0xff]
  %v163 = vld [vmem:[%s2 + $0x490] sm:$0xff]
  %v164 = vld [vmem:[%s2 + $0x498] sm:$0xff]
  %v165 = vld [vmem:[%s2 + $0x4a0] sm:$0xff]
  %v166 = vld [vmem:[%s2 + $0x4a8] sm:$0xff]
  %v167 = vld [vmem:[%s2 + $0x4b0] sm:$0xff]
  %v168 = vld [vmem:[%s2 + $0x4b8] sm:$0xff]
  %v169 = vld [vmem:[%s2 + $0x4c0] sm:$0xff]
  %v170 = vld [vmem:[%s2 + $0x4c8] sm:$0xff]
  %v171 = vld [vmem:[%s2 + $0x4d0] sm:$0xff]
  %v172 = vld [vmem:[%s2 + $0x4d8] sm:$0xff]
  %v173 = vld [vmem:[%s2 + $0x4e0] sm:$0xff]
  %v174 = vld [vmem:[%s2 + $0x4e8] sm:$0xff]
  %v175 = vld [vmem:[%s2 + $0x4f0] sm:$0xff]
  %v176 = vld [vmem:[%s2 + $0x4f8] sm:$0xff]
  %v177 = vld [vmem:[%s2 + $0x500] sm:$0xff]
  %v178 = vld [vmem:[%s2 + $0x508] sm:$0xff]
  %v179 = vld [vmem:[%s2 + $0x510] sm:$0xff]
  %v180 = vld [vmem:[%s2 + $0x518] sm:$0xff]
  %v181 = vld [vmem:[%s2 + $0x520] sm:$0xff]
  %v182 = vld [vmem:[%s2 + $0x528] sm:$0xff]
  %v183 = vld [vmem:[%s2 + $0x530] sm:$0xff]
  %v184 = vld [vmem:[%s2 + $0x538] sm:$0xff]
  %v185 = vld [vmem:[%s2 + $0x540] sm:$0xff]
  %v186 = vld [vmem:[%s2 + $0x548] sm:$0xff]
  %v187 = vld [vmem:[%s2 + $0x550] sm:$0xff]
  %v188 = vld [vmem:[%s2 + $0x558] sm:$0xff]
  %v189 = vld [vmem:[%s2 + $0x560] sm:$0xff]
  %v190 = vld [vmem:[%s2 + $0x568] sm:$0xff]
  %v191 = vld [vmem:[%s2 + $0x570] sm:$0xff]
  %v192 = vld [vmem:[%s2 + $0x578] sm:$0xff]
  %v193 = vld [vmem:[%s2 + $0x580] sm:$0xff]
  %v194 = vld [vmem:[%s2 + $0x588] sm:$0xff]
  %v195 = vld [vmem:[%s2 + $0x590] sm:$0xff]
  %v196 = vld [vmem:[%s2 + $0x598] sm:$0xff]
  %v197 = vld [vmem:[%s2 + $0x5a0] sm:$0xff]
  %v198 = vld [vmem:[%s2 + $0x5a8] sm:$0xff]
  %v199 = vld [vmem:[%s2 + $0x5b0] sm:$0xff]
  %v200 = vld [vmem:[%s2 + $0x5b8] sm:$0xff]
  %v201 = vld [vmem:[%s2 + $0x5c0] sm:$0xff]
  %v202 = vld [vmem:[%s2 + $0x5c8] sm:$0xff]
  %v203 = vld [vmem:[%s2 + $0x5d0] sm:$0xff]
  %v204 = vld [vmem:[%s2 + $0x5d8] sm:$0xff]
  %v205 = vld [vmem:[%s2 + $0x5e0] sm:$0xff]
  %v206 = vld [vmem:[%s2 + $0x5e8] sm:$0xff]
  %v207 = vld [vmem:[%s2 + $0x5f0] sm:$0xff]
  %v208 = vld [vmem:[%s2 + $0x5f8] sm:$0xff]
  %v209 = vld [vmem:[%s0] sm:$0xff]
  %v210 = vld [vmem:[%s0 + $0x8] sm:$0xff]
  %v211 = vld [vmem:[%s0 + $0x10] sm:$0xff]
  %v212 = vld [vmem:[%s0 + $0x18] sm:$0xff]
  %v213 = vld [vmem:[%s0 + $0x20] sm:$0xff]
  %v214 = vld [vmem:[%s0 + $0x28] sm:$0xff]
  %v215 = vld [vmem:[%s0 + $0x30] sm:$0xff]
  %v216 = vld [vmem:[%s0 + $0x38] sm:$0xff]
  %v217 = vld [vmem:[%s0 + $0x40] sm:$0xff]
  %v218 = vld [vmem:[%s0 + $0x48] sm:$0xff]
  %v219 = vld [vmem:[%s0 + $0x50] sm:$0xff]
  %v220 = vld [vmem:[%s0 + $0x58] sm:$0xff]
  %v221 = vld [vmem:[%s0 + $0x60] sm:$0xff]
  %v222 = vld [vmem:[%s0 + $0x68] sm:$0xff]
  %v223 = vld [vmem:[%s0 + $0x70] sm:$0xff]
  %v224 = vld [vmem:[%s0 + $0x78] sm:$0xff]
  %v225 = vld [vmem:[%s0 + $0x80] sm:$0xff]
  %v226 = vld [vmem:[%s0 + $0x88] sm:$0xff]
  %v227 = vld [vmem:[%s0 + $0x90] sm:$0xff]
  %v228 = vld [vmem:[%s0 + $0x98] sm:$0xff]
  %v229 = vld [vmem:[%s0 + $0xa0] sm:$0xff]
  %v251 = vunpack.c.l.b16 %v209
  %v252 = vunpack.c.h.b16 %v209
  %v253 = vunpack.c.l.b16 %v210
  %v254 = vunpack.c.h.b16 %v210
  %v255 = vunpack.c.l.b16 %v211
  %v256 = vunpack.c.h.b16 %v211
  %v257 = vunpack.c.l.b16 %v212
  %v258 = vunpack.c.h.b16 %v212
  %v259 = vunpack.c.l.b16 %v213
  %v260 = vunpack.c.h.b16 %v213
  %v261 = vunpack.c.l.b16 %v214
  %v262 = vunpack.c.h.b16 %v214
  %v263 = vunpack.c.l.b16 %v215
  %v264 = vunpack.c.h.b16 %v215
  %v265 = vunpack.c.l.b16 %v216
  %v266 = vunpack.c.h.b16 %v216
  %v267 = vunpack.c.l.b16 %v217
  %v268 = vunpack.c.h.b16 %v217
  %v269 = vunpack.c.l.b16 %v218
  %v270 = vunpack.c.h.b16 %v218
  %v271 = vunpack.c.l.b16 %v219
  %v272 = vunpack.c.h.b16 %v219
  %v273 = vunpack.c.l.b16 %v220
  %v274 = vunpack.c.h.b16 %v220
  %v275 = vunpack.c.l.b16 %v221
  %v276 = vunpack.c.h.b16 %v221
  %v277 = vunpack.c.l.b16 %v222
  %v278 = vunpack.c.h.b16 %v222
  %v279 = vunpack.c.l.b16 %v223
  %v280 = vunpack.c.h.b16 %v223
  %v281 = vunpack.c.l.b16 %v224
  %v282 = vunpack.c.h.b16 %v224
  %v283 = vunpack.c.l.b16 %v225
  %v284 = vunpack.c.h.b16 %v225
  %v285 = vunpack.c.l.b16 %v226
  %v286 = vunpack.c.h.b16 %v226
  %v287 = vunpack.c.l.b16 %v227
  %v288 = vunpack.c.h.b16 %v227
  %v289 = vunpack.c.l.b16 %v228
  %v290 = vunpack.c.h.b16 %v228
  %v291 = vunpack.c.l.b16 %v229
  %v292 = vunpack.c.h.b16 %v229
  %v293 = vpack.c.b16 %v257, %v251
  %v294 = vpack.c.b16 %v258, %v252
  %v295 = vpack.c.b16 %v259, %v253
  %v296 = vpack.c.b16 %v260, %v254
  %v297 = vpack.c.b16 %v261, %v255
  %v298 = vpack.c.b16 %v262, %v256
  %v299 = vpack.c.b16 %v269, %v263
  %v300 = vpack.c.b16 %v270, %v264
  %v301 = vpack.c.b16 %v271, %v265
  %v302 = vpack.c.b16 %v272, %v266
  %v303 = vpack.c.b16 %v273, %v267
  %v304 = vpack.c.b16 %v274, %v268
  %v305 = vpack.c.b16 %v281, %v275
  %v306 = vpack.c.b16 %v282, %v276
  %v307 = vpack.c.b16 %v283, %v277
  %v308 = vpack.c.b16 %v284, %v278
  %v309 = vpack.c.b16 %v285, %v279
  %v310 = vpack.c.b16 %v286, %v280
  %v311 = vpack.c.b16 %v287, %v287
  %v312 = vpack.c.b16 %v288, %v288
  %v313 = vpack.c.b16 %v289, %v289
  %v314 = vpack.c.b16 %v290, %v290
  %v315 = vpack.c.b16 %v291, %v291
  %v316 = vpack.c.b16 %v292, %v292
  %v533 = vunpack.c.l.b16 %v17
  %v534 = vunpack.c.h.b16 %v17
  %v535 = vunpack.c.l.b16 %v18
  %v536 = vunpack.c.h.b16 %v18
  %v537 = vunpack.c.l.b16 %v19
  %v538 = vunpack.c.h.b16 %v19
  %v539 = vunpack.c.l.b16 %v20
  %v540 = vunpack.c.h.b16 %v20
  %v541 = vunpack.c.l.b16 %v21
  %v542 = vunpack.c.h.b16 %v21
  %v543 = vunpack.c.l.b16 %v22
  %v544 = vunpack.c.h.b16 %v22
  %v545 = vunpack.c.l.b16 %v23
  %v546 = vunpack.c.h.b16 %v23
  %v547 = vunpack.c.l.b16 %v24
  %v548 = vunpack.c.h.b16 %v24
  %v549 = vunpack.c.l.b16 %v25
  %v550 = vunpack.c.h.b16 %v25
  %v551 = vunpack.c.l.b16 %v26
  %v552 = vunpack.c.h.b16 %v26
  %v553 = vunpack.c.l.b16 %v27
  %v554 = vunpack.c.h.b16 %v27
  %v555 = vunpack.c.l.b16 %v28
  %v556 = vunpack.c.h.b16 %v28
  %v557 = vunpack.c.l.b16 %v29
  %v558 = vunpack.c.h.b16 %v29
  %v559 = vunpack.c.l.b16 %v30
  %v560 = vunpack.c.h.b16 %v30
  %v561 = vunpack.c.l.b16 %v31
  %v562 = vunpack.c.h.b16 %v31
  %v563 = vunpack.c.l.b16 %v32
  %v564 = vunpack.c.h.b16 %v32
  %v565 = vunpack.c.l.b16 %v33
  %v566 = vunpack.c.h.b16 %v33
  %v567 = vunpack.c.l.b16 %v34
  %v568 = vunpack.c.h.b16 %v34
  %v569 = vunpack.c.l.b16 %v35
  %v570 = vunpack.c.h.b16 %v35
  %v571 = vunpack.c.l.b16 %v36
  %v572 = vunpack.c.h.b16 %v36
  %v573 = vunpack.c.l.b16 %v37
  %v574 = vunpack.c.h.b16 %v37
  %v575 = vunpack.c.l.b16 %v38
  %v576 = vunpack.c.h.b16 %v38
  %v577 = vunpack.c.l.b16 %v39
  %v578 = vunpack.c.h.b16 %v39
  %v579 = vunpack.c.l.b16 %v40
  %v580 = vunpack.c.h.b16 %v40
  %v581 = vunpack.c.l.b16 %v41
  %v582 = vunpack.c.h.b16 %v41
  %v583 = vunpack.c.l.b16 %v42
  %v584 = vunpack.c.h.b16 %v42
  %v585 = vunpack.c.l.b16 %v43
  %v586 = vunpack.c.h.b16 %v43
  %v587 = vunpack.c.l.b16 %v44
  %v588 = vunpack.c.h.b16 %v44
  %v589 = vunpack.c.l.b16 %v45
  %v590 = vunpack.c.h.b16 %v45
  %v591 = vunpack.c.l.b16 %v46
  %v592 = vunpack.c.h.b16 %v46
  %v593 = vunpack.c.l.b16 %v47
  %v594 = vunpack.c.h.b16 %v47
  %v595 = vunpack.c.l.b16 %v48
  %v596 = vunpack.c.h.b16 %v48
  %v597 = vunpack.c.l.b16 %v49
  %v598 = vunpack.c.h.b16 %v49
  %v599 = vunpack.c.l.b16 %v50
  %v600 = vunpack.c.h.b16 %v50
  %v601 = vunpack.c.l.b16 %v51
  %v602 = vunpack.c.h.b16 %v51
  %v603 = vunpack.c.l.b16 %v52
  %v604 = vunpack.c.h.b16 %v52
  %v605 = vunpack.c.l.b16 %v53
  %v606 = vunpack.c.h.b16 %v53
  %v607 = vunpack.c.l.b16 %v54
  %v608 = vunpack.c.h.b16 %v54
  %v609 = vunpack.c.l.b16 %v55
  %v610 = vunpack.c.h.b16 %v55
  %v611 = vunpack.c.l.b16 %v56
  %v612 = vunpack.c.h.b16 %v56
  %v613 = vunpack.c.l.b16 %v57
  %v614 = vunpack.c.h.b16 %v57
  %v615 = vunpack.c.l.b16 %v58
  %v616 = vunpack.c.h.b16 %v58
  %v617 = vunpack.c.l.b16 %v59
  %v618 = vunpack.c.h.b16 %v59
  %v619 = vunpack.c.l.b16 %v60
  %v620 = vunpack.c.h.b16 %v60
  %v621 = vunpack.c.l.b16 %v61
  %v622 = vunpack.c.h.b16 %v61
  %v623 = vunpack.c.l.b16 %v62
  %v624 = vunpack.c.h.b16 %v62
  %v625 = vunpack.c.l.b16 %v63
  %v626 = vunpack.c.h.b16 %v63
  %v627 = vunpack.c.l.b16 %v64
  %v628 = vunpack.c.h.b16 %v64
  %v629 = vunpack.c.l.b16 %v65
  %v630 = vunpack.c.h.b16 %v65
  %v631 = vunpack.c.l.b16 %v66
  %v632 = vunpack.c.h.b16 %v66
  %v633 = vunpack.c.l.b16 %v67
  %v634 = vunpack.c.h.b16 %v67
  %v635 = vunpack.c.l.b16 %v68
  %v636 = vunpack.c.h.b16 %v68
  %v637 = vunpack.c.l.b16 %v69
  %v638 = vunpack.c.h.b16 %v69
  %v639 = vunpack.c.l.b16 %v70
  %v640 = vunpack.c.h.b16 %v70
  %v641 = vunpack.c.l.b16 %v71
  %v642 = vunpack.c.h.b16 %v71
  %v643 = vunpack.c.l.b16 %v72
  %v644 = vunpack.c.h.b16 %v72
  %v645 = vunpack.c.l.b16 %v73
  %v646 = vunpack.c.h.b16 %v73
  %v647 = vunpack.c.l.b16 %v74
  %v648 = vunpack.c.h.b16 %v74
  %v649 = vunpack.c.l.b16 %v75
  %v650 = vunpack.c.h.b16 %v75
  %v651 = vunpack.c.l.b16 %v76
  %v652 = vunpack.c.h.b16 %v76
  %v653 = vunpack.c.l.b16 %v77
  %v654 = vunpack.c.h.b16 %v77
  %v655 = vunpack.c.l.b16 %v78
  %v656 = vunpack.c.h.b16 %v78
  %v657 = vunpack.c.l.b16 %v79
  %v658 = vunpack.c.h.b16 %v79
  %v659 = vunpack.c.l.b16 %v80
  %v660 = vunpack.c.h.b16 %v80
  %v661 = vunpack.c.l.b16 %v81
  %v662 = vunpack.c.h.b16 %v81
  %v663 = vunpack.c.l.b16 %v82
  %v664 = vunpack.c.h.b16 %v82
  %v665 = vunpack.c.l.b16 %v83
  %v666 = vunpack.c.h.b16 %v83
  %v667 = vunpack.c.l.b16 %v84
  %v668 = vunpack.c.h.b16 %v84
  %v669 = vunpack.c.l.b16 %v85
  %v670 = vunpack.c.h.b16 %v85
  %v671 = vunpack.c.l.b16 %v86
  %v672 = vunpack.c.h.b16 %v86
  %v673 = vunpack.c.l.b16 %v87
  %v674 = vunpack.c.h.b16 %v87
  %v675 = vunpack.c.l.b16 %v88
  %v676 = vunpack.c.h.b16 %v88
  %v677 = vunpack.c.l.b16 %v89
  %v678 = vunpack.c.h.b16 %v89
  %v679 = vunpack.c.l.b16 %v90
  %v680 = vunpack.c.h.b16 %v90
  %v681 = vunpack.c.l.b16 %v91
  %v682 = vunpack.c.h.b16 %v91
  %v683 = vunpack.c.l.b16 %v92
  %v684 = vunpack.c.h.b16 %v92
  %v685 = vunpack.c.l.b16 %v93
  %v686 = vunpack.c.h.b16 %v93
  %v687 = vunpack.c.l.b16 %v94
  %v688 = vunpack.c.h.b16 %v94
  %v689 = vunpack.c.l.b16 %v95
  %v690 = vunpack.c.h.b16 %v95
  %v691 = vunpack.c.l.b16 %v96
  %v692 = vunpack.c.h.b16 %v96
  %v693 = vunpack.c.l.b16 %v97
  %v694 = vunpack.c.h.b16 %v97
  %v695 = vunpack.c.l.b16 %v98
  %v696 = vunpack.c.h.b16 %v98
  %v697 = vunpack.c.l.b16 %v99
  %v698 = vunpack.c.h.b16 %v99
  %v699 = vunpack.c.l.b16 %v100
  %v700 = vunpack.c.h.b16 %v100
  %v701 = vunpack.c.l.b16 %v101
  %v702 = vunpack.c.h.b16 %v101
  %v703 = vunpack.c.l.b16 %v102
  %v704 = vunpack.c.h.b16 %v102
  %v705 = vunpack.c.l.b16 %v103
  %v706 = vunpack.c.h.b16 %v103
  %v707 = vunpack.c.l.b16 %v104
  %v708 = vunpack.c.h.b16 %v104
  %v709 = vunpack.c.l.b16 %v105
  %v710 = vunpack.c.h.b16 %v105
  %v711 = vunpack.c.l.b16 %v106
  %v712 = vunpack.c.h.b16 %v106
  %v713 = vunpack.c.l.b16 %v107
  %v714 = vunpack.c.h.b16 %v107
  %v715 = vunpack.c.l.b16 %v108
  %v716 = vunpack.c.h.b16 %v108
  %v717 = vunpack.c.l.b16 %v109
  %v718 = vunpack.c.h.b16 %v109
  %v719 = vunpack.c.l.b16 %v110
  %v720 = vunpack.c.h.b16 %v110
  %v721 = vunpack.c.l.b16 %v111
  %v722 = vunpack.c.h.b16 %v111
  %v723 = vunpack.c.l.b16 %v112
  %v724 = vunpack.c.h.b16 %v112
  %v725 = vunpack.c.l.b16 %v113
  %v726 = vunpack.c.h.b16 %v113
  %v727 = vunpack.c.l.b16 %v114
  %v728 = vunpack.c.h.b16 %v114
  %v729 = vunpack.c.l.b16 %v115
  %v730 = vunpack.c.h.b16 %v115
  %v731 = vunpack.c.l.b16 %v116
  %v732 = vunpack.c.h.b16 %v116
  %v733 = vunpack.c.l.b16 %v117
  %v734 = vunpack.c.h.b16 %v117
  %v735 = vunpack.c.l.b16 %v118
  %v736 = vunpack.c.h.b16 %v118
  %v737 = vunpack.c.l.b16 %v119
  %v738 = vunpack.c.h.b16 %v119
  %v739 = vunpack.c.l.b16 %v120
  %v740 = vunpack.c.h.b16 %v120
  %v741 = vunpack.c.l.b16 %v121
  %v742 = vunpack.c.h.b16 %v121
  %v743 = vunpack.c.l.b16 %v122
  %v744 = vunpack.c.h.b16 %v122
  %v745 = vunpack.c.l.b16 %v123
  %v746 = vunpack.c.h.b16 %v123
  %v747 = vunpack.c.l.b16 %v124
  %v748 = vunpack.c.h.b16 %v124
  %v749 = vunpack.c.l.b16 %v125
  %v750 = vunpack.c.h.b16 %v125
  %v751 = vunpack.c.l.b16 %v126
  %v752 = vunpack.c.h.b16 %v126
  %v753 = vunpack.c.l.b16 %v127
  %v754 = vunpack.c.h.b16 %v127
  %v755 = vunpack.c.l.b16 %v128
  %v756 = vunpack.c.h.b16 %v128
  %v757 = vunpack.c.l.b16 %v129
  %v758 = vunpack.c.h.b16 %v129
  %v759 = vunpack.c.l.b16 %v130
  %v760 = vunpack.c.h.b16 %v130
  %v761 = vunpack.c.l.b16 %v131
  %v762 = vunpack.c.h.b16 %v131
  %v763 = vunpack.c.l.b16 %v132
  %v764 = vunpack.c.h.b16 %v132
  %v765 = vunpack.c.l.b16 %v133
  %v766 = vunpack.c.h.b16 %v133
  %v767 = vunpack.c.l.b16 %v134
  %v768 = vunpack.c.h.b16 %v134
  %v769 = vunpack.c.l.b16 %v135
  %v770 = vunpack.c.h.b16 %v135
  %v771 = vunpack.c.l.b16 %v136
  %v772 = vunpack.c.h.b16 %v136
  %v773 = vunpack.c.l.b16 %v137
  %v774 = vunpack.c.h.b16 %v137
  %v775 = vunpack.c.l.b16 %v138
  %v776 = vunpack.c.h.b16 %v138
  %v777 = vunpack.c.l.b16 %v139
  %v778 = vunpack.c.h.b16 %v139
  %v779 = vunpack.c.l.b16 %v140
  %v780 = vunpack.c.h.b16 %v140
  %v781 = vunpack.c.l.b16 %v141
  %v782 = vunpack.c.h.b16 %v141
  %v783 = vunpack.c.l.b16 %v142
  %v784 = vunpack.c.h.b16 %v142
  %v785 = vunpack.c.l.b16 %v143
  %v786 = vunpack.c.h.b16 %v143
  %v787 = vunpack.c.l.b16 %v144
  %v788 = vunpack.c.h.b16 %v144
  %v789 = vunpack.c.l.b16 %v145
  %v790 = vunpack.c.h.b16 %v145
  %v791 = vunpack.c.l.b16 %v146
  %v792 = vunpack.c.h.b16 %v146
  %v793 = vunpack.c.l.b16 %v147
  %v794 = vunpack.c.h.b16 %v147
  %v795 = vunpack.c.l.b16 %v148
  %v796 = vunpack.c.h.b16 %v148
  %v797 = vunpack.c.l.b16 %v149
  %v798 = vunpack.c.h.b16 %v149
  %v799 = vunpack.c.l.b16 %v150
  %v800 = vunpack.c.h.b16 %v150
  %v801 = vunpack.c.l.b16 %v151
  %v802 = vunpack.c.h.b16 %v151
  %v803 = vunpack.c.l.b16 %v152
  %v804 = vunpack.c.h.b16 %v152
  %v805 = vunpack.c.l.b16 %v153
  %v806 = vunpack.c.h.b16 %v153
  %v807 = vunpack.c.l.b16 %v154
  %v808 = vunpack.c.h.b16 %v154
  %v809 = vunpack.c.l.b16 %v155
  %v810 = vunpack.c.h.b16 %v155
  %v811 = vunpack.c.l.b16 %v156
  %v812 = vunpack.c.h.b16 %v156
  %v813 = vunpack.c.l.b16 %v157
  %v814 = vunpack.c.h.b16 %v157
  %v815 = vunpack.c.l.b16 %v158
  %v816 = vunpack.c.h.b16 %v158
  %v817 = vunpack.c.l.b16 %v159
  %v818 = vunpack.c.h.b16 %v159
  %v819 = vunpack.c.l.b16 %v160
  %v820 = vunpack.c.h.b16 %v160
  %v821 = vunpack.c.l.b16 %v161
  %v822 = vunpack.c.h.b16 %v161
  %v823 = vunpack.c.l.b16 %v162
  %v824 = vunpack.c.h.b16 %v162
  %v825 = vunpack.c.l.b16 %v163
  %v826 = vunpack.c.h.b16 %v163
  %v827 = vunpack.c.l.b16 %v164
  %v828 = vunpack.c.h.b16 %v164
  %v829 = vunpack.c.l.b16 %v165
  %v830 = vunpack.c.h.b16 %v165
  %v831 = vunpack.c.l.b16 %v166
  %v832 = vunpack.c.h.b16 %v166
  %v833 = vunpack.c.l.b16 %v167
  %v834 = vunpack.c.h.b16 %v167
  %v835 = vunpack.c.l.b16 %v168
  %v836 = vunpack.c.h.b16 %v168
  %v837 = vunpack.c.l.b16 %v169
  %v838 = vunpack.c.h.b16 %v169
  %v839 = vunpack.c.l.b16 %v170
  %v840 = vunpack.c.h.b16 %v170
  %v841 = vunpack.c.l.b16 %v171
  %v842 = vunpack.c.h.b16 %v171
  %v843 = vunpack.c.l.b16 %v172
  %v844 = vunpack.c.h.b16 %v172
  %v845 = vunpack.c.l.b16 %v173
  %v846 = vunpack.c.h.b16 %v173
  %v847 = vunpack.c.l.b16 %v174
  %v848 = vunpack.c.h.b16 %v174
  %v849 = vunpack.c.l.b16 %v175
  %v850 = vunpack.c.h.b16 %v175
  %v851 = vunpack.c.l.b16 %v176
  %v852 = vunpack.c.h.b16 %v176
  %v853 = vunpack.c.l.b16 %v177
  %v854 = vunpack.c.h.b16 %v177
  %v855 = vunpack.c.l.b16 %v178
  %v856 = vunpack.c.h.b16 %v178
  %v857 = vunpack.c.l.b16 %v179
  %v858 = vunpack.c.h.b16 %v179
  %v859 = vunpack.c.l.b16 %v180
  %v860 = vunpack.c.h.b16 %v180
  %v861 = vunpack.c.l.b16 %v181
  %v862 = vunpack.c.h.b16 %v181
  %v863 = vunpack.c.l.b16 %v182
  %v864 = vunpack.c.h.b16 %v182
  %v865 = vunpack.c.l.b16 %v183
  %v866 = vunpack.c.h.b16 %v183
  %v867 = vunpack.c.l.b16 %v184
  %v868 = vunpack.c.h.b16 %v184
  %v869 = vunpack.c.l.b16 %v185
  %v870 = vunpack.c.h.b16 %v185
  %v871 = vunpack.c.l.b16 %v186
  %v872 = vunpack.c.h.b16 %v186
  %v873 = vunpack.c.l.b16 %v187
  %v874 = vunpack.c.h.b16 %v187
  %v875 = vunpack.c.l.b16 %v188
  %v876 = vunpack.c.h.b16 %v188
  %v877 = vunpack.c.l.b16 %v189
  %v878 = vunpack.c.h.b16 %v189
  %v879 = vunpack.c.l.b16 %v190
  %v880 = vunpack.c.h.b16 %v190
  %v881 = vunpack.c.l.b16 %v191
  %v882 = vunpack.c.h.b16 %v191
  %v883 = vunpack.c.l.b16 %v192
  %v884 = vunpack.c.h.b16 %v192
  %v885 = vunpack.c.l.b16 %v193
  %v886 = vunpack.c.h.b16 %v193
  %v887 = vunpack.c.l.b16 %v194
  %v888 = vunpack.c.h.b16 %v194
  %v889 = vunpack.c.l.b16 %v195
  %v890 = vunpack.c.h.b16 %v195
  %v891 = vunpack.c.l.b16 %v196
  %v892 = vunpack.c.h.b16 %v196
  %v893 = vunpack.c.l.b16 %v197
  %v894 = vunpack.c.h.b16 %v197
  %v895 = vunpack.c.l.b16 %v198
  %v896 = vunpack.c.h.b16 %v198
  %v897 = vunpack.c.l.b16 %v199
  %v898 = vunpack.c.h.b16 %v199
  %v899 = vunpack.c.l.b16 %v200
  %v900 = vunpack.c.h.b16 %v200
  %v901 = vunpack.c.l.b16 %v201
  %v902 = vunpack.c.h.b16 %v201
  %v903 = vunpack.c.l.b16 %v202
  %v904 = vunpack.c.h.b16 %v202
  %v905 = vunpack.c.l.b16 %v203
  %v906 = vunpack.c.h.b16 %v203
  %v907 = vunpack.c.l.b16 %v204
  %v908 = vunpack.c.h.b16 %v204
  %v909 = vunpack.c.l.b16 %v205
  %v910 = vunpack.c.h.b16 %v205
  %v911 = vunpack.c.l.b16 %v206
  %v912 = vunpack.c.h.b16 %v206
  %v913 = vunpack.c.l.b16 %v207
  %v914 = vunpack.c.h.b16 %v207
  %v915 = vunpack.c.l.b16 %v208
  %v916 = vunpack.c.h.b16 %v208
  %v917 = vpack.c.b16 %v537, %v533
  %v918 = vpack.c.b16 %v538, %v534
  %v919 = vpack.c.b16 %v539, %v535
  %v920 = vpack.c.b16 %v540, %v536
  %v921 = vpack.c.b16 %v545, %v541
  %v922 = vpack.c.b16 %v546, %v542
  %v923 = vpack.c.b16 %v547, %v543
  %v924 = vpack.c.b16 %v548, %v544
  %v925 = vpack.c.b16 %v553, %v549
  %v926 = vpack.c.b16 %v554, %v550
  %v927 = vpack.c.b16 %v555, %v551
  %v928 = vpack.c.b16 %v556, %v552
  %v929 = vpack.c.b16 %v561, %v557
  %v930 = vpack.c.b16 %v562, %v558
  %v931 = vpack.c.b16 %v563, %v559
  %v932 = vpack.c.b16 %v564, %v560
  %v933 = vpack.c.b16 %v569, %v565
  %v934 = vpack.c.b16 %v570, %v566
  %v935 = vpack.c.b16 %v571, %v567
  %v936 = vpack.c.b16 %v572, %v568
  %v937 = vpack.c.b16 %v577, %v573
  %v938 = vpack.c.b16 %v578, %v574
  %v939 = vpack.c.b16 %v579, %v575
  %v940 = vpack.c.b16 %v580, %v576
  %v941 = vpack.c.b16 %v585, %v581
  %v942 = vpack.c.b16 %v586, %v582
  %v943 = vpack.c.b16 %v587, %v583
  %v944 = vpack.c.b16 %v588, %v584
  %v945 = vpack.c.b16 %v593, %v589
  %v946 = vpack.c.b16 %v594, %v590
  %v947 = vpack.c.b16 %v595, %v591
  %v948 = vpack.c.b16 %v596, %v592
  %v949 = vpack.c.b16 %v601, %v597
  %v950 = vpack.c.b16 %v602, %v598
  %v951 = vpack.c.b16 %v603, %v599
  %v952 = vpack.c.b16 %v604, %v600
  %v953 = vpack.c.b16 %v609, %v605
  %v954 = vpack.c.b16 %v610, %v606
  %v955 = vpack.c.b16 %v611, %v607
  %v956 = vpack.c.b16 %v612, %v608
  %v957 = vpack.c.b16 %v617, %v613
  %v958 = vpack.c.b16 %v618, %v614
  %v959 = vpack.c.b16 %v619, %v615
  %v960 = vpack.c.b16 %v620, %v616
  %v961 = vpack.c.b16 %v625, %v621
  %v962 = vpack.c.b16 %v626, %v622
  %v963 = vpack.c.b16 %v627, %v623
  %v964 = vpack.c.b16 %v628, %v624
  %v965 = vpack.c.b16 %v633, %v629
  %v966 = vpack.c.b16 %v634, %v630
  %v967 = vpack.c.b16 %v635, %v631
  %v968 = vpack.c.b16 %v636, %v632
  %v969 = vpack.c.b16 %v641, %v637
  %v970 = vpack.c.b16 %v642, %v638
  %v971 = vpack.c.b16 %v643, %v639
  %v972 = vpack.c.b16 %v644, %v640
  %v973 = vpack.c.b16 %v649, %v645
  %v974 = vpack.c.b16 %v650, %v646
  %v975 = vpack.c.b16 %v651, %v647
  %v976 = vpack.c.b16 %v652, %v648
  %v977 = vpack.c.b16 %v657, %v653
  %v978 = vpack.c.b16 %v658, %v654
  %v979 = vpack.c.b16 %v659, %v655
  %v980 = vpack.c.b16 %v660, %v656
  %v981 = vpack.c.b16 %v665, %v661
  %v982 = vpack.c.b16 %v666, %v662
  %v983 = vpack.c.b16 %v667, %v663
  %v984 = vpack.c.b16 %v668, %v664
  %v985 = vpack.c.b16 %v673, %v669
  %v986 = vpack.c.b16 %v674, %v670
  %v987 = vpack.c.b16 %v675, %v671
  %v988 = vpack.c.b16 %v676, %v672
  %v989 = vpack.c.b16 %v681, %v677
  %v990 = vpack.c.b16 %v682, %v678
  %v991 = vpack.c.b16 %v683, %v679
  %v992 = vpack.c.b16 %v684, %v680
  %v993 = vpack.c.b16 %v689, %v685
  %v994 = vpack.c.b16 %v690, %v686
  %v995 = vpack.c.b16 %v691, %v687
  %v996 = vpack.c.b16 %v692, %v688
  %v997 = vpack.c.b16 %v697, %v693
  %v998 = vpack.c.b16 %v698, %v694
  %v999 = vpack.c.b16 %v699, %v695
  %v1000 = vpack.c.b16 %v700, %v696
  %v1001 = vpack.c.b16 %v705, %v701
  %v1002 = vpack.c.b16 %v706, %v702
  %v1003 = vpack.c.b16 %v707, %v703
  %v1004 = vpack.c.b16 %v708, %v704
  %v1005 = vpack.c.b16 %v713, %v709
  %v1006 = vpack.c.b16 %v714, %v710
  %v1007 = vpack.c.b16 %v715, %v711
  %v1008 = vpack.c.b16 %v716, %v712
  %v1009 = vpack.c.b16 %v721, %v717
  %v1010 = vpack.c.b16 %v722, %v718
  %v1011 = vpack.c.b16 %v723, %v719
  %v1012 = vpack.c.b16 %v724, %v720
  %v1013 = vpack.c.b16 %v729, %v725
  %v1014 = vpack.c.b16 %v730, %v726
  %v1015 = vpack.c.b16 %v731, %v727
  %v1016 = vpack.c.b16 %v732, %v728
  %v1017 = vpack.c.b16 %v737, %v733
  %v1018 = vpack.c.b16 %v738, %v734
  %v1019 = vpack.c.b16 %v739, %v735
  %v1020 = vpack.c.b16 %v740, %v736
  %v1021 = vpack.c.b16 %v745, %v741
  %v1022 = vpack.c.b16 %v746, %v742
  %v1023 = vpack.c.b16 %v747, %v743
  %v1024 = vpack.c.b16 %v748, %v744
  %v1025 = vpack.c.b16 %v753, %v749
  %v1026 = vpack.c.b16 %v754, %v750
  %v1027 = vpack.c.b16 %v755, %v751
  %v1028 = vpack.c.b16 %v756, %v752
  %v1029 = vpack.c.b16 %v761, %v757
  %v1030 = vpack.c.b16 %v762, %v758
  %v1031 = vpack.c.b16 %v763, %v759
  %v1032 = vpack.c.b16 %v764, %v760
  %v1033 = vpack.c.b16 %v769, %v765
  %v1034 = vpack.c.b16 %v770, %v766
  %v1035 = vpack.c.b16 %v771, %v767
  %v1036 = vpack.c.b16 %v772, %v768
  %v1037 = vpack.c.b16 %v777, %v773
  %v1038 = vpack.c.b16 %v778, %v774
  %v1039 = vpack.c.b16 %v779, %v775
  %v1040 = vpack.c.b16 %v780, %v776
  %v1041 = vpack.c.b16 %v785, %v781
  %v1042 = vpack.c.b16 %v786, %v782
  %v1043 = vpack.c.b16 %v787, %v783
  %v1044 = vpack.c.b16 %v788, %v784
  %v1045 = vpack.c.b16 %v793, %v789
  %v1046 = vpack.c.b16 %v794, %v790
  %v1047 = vpack.c.b16 %v795, %v791
  %v1048 = vpack.c.b16 %v796, %v792
  %v1049 = vpack.c.b16 %v801, %v797
  %v1050 = vpack.c.b16 %v802, %v798
  %v1051 = vpack.c.b16 %v803, %v799
  %v1052 = vpack.c.b16 %v804, %v800
  %v1053 = vpack.c.b16 %v809, %v805
  %v1054 = vpack.c.b16 %v810, %v806
  %v1055 = vpack.c.b16 %v811, %v807
  %v1056 = vpack.c.b16 %v812, %v808
  %v1057 = vpack.c.b16 %v817, %v813
  %v1058 = vpack.c.b16 %v818, %v814
  %v1059 = vpack.c.b16 %v819, %v815
  %v1060 = vpack.c.b16 %v820, %v816
  %v1061 = vpack.c.b16 %v825, %v821
  %v1062 = vpack.c.b16 %v826, %v822
  %v1063 = vpack.c.b16 %v827, %v823
  %v1064 = vpack.c.b16 %v828, %v824
  %v1065 = vpack.c.b16 %v833, %v829
  %v1066 = vpack.c.b16 %v834, %v830
  %v1067 = vpack.c.b16 %v835, %v831
  %v1068 = vpack.c.b16 %v836, %v832
  %v1069 = vpack.c.b16 %v841, %v837
  %v1070 = vpack.c.b16 %v842, %v838
  %v1071 = vpack.c.b16 %v843, %v839
  %v1072 = vpack.c.b16 %v844, %v840
  %v1073 = vpack.c.b16 %v849, %v845
  %v1074 = vpack.c.b16 %v850, %v846
  %v1075 = vpack.c.b16 %v851, %v847
  %v1076 = vpack.c.b16 %v852, %v848
  %v1077 = vpack.c.b16 %v857, %v853
  %v1078 = vpack.c.b16 %v858, %v854
  %v1079 = vpack.c.b16 %v859, %v855
  %v1080 = vpack.c.b16 %v860, %v856
  %v1081 = vpack.c.b16 %v865, %v861
  %v1082 = vpack.c.b16 %v866, %v862
  %v1083 = vpack.c.b16 %v867, %v863
  %v1084 = vpack.c.b16 %v868, %v864
  %v1085 = vpack.c.b16 %v873, %v869
  %v1086 = vpack.c.b16 %v874, %v870
  %v1087 = vpack.c.b16 %v875, %v871
  %v1088 = vpack.c.b16 %v876, %v872
  %v1089 = vpack.c.b16 %v881, %v877
  %v1090 = vpack.c.b16 %v882, %v878
  %v1091 = vpack.c.b16 %v883, %v879
  %v1092 = vpack.c.b16 %v884, %v880
  %v1093 = vpack.c.b16 %v889, %v885
  %v1094 = vpack.c.b16 %v890, %v886
  %v1095 = vpack.c.b16 %v891, %v887
  %v1096 = vpack.c.b16 %v892, %v888
  %v1097 = vpack.c.b16 %v897, %v893
  %v1098 = vpack.c.b16 %v898, %v894
  %v1099 = vpack.c.b16 %v899, %v895
  %v1100 = vpack.c.b16 %v900, %v896
  %v1101 = vpack.c.b16 %v905, %v901
  %v1102 = vpack.c.b16 %v906, %v902
  %v1103 = vpack.c.b16 %v907, %v903
  %v1104 = vpack.c.b16 %v908, %v904
  %v1105 = vpack.c.b16 %v913, %v909
  %v1106 = vpack.c.b16 %v914, %v910
  %v1107 = vpack.c.b16 %v915, %v911
  %v1108 = vpack.c.b16 %v916, %v912
  %1301 = vmatprep.subr.bf16.mxu0 %v946
  %1302 = vmatpush1.bf16.msra.mxu0 %v945
  %1303 = vmatprep.subr.bf16.mxu0 %v942
  %1304 = vmatpush1.bf16.msra.mxu0 %v941
  %1305 = vmatprep.subr.bf16.mxu0 %v938
  %1306 = vmatpush1.bf16.msra.mxu0 %v937
  %1307 = vmatprep.subr.bf16.mxu0 %v934
  %1308 = vmatpush1.bf16.msra.mxu0 %v933
  %1309 = vmatprep.subr.bf16.mxu0 %v930
  %1310 = vmatpush1.bf16.msra.mxu0 %v929
  %1311 = vmatprep.subr.bf16.mxu0 %v926
  %1312 = vmatpush1.bf16.msra.mxu0 %v925
  %1313 = vmatprep.subr.bf16.mxu0 %v922
  %1314 = vmatpush1.bf16.msra.mxu0 %v921
  %1315 = vmatprep.subr.bf16.mxu0 %v918
  %1316 = vmatpush1.bf16.msra.mxu0 %v917
  %1317 = vmatprep.subr.bf16.mxu0 %v978
  %1318 = vmatpush2.bf16.msra.mxu0 %v977
  %1319 = vmatprep.subr.bf16.mxu0 %v974
  %1320 = vmatpush2.bf16.msra.mxu0 %v973
  %1321 = vmatprep.subr.bf16.mxu0 %v970
  %1322 = vmatpush2.bf16.msra.mxu0 %v969
  %1323 = vmatprep.subr.bf16.mxu0 %v966
  %1324 = vmatpush2.bf16.msra.mxu0 %v965
  %1325 = vmatprep.subr.bf16.mxu0 %v962
  %1326 = vmatpush2.bf16.msra.mxu0 %v961
  %1327 = vmatprep.subr.bf16.mxu0 %v958
  %1328 = vmatpush2.bf16.msra.mxu0 %v957
  %1329 = vmatprep.subr.bf16.mxu0 %v954
  %1330 = vmatpush2.bf16.msra.mxu0 %v953
  %1331 = vmatprep.subr.bf16.mxu0 %v950
  %1332 = vmatpush2.bf16.msra.mxu0 %v949
  %1333 = vmatprep.mubr.bf16.mxu0 %v294
  %1334 = vmatmul.mubr.bf16.gmra.mxu0 %v293
  %v1335 = vpop.f32.mrf.mxu0
  %v1336 = vadd.f32 0.0, %v1335
  %v1337 = vpop.f32.mrf.mxu0
  %v1338 = vadd.f32 0.0, %v1337
  %v1339 = vpop.f32.mrf.mxu0
  %v1340 = vadd.f32 0.0, %v1339
  %v1341 = vpop.f32.mrf.mxu0
  %v1342 = vadd.f32 0.0, %v1341
  %1343 = vmatprep.mubr.bf16.mxu0 %v300
  %1344 = vmatmul.mubr.bf16.gmra.mxu0 %v299
  %v1345 = vpop.f32.mrf.mxu0
  %v1346 = vadd.f32 0.0, %v1345
  %v1347 = vpop.f32.mrf.mxu0
  %v1348 = vadd.f32 0.0, %v1347
  %v1349 = vpop.f32.mrf.mxu0
  %v1350 = vadd.f32 0.0, %v1349
  %v1351 = vpop.f32.mrf.mxu0
  %v1352 = vadd.f32 0.0, %v1351
  %1353 = vmatprep.mubr.bf16.mxu0 %v306
  %1354 = vmatmul.mubr.bf16.gmra.mxu0 %v305
  %v1355 = vpop.f32.mrf.mxu0
  %v1356 = vadd.f32 0.0, %v1355
  %v1357 = vpop.f32.mrf.mxu0
  %v1358 = vadd.f32 0.0, %v1357
  %v1359 = vpop.f32.mrf.mxu0
  %v1360 = vadd.f32 0.0, %v1359
  %v1361 = vpop.f32.mrf.mxu0
  %v1362 = vadd.f32 0.0, %v1361
  %1363 = vmatprep.mubr.bf16.mxu0 %v312
  %1364 = vmatmul.mubr.bf16.gmra.mxu0 %v311
  %v1365 = vpop.f32.mrf.mxu0
  %v1366 = vadd.f32 0.0, %v1365
  %v1367 = vpop.f32.mrf.mxu0
  %v1368 = vadd.f32 0.0, %v1367
  %v1369 = vpop.f32.mrf.mxu0
  %v1370 = vpop.f32.mrf.mxu0
  %1371 = vdwg.mxu0
  %1372 = vmatprep.subr.bf16.mxu0 %v1010
  %1373 = vmatpush1.bf16.msra.mxu0 %v1009
  %1374 = vmatprep.subr.bf16.mxu0 %v1006
  %1375 = vmatpush1.bf16.msra.mxu0 %v1005
  %1376 = vmatprep.subr.bf16.mxu0 %v1002
  %1377 = vmatpush1.bf16.msra.mxu0 %v1001
  %1378 = vmatprep.subr.bf16.mxu0 %v998
  %1379 = vmatpush1.bf16.msra.mxu0 %v997
  %1380 = vmatprep.subr.bf16.mxu0 %v994
  %1381 = vmatpush1.bf16.msra.mxu0 %v993
  %1382 = vmatprep.subr.bf16.mxu0 %v990
  %1383 = vmatpush1.bf16.msra.mxu0 %v989
  %1384 = vmatprep.subr.bf16.mxu0 %v986
  %1385 = vmatpush1.bf16.msra.mxu0 %v985
  %1386 = vmatprep.subr.bf16.mxu0 %v982
  %1387 = vmatpush1.bf16.msra.mxu0 %v981
  %1388 = vmatprep.subr.bf16.mxu0 %v1042
  %1389 = vmatpush2.bf16.msra.mxu0 %v1041
  %1390 = vmatprep.subr.bf16.mxu0 %v1038
  %1391 = vmatpush2.bf16.msra.mxu0 %v1037
  %1392 = vmatprep.subr.bf16.mxu0 %v1034
  %1393 = vmatpush2.bf16.msra.mxu0 %v1033
  %1394 = vmatprep.subr.bf16.mxu0 %v1030
  %1395 = vmatpush2.bf16.msra.mxu0 %v1029
  %1396 = vmatprep.subr.bf16.mxu0 %v1026
  %1397 = vmatpush2.bf16.msra.mxu0 %v1025
  %1398 = vmatprep.subr.bf16.mxu0 %v1022
  %1399 = vmatpush2.bf16.msra.mxu0 %v1021
  %1400 = vmatprep.subr.bf16.mxu0 %v1018
  %1401 = vmatpush2.bf16.msra.mxu0 %v1017
  %1402 = vmatprep.subr.bf16.mxu0 %v1014
  %1403 = vmatpush2.bf16.msra.mxu0 %v1013
  %1404 = vmatprep.mubr.bf16.mxu0 %v296
  %1405 = vmatmul.mubr.bf16.gmra.mxu0 %v295
  %v1406 = vpop.f32.mrf.mxu0
  %v1407 = vadd.f32 %v1336, %v1406
  %v1408 = vpop.f32.mrf.mxu0
  %v1409 = vadd.f32 %v1338, %v1408
  %v1410 = vpop.f32.mrf.mxu0
  %v1411 = vadd.f32 %v1340, %v1410
  %v1412 = vpop.f32.mrf.mxu0
  %v1413 = vadd.f32 %v1342, %v1412
  %1414 = vmatprep.mubr.bf16.mxu0 %v302
  %1415 = vmatmul.mubr.bf16.gmra.mxu0 %v301
  %v1416 = vpop.f32.mrf.mxu0
  %v1417 = vadd.f32 %v1346, %v1416
  %v1418 = vpop.f32.mrf.mxu0
  %v1419 = vadd.f32 %v1348, %v1418
  %v1420 = vpop.f32.mrf.mxu0
  %v1421 = vadd.f32 %v1350, %v1420
  %v1422 = vpop.f32.mrf.mxu0
  %v1423 = vadd.f32 %v1352, %v1422
  %1424 = vmatprep.mubr.bf16.mxu0 %v308
  %1425 = vmatmul.mubr.bf16.gmra.mxu0 %v307
  %v1426 = vpop.f32.mrf.mxu0
  %v1427 = vadd.f32 %v1356, %v1426
  %v1428 = vpop.f32.mrf.mxu0
  %v1429 = vadd.f32 %v1358, %v1428
  %v1430 = vpop.f32.mrf.mxu0
  %v1431 = vadd.f32 %v1360, %v1430
  %v1432 = vpop.f32.mrf.mxu0
  %v1433 = vadd.f32 %v1362, %v1432
  %1434 = vmatprep.mubr.bf16.mxu0 %v314
  %1435 = vmatmul.mubr.bf16.gmra.mxu0 %v313
  %v1436 = vpop.f32.mrf.mxu0
  %v1437 = vadd.f32 %v1366, %v1436
  %v1438 = vpop.f32.mrf.mxu0
  %v1439 = vadd.f32 %v1368, %v1438
  %v1440 = vpop.f32.mrf.mxu0
  %v1441 = vpop.f32.mrf.mxu0
  %1442 = vdwg.mxu0
  %1443 = vmatprep.subr.bf16.mxu0 %v1074
  %1444 = vmatpush1.bf16.msra.mxu0 %v1073
  %1445 = vmatprep.subr.bf16.mxu0 %v1070
  %1446 = vmatpush1.bf16.msra.mxu0 %v1069
  %1447 = vmatprep.subr.bf16.mxu0 %v1066
  %1448 = vmatpush1.bf16.msra.mxu0 %v1065
  %1449 = vmatprep.subr.bf16.mxu0 %v1062
  %1450 = vmatpush1.bf16.msra.mxu0 %v1061
  %1451 = vmatprep.subr.bf16.mxu0 %v1058
  %1452 = vmatpush1.bf16.msra.mxu0 %v1057
  %1453 = vmatprep.subr.bf16.mxu0 %v1054
  %1454 = vmatpush1.bf16.msra.mxu0 %v1053
  %1455 = vmatprep.subr.bf16.mxu0 %v1050
  %1456 = vmatpush1.bf16.msra.mxu0 %v1049
  %1457 = vmatprep.subr.bf16.mxu0 %v1046
  %1458 = vmatpush1.bf16.msra.mxu0 %v1045
  %1459 = vmatprep.subr.bf16.mxu0 %v1106
  %1460 = vmatpush2.bf16.msra.mxu0 %v1105
  %1461 = vmatprep.subr.bf16.mxu0 %v1102
  %1462 = vmatpush2.bf16.msra.mxu0 %v1101
  %1463 = vmatprep.subr.bf16.mxu0 %v1098
  %1464 = vmatpush2.bf16.msra.mxu0 %v1097
  %1465 = vmatprep.subr.bf16.mxu0 %v1094
  %1466 = vmatpush2.bf16.msra.mxu0 %v1093
  %1467 = vmatprep.subr.bf16.mxu0 %v1090
  %1468 = vmatpush2.bf16.msra.mxu0 %v1089
  %1469 = vmatprep.subr.bf16.mxu0 %v1086
  %1470 = vmatpush2.bf16.msra.mxu0 %v1085
  %1471 = vmatprep.subr.bf16.mxu0 %v1082
  %1472 = vmatpush2.bf16.msra.mxu0 %v1081
  %1473 = vmatprep.subr.bf16.mxu0 %v1078
  %1474 = vmatpush2.bf16.msra.mxu0 %v1077
  %1475 = vmatprep.mubr.bf16.mxu0 %v298
  %1476 = vmatmul.mubr.bf16.gmra.mxu0 %v297
  %v1477 = vpop.f32.mrf.mxu0
  %v1478 = vadd.f32 %v1407, %v1477
  %v1479 = vpop.f32.mrf.mxu0
  %v1480 = vadd.f32 %v1409, %v1479
  %v1481 = vpop.f32.mrf.mxu0
  %v1482 = vadd.f32 %v1411, %v1481
  %v1483 = vpop.f32.mrf.mxu0
  %v1484 = vadd.f32 %v1413, %v1483
  %1485 = vmatprep.mubr.bf16.mxu0 %v304
  %1486 = vmatmul.mubr.bf16.gmra.mxu0 %v303
  %v1487 = vpop.f32.mrf.mxu0
  %v1488 = vadd.f32 %v1417, %v1487
  %v1489 = vpop.f32.mrf.mxu0
  %v1490 = vadd.f32 %v1419, %v1489
  %v1491 = vpop.f32.mrf.mxu0
  %v1492 = vadd.f32 %v1421, %v1491
  %v1493 = vpop.f32.mrf.mxu0
  %v1494 = vadd.f32 %v1423, %v1493
  %1495 = vmatprep.mubr.bf16.mxu0 %v310
  %1496 = vmatmul.mubr.bf16.gmra.mxu0 %v309
  %v1497 = vpop.f32.mrf.mxu0
  %v1498 = vadd.f32 %v1427, %v1497
  %v1499 = vpop.f32.mrf.mxu0
  %v1500 = vadd.f32 %v1429, %v1499
  %v1501 = vpop.f32.mrf.mxu0
  %v1502 = vadd.f32 %v1431, %v1501
  %v1503 = vpop.f32.mrf.mxu0
  %v1504 = vadd.f32 %v1433, %v1503
  %1505 = vmatprep.mubr.bf16.mxu0 %v316
  %1506 = vmatmul.mubr.bf16.gmra.mxu0 %v315
  %v1507 = vpop.f32.mrf.mxu0
  %v1508 = vadd.f32 %v1437, %v1507
  %v1509 = vpop.f32.mrf.mxu0
  %v1510 = vadd.f32 %v1439, %v1509
  %v1511 = vpop.f32.mrf.mxu0
  %v1512 = vpop.f32.mrf.mxu0
  %1513 = vdwg.mxu0
  %1514 = vmatprep.subr.bf16.mxu0 %v948
  %1515 = vmatpush1.bf16.msra.mxu0 %v947
  %1516 = vmatprep.subr.bf16.mxu0 %v944
  %1517 = vmatpush1.bf16.msra.mxu0 %v943
  %1518 = vmatprep.subr.bf16.mxu0 %v940
  %1519 = vmatpush1.bf16.msra.mxu0 %v939
  %1520 = vmatprep.subr.bf16.mxu0 %v936
  %1521 = vmatpush1.bf16.msra.mxu0 %v935
  %1522 = vmatprep.subr.bf16.mxu0 %v932
  %1523 = vmatpush1.bf16.msra.mxu0 %v931
  %1524 = vmatprep.subr.bf16.mxu0 %v928
  %1525 = vmatpush1.bf16.msra.mxu0 %v927
  %1526 = vmatprep.subr.bf16.mxu0 %v924
  %1527 = vmatpush1.bf16.msra.mxu0 %v923
  %1528 = vmatprep.subr.bf16.mxu0 %v920
  %1529 = vmatpush1.bf16.msra.mxu0 %v919
  %1530 = vmatprep.subr.bf16.mxu0 %v980
  %1531 = vmatpush2.bf16.msra.mxu0 %v979
  %1532 = vmatprep.subr.bf16.mxu0 %v976
  %1533 = vmatpush2.bf16.msra.mxu0 %v975
  %1534 = vmatprep.subr.bf16.mxu0 %v972
  %1535 = vmatpush2.bf16.msra.mxu0 %v971
  %1536 = vmatprep.subr.bf16.mxu0 %v968
  %1537 = vmatpush2.bf16.msra.mxu0 %v967
  %1538 = vmatprep.subr.bf16.mxu0 %v964
  %1539 = vmatpush2.bf16.msra.mxu0 %v963
  %1540 = vmatprep.subr.bf16.mxu0 %v960
  %1541 = vmatpush2.bf16.msra.mxu0 %v959
  %1542 = vmatprep.subr.bf16.mxu0 %v956
  %1543 = vmatpush2.bf16.msra.mxu0 %v955
  %1544 = vmatprep.subr.bf16.mxu0 %v952
  %1545 = vmatpush2.bf16.msra.mxu0 %v951
  %1546 = vmatprep.mubr.bf16.mxu0 %v294
  %1547 = vmatmul.mubr.bf16.gmra.mxu0 %v293
  %v1548 = vpop.f32.mrf.mxu0
  %v1549 = vadd.f32 0.0, %v1548
  %v1550 = vpop.f32.mrf.mxu0
  %v1551 = vadd.f32 0.0, %v1550
  %v1552 = vpop.f32.mrf.mxu0
  %v1553 = vadd.f32 0.0, %v1552
  %v1554 = vpop.f32.mrf.mxu0
  %v1555 = vadd.f32 0.0, %v1554
  %1556 = vmatprep.mubr.bf16.mxu0 %v300
  %1557 = vmatmul.mubr.bf16.gmra.mxu0 %v299
  %v1558 = vpop.f32.mrf.mxu0
  %v1559 = vadd.f32 0.0, %v1558
  %v1560 = vpop.f32.mrf.mxu0
  %v1561 = vadd.f32 0.0, %v1560
  %v1562 = vpop.f32.mrf.mxu0
  %v1563 = vadd.f32 0.0, %v1562
  %v1564 = vpop.f32.mrf.mxu0
  %v1565 = vadd.f32 0.0, %v1564
  %1566 = vmatprep.mubr.bf16.mxu0 %v306
  %1567 = vmatmul.mubr.bf16.gmra.mxu0 %v305
  %v1568 = vpop.f32.mrf.mxu0
  %v1569 = vadd.f32 0.0, %v1568
  %v1570 = vpop.f32.mrf.mxu0
  %v1571 = vadd.f32 0.0, %v1570
  %v1572 = vpop.f32.mrf.mxu0
  %v1573 = vadd.f32 0.0, %v1572
  %v1574 = vpop.f32.mrf.mxu0
  %v1575 = vadd.f32 0.0, %v1574
  %1576 = vmatprep.mubr.bf16.mxu0 %v312
  %1577 = vmatmul.mubr.bf16.gmra.mxu0 %v311
  %v1578 = vpop.f32.mrf.mxu0
  %v1579 = vadd.f32 0.0, %v1578
  %v1580 = vpop.f32.mrf.mxu0
  %v1581 = vadd.f32 0.0, %v1580
  %v1582 = vpop.f32.mrf.mxu0
  %v1583 = vpop.f32.mrf.mxu0
  %1584 = vdwg.mxu0
  %1585 = vmatprep.subr.bf16.mxu0 %v1012
  %1586 = vmatpush1.bf16.msra.mxu0 %v1011
  %1587 = vmatprep.subr.bf16.mxu0 %v1008
  %1588 = vmatpush1.bf16.msra.mxu0 %v1007
  %1589 = vmatprep.subr.bf16.mxu0 %v1004
  %1590 = vmatpush1.bf16.msra.mxu0 %v1003
  %1591 = vmatprep.subr.bf16.mxu0 %v1000
  %1592 = vmatpush1.bf16.msra.mxu0 %v999
  %1593 = vmatprep.subr.bf16.mxu0 %v996
  %1594 = vmatpush1.bf16.msra.mxu0 %v995
  %1595 = vmatprep.subr.bf16.mxu0 %v992
  %1596 = vmatpush1.bf16.msra.mxu0 %v991
  %1597 = vmatprep.subr.bf16.mxu0 %v988
  %1598 = vmatpush1.bf16.msra.mxu0 %v987
  %1599 = vmatprep.subr.bf16.mxu0 %v984
  %1600 = vmatpush1.bf16.msra.mxu0 %v983
  %1601 = vmatprep.subr.bf16.mxu0 %v1044
  %1602 = vmatpush2.bf16.msra.mxu0 %v1043
  %1603 = vmatprep.subr.bf16.mxu0 %v1040
  %1604 = vmatpush2.bf16.msra.mxu0 %v1039
  %1605 = vmatprep.subr.bf16.mxu0 %v1036
  %1606 = vmatpush2.bf16.msra.mxu0 %v1035
  %1607 = vmatprep.subr.bf16.mxu0 %v1032
  %1608 = vmatpush2.bf16.msra.mxu0 %v1031
  %1609 = vmatprep.subr.bf16.mxu0 %v1028
  %1610 = vmatpush2.bf16.msra.mxu0 %v1027
  %1611 = vmatprep.subr.bf16.mxu0 %v1024
  %1612 = vmatpush2.bf16.msra.mxu0 %v1023
  %1613 = vmatprep.subr.bf16.mxu0 %v1020
  %1614 = vmatpush2.bf16.msra.mxu0 %v1019
  %1615 = vmatprep.subr.bf16.mxu0 %v1016
  %1616 = vmatpush2.bf16.msra.mxu0 %v1015
  %1617 = vmatprep.mubr.bf16.mxu0 %v296
  %1618 = vmatmul.mubr.bf16.gmra.mxu0 %v295
  %v1619 = vpop.f32.mrf.mxu0
  %v1620 = vadd.f32 %v1549, %v1619
  %v1621 = vpop.f32.mrf.mxu0
  %v1622 = vadd.f32 %v1551, %v1621
  %v1623 = vpop.f32.mrf.mxu0
  %v1624 = vadd.f32 %v1553, %v1623
  %v1625 = vpop.f32.mrf.mxu0
  %v1626 = vadd.f32 %v1555, %v1625
  %1627 = vmatprep.mubr.bf16.mxu0 %v302
  %1628 = vmatmul.mubr.bf16.gmra.mxu0 %v301
  %v1629 = vpop.f32.mrf.mxu0
  %v1630 = vadd.f32 %v1559, %v1629
  %v1631 = vpop.f32.mrf.mxu0
  %v1632 = vadd.f32 %v1561, %v1631
  %v1633 = vpop.f32.mrf.mxu0
  %v1634 = vadd.f32 %v1563, %v1633
  %v1635 = vpop.f32.mrf.mxu0
  %v1636 = vadd.f32 %v1565, %v1635
  %1637 = vmatprep.mubr.bf16.mxu0 %v308
  %1638 = vmatmul.mubr.bf16.gmra.mxu0 %v307
  %v1639 = vpop.f32.mrf.mxu0
  %v1640 = vadd.f32 %v1569, %v1639
  %v1641 = vpop.f32.mrf.mxu0
  %v1642 = vadd.f32 %v1571, %v1641
  %v1643 = vpop.f32.mrf.mxu0
  %v1644 = vadd.f32 %v1573, %v1643
  %v1645 = vpop.f32.mrf.mxu0
  %v1646 = vadd.f32 %v1575, %v1645
  %1647 = vmatprep.mubr.bf16.mxu0 %v314
  %1648 = vmatmul.mubr.bf16.gmra.mxu0 %v313
  %v1649 = vpop.f32.mrf.mxu0
  %v1650 = vadd.f32 %v1579, %v1649
  %v1651 = vpop.f32.mrf.mxu0
  %v1652 = vadd.f32 %v1581, %v1651
  %v1653 = vpop.f32.mrf.mxu0
  %v1654 = vpop.f32.mrf.mxu0
  %1655 = vdwg.mxu0
  %1656 = vmatprep.subr.bf16.mxu0 %v1076
  %1657 = vmatpush1.bf16.msra.mxu0 %v1075
  %1658 = vmatprep.subr.bf16.mxu0 %v1072
  %1659 = vmatpush1.bf16.msra.mxu0 %v1071
  %1660 = vmatprep.subr.bf16.mxu0 %v1068
  %1661 = vmatpush1.bf16.msra.mxu0 %v1067
  %1662 = vmatprep.subr.bf16.mxu0 %v1064
  %1663 = vmatpush1.bf16.msra.mxu0 %v1063
  %1664 = vmatprep.subr.bf16.mxu0 %v1060
  %1665 = vmatpush1.bf16.msra.mxu0 %v1059
  %1666 = vmatprep.subr.bf16.mxu0 %v1056
  %1667 = vmatpush1.bf16.msra.mxu0 %v1055
  %1668 = vmatprep.subr.bf16.mxu0 %v1052
  %1669 = vmatpush1.bf16.msra.mxu0 %v1051
  %1670 = vmatprep.subr.bf16.mxu0 %v1048
  %1671 = vmatpush1.bf16.msra.mxu0 %v1047
  %1672 = vmatprep.subr.bf16.mxu0 %v1108
  %1673 = vmatpush2.bf16.msra.mxu0 %v1107
  %1674 = vmatprep.subr.bf16.mxu0 %v1104
  %1675 = vmatpush2.bf16.msra.mxu0 %v1103
  %1676 = vmatprep.subr.bf16.mxu0 %v1100
  %1677 = vmatpush2.bf16.msra.mxu0 %v1099
  %1678 = vmatprep.subr.bf16.mxu0 %v1096
  %1679 = vmatpush2.bf16.msra.mxu0 %v1095
  %1680 = vmatprep.subr.bf16.mxu0 %v1092
  %1681 = vmatpush2.bf16.msra.mxu0 %v1091
  %1682 = vmatprep.subr.bf16.mxu0 %v1088
  %1683 = vmatpush2.bf16.msra.mxu0 %v1087
  %1684 = vmatprep.subr.bf16.mxu0 %v1084
  %1685 = vmatpush2.bf16.msra.mxu0 %v1083
  %1686 = vmatprep.subr.bf16.mxu0 %v1080
  %1687 = vmatpush2.bf16.msra.mxu0 %v1079
  %1688 = vmatprep.mubr.bf16.mxu0 %v298
  %1689 = vmatmul.mubr.bf16.gmra.mxu0 %v297
  %v1690 = vpop.f32.mrf.mxu0
  %v1691 = vadd.f32 %v1620, %v1690
  %v1692 = vpop.f32.mrf.mxu0
  %v1693 = vadd.f32 %v1622, %v1692
  %v1694 = vpop.f32.mrf.mxu0
  %v1695 = vadd.f32 %v1624, %v1694
  %v1696 = vpop.f32.mrf.mxu0
  %v1697 = vadd.f32 %v1626, %v1696
  %1698 = vmatprep.mubr.bf16.mxu0 %v304
  %1699 = vmatmul.mubr.bf16.gmra.mxu0 %v303
  %v1700 = vpop.f32.mrf.mxu0
  %v1701 = vadd.f32 %v1630, %v1700
  %v1702 = vpop.f32.mrf.mxu0
  %v1703 = vadd.f32 %v1632, %v1702
  %v1704 = vpop.f32.mrf.mxu0
  %v1705 = vadd.f32 %v1634, %v1704
  %v1706 = vpop.f32.mrf.mxu0
  %v1707 = vadd.f32 %v1636, %v1706
  %1708 = vmatprep.mubr.bf16.mxu0 %v310
  %1709 = vmatmul.mubr.bf16.gmra.mxu0 %v309
  %v1710 = vpop.f32.mrf.mxu0
  %v1711 = vadd.f32 %v1640, %v1710
  %v1712 = vpop.f32.mrf.mxu0
  %v1713 = vadd.f32 %v1642, %v1712
  %v1714 = vpop.f32.mrf.mxu0
  %v1715 = vadd.f32 %v1644, %v1714
  %v1716 = vpop.f32.mrf.mxu0
  %v1717 = vadd.f32 %v1646, %v1716
  %1718 = vmatprep.mubr.bf16.mxu0 %v316
  %1719 = vmatmul.mubr.bf16.gmra.mxu0 %v315
  %v1720 = vpop.f32.mrf.mxu0
  %v1721 = vadd.f32 %v1650, %v1720
  %v1722 = vpop.f32.mrf.mxu0
  %v1723 = vadd.f32 %v1652, %v1722
  %v1724 = vpop.f32.mrf.mxu0
  %v1725 = vpop.f32.mrf.mxu0
  %1726 = vdwg.mxu0
  %v1727 = vld [vmem:[%s1] sm:$0xff]
  %v1728 = vld [vmem:[%s1 + $0x8] sm:$0xff]
  %v1729 = vld [vmem:[%s1 + $0x10] sm:$0xff]
  %v1730 = vld [vmem:[%s1 + $0x18] sm:$0xff]
  %v1731 = vld [vmem:[%s1 + $0x20] sm:$0xff]
  %v1732 = vld [vmem:[%s1 + $0x28] sm:$0xff]
  %v1733 = vld [vmem:[%s1 + $0x30] sm:$0xff]
  %v1734 = vld [vmem:[%s1 + $0x38] sm:$0xff]
  %v1735 = vld [vmem:[%s1 + $0x40] sm:$0xff]
  %v1736 = vld [vmem:[%s1 + $0x48] sm:$0xff]
  %v1737 = vld [vmem:[%s1 + $0x50] sm:$0xff]
  %v1738 = vld [vmem:[%s1 + $0x58] sm:$0xff]
  %v1739 = vld [vmem:[%s1 + $0x60] sm:$0xff]
  %v1740 = vld [vmem:[%s1 + $0x68] sm:$0xff]
  %v1741 = vld [vmem:[%s1 + $0x70] sm:$0xff]
  %v1742 = vld [vmem:[%s1 + $0x78] sm:$0xff]
  %v1743 = vld [vmem:[%s1 + $0x80] sm:$0xff]
  %v1744 = vld [vmem:[%s1 + $0x88] sm:$0xff]
  %v1745 = vld [vmem:[%s1 + $0x90] sm:$0xff]
  %v1746 = vld [vmem:[%s1 + $0x98] sm:$0xff]
  %v1747 = vld [vmem:[%s1 + $0xa0] sm:$0xff]
  %v1769 = vunpack.c.l.b16 %v1727
  %v1770 = vunpack.c.h.b16 %v1727
  %v1771 = vunpack.c.l.b16 %v1728
  %v1772 = vunpack.c.h.b16 %v1728
  %v1773 = vunpack.c.l.b16 %v1729
  %v1774 = vunpack.c.h.b16 %v1729
  %v1775 = vunpack.c.l.b16 %v1730
  %v1776 = vunpack.c.h.b16 %v1730
  %v1777 = vunpack.c.l.b16 %v1731
  %v1778 = vunpack.c.h.b16 %v1731
  %v1779 = vunpack.c.l.b16 %v1732
  %v1780 = vunpack.c.h.b16 %v1732
  %v1781 = vunpack.c.l.b16 %v1733
  %v1782 = vunpack.c.h.b16 %v1733
  %v1783 = vunpack.c.l.b16 %v1734
  %v1784 = vunpack.c.h.b16 %v1734
  %v1785 = vunpack.c.l.b16 %v1735
  %v1786 = vunpack.c.h.b16 %v1735
  %v1787 = vunpack.c.l.b16 %v1736
  %v1788 = vunpack.c.h.b16 %v1736
  %v1789 = vunpack.c.l.b16 %v1737
  %v1790 = vunpack.c.h.b16 %v1737
  %v1791 = vunpack.c.l.b16 %v1738
  %v1792 = vunpack.c.h.b16 %v1738
  %v1793 = vunpack.c.l.b16 %v1739
  %v1794 = vunpack.c.h.b16 %v1739
  %v1795 = vunpack.c.l.b16 %v1740
  %v1796 = vunpack.c.h.b16 %v1740
  %v1797 = vunpack.c.l.b16 %v1741
  %v1798 = vunpack.c.h.b16 %v1741
  %v1799 = vunpack.c.l.b16 %v1742
  %v1800 = vunpack.c.h.b16 %v1742
  %v1801 = vunpack.c.l.b16 %v1743
  %v1802 = vunpack.c.h.b16 %v1743
  %v1803 = vunpack.c.l.b16 %v1744
  %v1804 = vunpack.c.h.b16 %v1744
  %v1805 = vunpack.c.l.b16 %v1745
  %v1806 = vunpack.c.h.b16 %v1745
  %v1807 = vunpack.c.l.b16 %v1746
  %v1808 = vunpack.c.h.b16 %v1746
  %v1809 = vunpack.c.l.b16 %v1747
  %v1810 = vunpack.c.h.b16 %v1747
  %v1811 = vpack.c.b16 %v1775, %v1769
  %v1812 = vpack.c.b16 %v1776, %v1770
  %v1813 = vpack.c.b16 %v1777, %v1771
  %v1814 = vpack.c.b16 %v1778, %v1772
  %v1815 = vpack.c.b16 %v1779, %v1773
  %v1816 = vpack.c.b16 %v1780, %v1774
  %v1817 = vpack.c.b16 %v1787, %v1781
  %v1818 = vpack.c.b16 %v1788, %v1782
  %v1819 = vpack.c.b16 %v1789, %v1783
  %v1820 = vpack.c.b16 %v1790, %v1784
  %v1821 = vpack.c.b16 %v1791, %v1785
  %v1822 = vpack.c.b16 %v1792, %v1786
  %v1823 = vpack.c.b16 %v1799, %v1793
  %v1824 = vpack.c.b16 %v1800, %v1794
  %v1825 = vpack.c.b16 %v1801, %v1795
  %v1826 = vpack.c.b16 %v1802, %v1796
  %v1827 = vpack.c.b16 %v1803, %v1797
  %v1828 = vpack.c.b16 %v1804, %v1798
  %v1829 = vpack.c.b16 %v1805, %v1805
  %v1830 = vpack.c.b16 %v1806, %v1806
  %v1831 = vpack.c.b16 %v1807, %v1807
  %v1832 = vpack.c.b16 %v1808, %v1808
  %v1833 = vpack.c.b16 %v1809, %v1809
  %v1834 = vpack.c.b16 %v1810, %v1810
  %1859 = vmatprep.subr.bf16.mxu0 %v946
  %1860 = vmatpush1.bf16.msra.mxu0 %v945
  %1861 = vmatprep.subr.bf16.mxu0 %v942
  %1862 = vmatpush1.bf16.msra.mxu0 %v941
  %1863 = vmatprep.subr.bf16.mxu0 %v938
  %1864 = vmatpush1.bf16.msra.mxu0 %v937
  %1865 = vmatprep.subr.bf16.mxu0 %v934
  %1866 = vmatpush1.bf16.msra.mxu0 %v933
  %1867 = vmatprep.subr.bf16.mxu0 %v930
  %1868 = vmatpush1.bf16.msra.mxu0 %v929
  %1869 = vmatprep.subr.bf16.mxu0 %v926
  %1870 = vmatpush1.bf16.msra.mxu0 %v925
  %1871 = vmatprep.subr.bf16.mxu0 %v922
  %1872 = vmatpush1.bf16.msra.mxu0 %v921
  %1873 = vmatprep.subr.bf16.mxu0 %v918
  %1874 = vmatpush1.bf16.msra.mxu0 %v917
  %1875 = vmatprep.subr.bf16.mxu0 %v978
  %1876 = vmatpush2.bf16.msra.mxu0 %v977
  %1877 = vmatprep.subr.bf16.mxu0 %v974
  %1878 = vmatpush2.bf16.msra.mxu0 %v973
  %1879 = vmatprep.subr.bf16.mxu0 %v970
  %1880 = vmatpush2.bf16.msra.mxu0 %v969
  %1881 = vmatprep.subr.bf16.mxu0 %v966
  %1882 = vmatpush2.bf16.msra.mxu0 %v965
  %1883 = vmatprep.subr.bf16.mxu0 %v962
  %1884 = vmatpush2.bf16.msra.mxu0 %v961
  %1885 = vmatprep.subr.bf16.mxu0 %v958
  %1886 = vmatpush2.bf16.msra.mxu0 %v957
  %1887 = vmatprep.subr.bf16.mxu0 %v954
  %1888 = vmatpush2.bf16.msra.mxu0 %v953
  %1889 = vmatprep.subr.bf16.mxu0 %v950
  %1890 = vmatpush2.bf16.msra.mxu0 %v949
  %1891 = vmatprep.mubr.bf16.mxu0 %v1812
  %1892 = vmatmul.mubr.bf16.gmra.mxu0 %v1811
  %v1893 = vpop.f32.mrf.mxu0
  %v1894 = vadd.f32 0.0, %v1893
  %v1895 = vpop.f32.mrf.mxu0
  %v1896 = vadd.f32 0.0, %v1895
  %v1897 = vpop.f32.mrf.mxu0
  %v1898 = vadd.f32 0.0, %v1897
  %v1899 = vpop.f32.mrf.mxu0
  %v1900 = vadd.f32 0.0, %v1899
  %1901 = vmatprep.mubr.bf16.mxu0 %v1818
  %1902 = vmatmul.mubr.bf16.gmra.mxu0 %v1817
  %v1903 = vpop.f32.mrf.mxu0
  %v1904 = vadd.f32 0.0, %v1903
  %v1905 = vpop.f32.mrf.mxu0
  %v1906 = vadd.f32 0.0, %v1905
  %v1907 = vpop.f32.mrf.mxu0
  %v1908 = vadd.f32 0.0, %v1907
  %v1909 = vpop.f32.mrf.mxu0
  %v1910 = vadd.f32 0.0, %v1909
  %1911 = vmatprep.mubr.bf16.mxu0 %v1824
  %1912 = vmatmul.mubr.bf16.gmra.mxu0 %v1823
  %v1913 = vpop.f32.mrf.mxu0
  %v1914 = vadd.f32 0.0, %v1913
  %v1915 = vpop.f32.mrf.mxu0
  %v1916 = vadd.f32 0.0, %v1915
  %v1917 = vpop.f32.mrf.mxu0
  %v1918 = vadd.f32 0.0, %v1917
  %v1919 = vpop.f32.mrf.mxu0
  %v1920 = vadd.f32 0.0, %v1919
  %1921 = vmatprep.mubr.bf16.mxu0 %v1830
  %1922 = vmatmul.mubr.bf16.gmra.mxu0 %v1829
  %v1923 = vpop.f32.mrf.mxu0
  %v1924 = vadd.f32 0.0, %v1923
  %v1925 = vpop.f32.mrf.mxu0
  %v1926 = vadd.f32 0.0, %v1925
  %v1927 = vpop.f32.mrf.mxu0
  %v1928 = vpop.f32.mrf.mxu0
  %1929 = vdwg.mxu0
  %1930 = vmatprep.subr.bf16.mxu0 %v1010
  %1931 = vmatpush1.bf16.msra.mxu0 %v1009
  %1932 = vmatprep.subr.bf16.mxu0 %v1006
  %1933 = vmatpush1.bf16.msra.mxu0 %v1005
  %1934 = vmatprep.subr.bf16.mxu0 %v1002
  %1935 = vmatpush1.bf16.msra.mxu0 %v1001
  %1936 = vmatprep.subr.bf16.mxu0 %v998
  %1937 = vmatpush1.bf16.msra.mxu0 %v997
  %1938 = vmatprep.subr.bf16.mxu0 %v994
  %1939 = vmatpush1.bf16.msra.mxu0 %v993
  %1940 = vmatprep.subr.bf16.mxu0 %v990
  %1941 = vmatpush1.bf16.msra.mxu0 %v989
  %1942 = vmatprep.subr.bf16.mxu0 %v986
  %1943 = vmatpush1.bf16.msra.mxu0 %v985
  %1944 = vmatprep.subr.bf16.mxu0 %v982
  %1945 = vmatpush1.bf16.msra.mxu0 %v981
  %1946 = vmatprep.subr.bf16.mxu0 %v1042
  %1947 = vmatpush2.bf16.msra.mxu0 %v1041
  %1948 = vmatprep.subr.bf16.mxu0 %v1038
  %1949 = vmatpush2.bf16.msra.mxu0 %v1037
  %1950 = vmatprep.subr.bf16.mxu0 %v1034
  %1951 = vmatpush2.bf16.msra.mxu0 %v1033
  %1952 = vmatprep.subr.bf16.mxu0 %v1030
  %1953 = vmatpush2.bf16.msra.mxu0 %v1029
  %1954 = vmatprep.subr.bf16.mxu0 %v1026
  %1955 = vmatpush2.bf16.msra.mxu0 %v1025
  %1956 = vmatprep.subr.bf16.mxu0 %v1022
  %1957 = vmatpush2.bf16.msra.mxu0 %v1021
  %1958 = vmatprep.subr.bf16.mxu0 %v1018
  %1959 = vmatpush2.bf16.msra.mxu0 %v1017
  %1960 = vmatprep.subr.bf16.mxu0 %v1014
  %1961 = vmatpush2.bf16.msra.mxu0 %v1013
  %1962 = vmatprep.mubr.bf16.mxu0 %v1814
  %1963 = vmatmul.mubr.bf16.gmra.mxu0 %v1813
  %v1964 = vpop.f32.mrf.mxu0
  %v1965 = vadd.f32 %v1894, %v1964
  %v1966 = vpop.f32.mrf.mxu0
  %v1967 = vadd.f32 %v1896, %v1966
  %v1968 = vpop.f32.mrf.mxu0
  %v1969 = vadd.f32 %v1898, %v1968
  %v1970 = vpop.f32.mrf.mxu0
  %v1971 = vadd.f32 %v1900, %v1970
  %1972 = vmatprep.mubr.bf16.mxu0 %v1820
  %1973 = vmatmul.mubr.bf16.gmra.mxu0 %v1819
  %v1974 = vpop.f32.mrf.mxu0
  %v1975 = vadd.f32 %v1904, %v1974
  %v1976 = vpop.f32.mrf.mxu0
  %v1977 = vadd.f32 %v1906, %v1976
  %v1978 = vpop.f32.mrf.mxu0
  %v1979 = vadd.f32 %v1908, %v1978
  %v1980 = vpop.f32.mrf.mxu0
  %v1981 = vadd.f32 %v1910, %v1980
  %1982 = vmatprep.mubr.bf16.mxu0 %v1826
  %1983 = vmatmul.mubr.bf16.gmra.mxu0 %v1825
  %v1984 = vpop.f32.mrf.mxu0
  %v1985 = vadd.f32 %v1914, %v1984
  %v1986 = vpop.f32.mrf.mxu0
  %v1987 = vadd.f32 %v1916, %v1986
  %v1988 = vpop.f32.mrf.mxu0
  %v1989 = vadd.f32 %v1918, %v1988
  %v1990 = vpop.f32.mrf.mxu0
  %v1991 = vadd.f32 %v1920, %v1990
  %1992 = vmatprep.mubr.bf16.mxu0 %v1832
  %1993 = vmatmul.mubr.bf16.gmra.mxu0 %v1831
  %v1994 = vpop.f32.mrf.mxu0
  %v1995 = vadd.f32 %v1924, %v1994
  %v1996 = vpop.f32.mrf.mxu0
  %v1997 = vadd.f32 %v1926, %v1996
  %v1998 = vpop.f32.mrf.mxu0
  %v1999 = vpop.f32.mrf.mxu0
  %2000 = vdwg.mxu0
  %2001 = vmatprep.subr.bf16.mxu0 %v1074
  %2002 = vmatpush1.bf16.msra.mxu0 %v1073
  %2003 = vmatprep.subr.bf16.mxu0 %v1070
  %2004 = vmatpush1.bf16.msra.mxu0 %v1069
  %2005 = vmatprep.subr.bf16.mxu0 %v1066
  %2006 = vmatpush1.bf16.msra.mxu0 %v1065
  %2007 = vmatprep.subr.bf16.mxu0 %v1062
  %2008 = vmatpush1.bf16.msra.mxu0 %v1061
  %2009 = vmatprep.subr.bf16.mxu0 %v1058
  %2010 = vmatpush1.bf16.msra.mxu0 %v1057
  %2011 = vmatprep.subr.bf16.mxu0 %v1054
  %2012 = vmatpush1.bf16.msra.mxu0 %v1053
  %2013 = vmatprep.subr.bf16.mxu0 %v1050
  %2014 = vmatpush1.bf16.msra.mxu0 %v1049
  %2015 = vmatprep.subr.bf16.mxu0 %v1046
  %2016 = vmatpush1.bf16.msra.mxu0 %v1045
  %2017 = vmatprep.subr.bf16.mxu0 %v1106
  %2018 = vmatpush2.bf16.msra.mxu0 %v1105
  %2019 = vmatprep.subr.bf16.mxu0 %v1102
  %2020 = vmatpush2.bf16.msra.mxu0 %v1101
  %2021 = vmatprep.subr.bf16.mxu0 %v1098
  %2022 = vmatpush2.bf16.msra.mxu0 %v1097
  %2023 = vmatprep.subr.bf16.mxu0 %v1094
  %2024 = vmatpush2.bf16.msra.mxu0 %v1093
  %2025 = vmatprep.subr.bf16.mxu0 %v1090
  %2026 = vmatpush2.bf16.msra.mxu0 %v1089
  %2027 = vmatprep.subr.bf16.mxu0 %v1086
  %2028 = vmatpush2.bf16.msra.mxu0 %v1085
  %2029 = vmatprep.subr.bf16.mxu0 %v1082
  %2030 = vmatpush2.bf16.msra.mxu0 %v1081
  %2031 = vmatprep.subr.bf16.mxu0 %v1078
  %2032 = vmatpush2.bf16.msra.mxu0 %v1077
  %2033 = vmatprep.mubr.bf16.mxu0 %v1816
  %2034 = vmatmul.mubr.bf16.gmra.mxu0 %v1815
  %v2035 = vpop.f32.mrf.mxu0
  %v2036 = vadd.f32 %v1965, %v2035
  %v2037 = vpop.f32.mrf.mxu0
  %v2038 = vadd.f32 %v1967, %v2037
  %v2039 = vpop.f32.mrf.mxu0
  %v2040 = vadd.f32 %v1969, %v2039
  %v2041 = vpop.f32.mrf.mxu0
  %v2042 = vadd.f32 %v1971, %v2041
  %2043 = vmatprep.mubr.bf16.mxu0 %v1822
  %2044 = vmatmul.mubr.bf16.gmra.mxu0 %v1821
  %v2045 = vpop.f32.mrf.mxu0
  %v2046 = vadd.f32 %v1975, %v2045
  %v2047 = vpop.f32.mrf.mxu0
  %v2048 = vadd.f32 %v1977, %v2047
  %v2049 = vpop.f32.mrf.mxu0
  %v2050 = vadd.f32 %v1979, %v2049
  %v2051 = vpop.f32.mrf.mxu0
  %v2052 = vadd.f32 %v1981, %v2051
  %2053 = vmatprep.mubr.bf16.mxu0 %v1828
  %2054 = vmatmul.mubr.bf16.gmra.mxu0 %v1827
  %v2055 = vpop.f32.mrf.mxu0
  %v2056 = vadd.f32 %v1985, %v2055
  %v2057 = vpop.f32.mrf.mxu0
  %v2058 = vadd.f32 %v1987, %v2057
  %v2059 = vpop.f32.mrf.mxu0
  %v2060 = vadd.f32 %v1989, %v2059
  %v2061 = vpop.f32.mrf.mxu0
  %v2062 = vadd.f32 %v1991, %v2061
  %2063 = vmatprep.mubr.bf16.mxu0 %v1834
  %2064 = vmatmul.mubr.bf16.gmra.mxu0 %v1833
  %v2065 = vpop.f32.mrf.mxu0
  %v2066 = vadd.f32 %v1995, %v2065
  %v2067 = vpop.f32.mrf.mxu0
  %v2068 = vadd.f32 %v1997, %v2067
  %v2069 = vpop.f32.mrf.mxu0
  %v2070 = vpop.f32.mrf.mxu0
  %2071 = vdwg.mxu0
  %2072 = vmatprep.subr.bf16.mxu0 %v948
  %2073 = vmatpush1.bf16.msra.mxu0 %v947
  %2074 = vmatprep.subr.bf16.mxu0 %v944
  %2075 = vmatpush1.bf16.msra.mxu0 %v943
  %2076 = vmatprep.subr.bf16.mxu0 %v940
  %2077 = vmatpush1.bf16.msra.mxu0 %v939
  %2078 = vmatprep.subr.bf16.mxu0 %v936
  %2079 = vmatpush1.bf16.msra.mxu0 %v935
  %2080 = vmatprep.subr.bf16.mxu0 %v932
  %2081 = vmatpush1.bf16.msra.mxu0 %v931
  %2082 = vmatprep.subr.bf16.mxu0 %v928
  %2083 = vmatpush1.bf16.msra.mxu0 %v927
  %2084 = vmatprep.subr.bf16.mxu0 %v924
  %2085 = vmatpush1.bf16.msra.mxu0 %v923
  %2086 = vmatprep.subr.bf16.mxu0 %v920
  %2087 = vmatpush1.bf16.msra.mxu0 %v919
  %2088 = vmatprep.subr.bf16.mxu0 %v980
  %2089 = vmatpush2.bf16.msra.mxu0 %v979
  %2090 = vmatprep.subr.bf16.mxu0 %v976
  %2091 = vmatpush2.bf16.msra.mxu0 %v975
  %2092 = vmatprep.subr.bf16.mxu0 %v972
  %2093 = vmatpush2.bf16.msra.mxu0 %v971
  %2094 = vmatprep.subr.bf16.mxu0 %v968
  %2095 = vmatpush2.bf16.msra.mxu0 %v967
  %2096 = vmatprep.subr.bf16.mxu0 %v964
  %2097 = vmatpush2.bf16.msra.mxu0 %v963
  %2098 = vmatprep.subr.bf16.mxu0 %v960
  %2099 = vmatpush2.bf16.msra.mxu0 %v959
  %2100 = vmatprep.subr.bf16.mxu0 %v956
  %2101 = vmatpush2.bf16.msra.mxu0 %v955
  %2102 = vmatprep.subr.bf16.mxu0 %v952
  %2103 = vmatpush2.bf16.msra.mxu0 %v951
  %2104 = vmatprep.mubr.bf16.mxu0 %v1812
  %2105 = vmatmul.mubr.bf16.gmra.mxu0 %v1811
  %v2106 = vpop.f32.mrf.mxu0
  %v2107 = vadd.f32 0.0, %v2106
  %v2108 = vpop.f32.mrf.mxu0
  %v2109 = vadd.f32 0.0, %v2108
  %v2110 = vpop.f32.mrf.mxu0
  %v2111 = vadd.f32 0.0, %v2110
  %v2112 = vpop.f32.mrf.mxu0
  %v2113 = vadd.f32 0.0, %v2112
  %2114 = vmatprep.mubr.bf16.mxu0 %v1818
  %2115 = vmatmul.mubr.bf16.gmra.mxu0 %v1817
  %v2116 = vpop.f32.mrf.mxu0
  %v2117 = vadd.f32 0.0, %v2116
  %v2118 = vpop.f32.mrf.mxu0
  %v2119 = vadd.f32 0.0, %v2118
  %v2120 = vpop.f32.mrf.mxu0
  %v2121 = vadd.f32 0.0, %v2120
  %v2122 = vpop.f32.mrf.mxu0
  %v2123 = vadd.f32 0.0, %v2122
  %2124 = vmatprep.mubr.bf16.mxu0 %v1824
  %2125 = vmatmul.mubr.bf16.gmra.mxu0 %v1823
  %v2126 = vpop.f32.mrf.mxu0
  %v2127 = vadd.f32 0.0, %v2126
  %v2128 = vpop.f32.mrf.mxu0
  %v2129 = vadd.f32 0.0, %v2128
  %v2130 = vpop.f32.mrf.mxu0
  %v2131 = vadd.f32 0.0, %v2130
  %v2132 = vpop.f32.mrf.mxu0
  %v2133 = vadd.f32 0.0, %v2132
  %2134 = vmatprep.mubr.bf16.mxu0 %v1830
  %2135 = vmatmul.mubr.bf16.gmra.mxu0 %v1829
  %v2136 = vpop.f32.mrf.mxu0
  %v2137 = vadd.f32 0.0, %v2136
  %v2138 = vpop.f32.mrf.mxu0
  %v2139 = vadd.f32 0.0, %v2138
  %v2140 = vpop.f32.mrf.mxu0
  %v2141 = vpop.f32.mrf.mxu0
  %2142 = vdwg.mxu0
  %2143 = vmatprep.subr.bf16.mxu0 %v1012
  %2144 = vmatpush1.bf16.msra.mxu0 %v1011
  %2145 = vmatprep.subr.bf16.mxu0 %v1008
  %2146 = vmatpush1.bf16.msra.mxu0 %v1007
  %2147 = vmatprep.subr.bf16.mxu0 %v1004
  %2148 = vmatpush1.bf16.msra.mxu0 %v1003
  %2149 = vmatprep.subr.bf16.mxu0 %v1000
  %2150 = vmatpush1.bf16.msra.mxu0 %v999
  %2151 = vmatprep.subr.bf16.mxu0 %v996
  %2152 = vmatpush1.bf16.msra.mxu0 %v995
  %2153 = vmatprep.subr.bf16.mxu0 %v992
  %2154 = vmatpush1.bf16.msra.mxu0 %v991
  %2155 = vmatprep.subr.bf16.mxu0 %v988
  %2156 = vmatpush1.bf16.msra.mxu0 %v987
  %2157 = vmatprep.subr.bf16.mxu0 %v984
  %2158 = vmatpush1.bf16.msra.mxu0 %v983
  %2159 = vmatprep.subr.bf16.mxu0 %v1044
  %2160 = vmatpush2.bf16.msra.mxu0 %v1043
  %2161 = vmatprep.subr.bf16.mxu0 %v1040
  %2162 = vmatpush2.bf16.msra.mxu0 %v1039
  %2163 = vmatprep.subr.bf16.mxu0 %v1036
  %2164 = vmatpush2.bf16.msra.mxu0 %v1035
  %2165 = vmatprep.subr.bf16.mxu0 %v1032
  %2166 = vmatpush2.bf16.msra.mxu0 %v1031
  %2167 = vmatprep.subr.bf16.mxu0 %v1028
  %2168 = vmatpush2.bf16.msra.mxu0 %v1027
  %2169 = vmatprep.subr.bf16.mxu0 %v1024
  %2170 = vmatpush2.bf16.msra.mxu0 %v1023
  %2171 = vmatprep.subr.bf16.mxu0 %v1020
  %2172 = vmatpush2.bf16.msra.mxu0 %v1019
  %2173 = vmatprep.subr.bf16.mxu0 %v1016
  %2174 = vmatpush2.bf16.msra.mxu0 %v1015
  %2175 = vmatprep.mubr.bf16.mxu0 %v1814
  %2176 = vmatmul.mubr.bf16.gmra.mxu0 %v1813
  %v2177 = vpop.f32.mrf.mxu0
  %v2178 = vadd.f32 %v2107, %v2177
  %v2179 = vpop.f32.mrf.mxu0
  %v2180 = vadd.f32 %v2109, %v2179
  %v2181 = vpop.f32.mrf.mxu0
  %v2182 = vadd.f32 %v2111, %v2181
  %v2183 = vpop.f32.mrf.mxu0
  %v2184 = vadd.f32 %v2113, %v2183
  %2185 = vmatprep.mubr.bf16.mxu0 %v1820
  %2186 = vmatmul.mubr.bf16.gmra.mxu0 %v1819
  %v2187 = vpop.f32.mrf.mxu0
  %v2188 = vadd.f32 %v2117, %v2187
  %v2189 = vpop.f32.mrf.mxu0
  %v2190 = vadd.f32 %v2119, %v2189
  %v2191 = vpop.f32.mrf.mxu0
  %v2192 = vadd.f32 %v2121, %v2191
  %v2193 = vpop.f32.mrf.mxu0
  %v2194 = vadd.f32 %v2123, %v2193
  %2195 = vmatprep.mubr.bf16.mxu0 %v1826
  %2196 = vmatmul.mubr.bf16.gmra.mxu0 %v1825
  %v2197 = vpop.f32.mrf.mxu0
  %v2198 = vadd.f32 %v2127, %v2197
  %v2199 = vpop.f32.mrf.mxu0
  %v2200 = vadd.f32 %v2129, %v2199
  %v2201 = vpop.f32.mrf.mxu0
  %v2202 = vadd.f32 %v2131, %v2201
  %v2203 = vpop.f32.mrf.mxu0
  %v2204 = vadd.f32 %v2133, %v2203
  %2205 = vmatprep.mubr.bf16.mxu0 %v1832
  %2206 = vmatmul.mubr.bf16.gmra.mxu0 %v1831
  %v2207 = vpop.f32.mrf.mxu0
  %v2208 = vadd.f32 %v2137, %v2207
  %v2209 = vpop.f32.mrf.mxu0
  %v2210 = vadd.f32 %v2139, %v2209
  %v2211 = vpop.f32.mrf.mxu0
  %v2212 = vpop.f32.mrf.mxu0
  %2213 = vdwg.mxu0
  %2214 = vmatprep.subr.bf16.mxu0 %v1076
  %2215 = vmatpush1.bf16.msra.mxu0 %v1075
  %2216 = vmatprep.subr.bf16.mxu0 %v1072
  %2217 = vmatpush1.bf16.msra.mxu0 %v1071
  %2218 = vmatprep.subr.bf16.mxu0 %v1068
  %2219 = vmatpush1.bf16.msra.mxu0 %v1067
  %2220 = vmatprep.subr.bf16.mxu0 %v1064
  %2221 = vmatpush1.bf16.msra.mxu0 %v1063
  %2222 = vmatprep.subr.bf16.mxu0 %v1060
  %2223 = vmatpush1.bf16.msra.mxu0 %v1059
  %2224 = vmatprep.subr.bf16.mxu0 %v1056
  %2225 = vmatpush1.bf16.msra.mxu0 %v1055
  %2226 = vmatprep.subr.bf16.mxu0 %v1052
  %2227 = vmatpush1.bf16.msra.mxu0 %v1051
  %2228 = vmatprep.subr.bf16.mxu0 %v1048
  %2229 = vmatpush1.bf16.msra.mxu0 %v1047
  %2230 = vmatprep.subr.bf16.mxu0 %v1108
  %2231 = vmatpush2.bf16.msra.mxu0 %v1107
  %2232 = vmatprep.subr.bf16.mxu0 %v1104
  %2233 = vmatpush2.bf16.msra.mxu0 %v1103
  %2234 = vmatprep.subr.bf16.mxu0 %v1100
  %2235 = vmatpush2.bf16.msra.mxu0 %v1099
  %2236 = vmatprep.subr.bf16.mxu0 %v1096
  %2237 = vmatpush2.bf16.msra.mxu0 %v1095
  %2238 = vmatprep.subr.bf16.mxu0 %v1092
  %2239 = vmatpush2.bf16.msra.mxu0 %v1091
  %2240 = vmatprep.subr.bf16.mxu0 %v1088
  %2241 = vmatpush2.bf16.msra.mxu0 %v1087
  %2242 = vmatprep.subr.bf16.mxu0 %v1084
  %2243 = vmatpush2.bf16.msra.mxu0 %v1083
  %2244 = vmatprep.subr.bf16.mxu0 %v1080
  %2245 = vmatpush2.bf16.msra.mxu0 %v1079
  %2246 = vmatprep.mubr.bf16.mxu0 %v1816
  %2247 = vmatmul.mubr.bf16.gmra.mxu0 %v1815
  %v2248 = vpop.f32.mrf.mxu0
  %v2249 = vadd.f32 %v2178, %v2248
  %v2250 = vpop.f32.mrf.mxu0
  %v2251 = vadd.f32 %v2180, %v2250
  %v2252 = vpop.f32.mrf.mxu0
  %v2253 = vadd.f32 %v2182, %v2252
  %v2254 = vpop.f32.mrf.mxu0
  %v2255 = vadd.f32 %v2184, %v2254
  %2256 = vmatprep.mubr.bf16.mxu0 %v1822
  %2257 = vmatmul.mubr.bf16.gmra.mxu0 %v1821
  %v2258 = vpop.f32.mrf.mxu0
  %v2259 = vadd.f32 %v2188, %v2258
  %v2260 = vpop.f32.mrf.mxu0
  %v2261 = vadd.f32 %v2190, %v2260
  %v2262 = vpop.f32.mrf.mxu0
  %v2263 = vadd.f32 %v2192, %v2262
  %v2264 = vpop.f32.mrf.mxu0
  %v2265 = vadd.f32 %v2194, %v2264
  %2266 = vmatprep.mubr.bf16.mxu0 %v1828
  %2267 = vmatmul.mubr.bf16.gmra.mxu0 %v1827
  %v2268 = vpop.f32.mrf.mxu0
  %v2269 = vadd.f32 %v2198, %v2268
  %v2270 = vpop.f32.mrf.mxu0
  %v2271 = vadd.f32 %v2200, %v2270
  %v2272 = vpop.f32.mrf.mxu0
  %v2273 = vadd.f32 %v2202, %v2272
  %v2274 = vpop.f32.mrf.mxu0
  %v2275 = vadd.f32 %v2204, %v2274
  %2276 = vmatprep.mubr.bf16.mxu0 %v1834
  %2277 = vmatmul.mubr.bf16.gmra.mxu0 %v1833
  %v2278 = vpop.f32.mrf.mxu0
  %v2279 = vadd.f32 %v2208, %v2278
  %v2280 = vpop.f32.mrf.mxu0
  %v2281 = vadd.f32 %v2210, %v2280
  %v2282 = vpop.f32.mrf.mxu0
  %v2283 = vpop.f32.mrf.mxu0
  %2284 = vdwg.mxu0
  %v2285 = vmax.f32 %v1478, %v2036
  %v2286 = vmax.f32 %v1480, %v2038
  %v2287 = vmax.f32 %v1691, %v2249
  %v2288 = vmax.f32 %v1693, %v2251
  %v2289 = vmax.f32 %v1482, %v2040
  %v2290 = vmax.f32 %v1484, %v2042
  %v2291 = vmax.f32 %v1695, %v2253
  %v2292 = vmax.f32 %v1697, %v2255
  %v2293 = vmax.f32 %v1488, %v2046
  %v2294 = vmax.f32 %v1490, %v2048
  %v2295 = vmax.f32 %v1701, %v2259
  %v2296 = vmax.f32 %v1703, %v2261
  %v2297 = vmax.f32 %v1492, %v2050
  %v2298 = vmax.f32 %v1494, %v2052
  %v2299 = vmax.f32 %v1705, %v2263
  %v2300 = vmax.f32 %v1707, %v2265
  %v2301 = vmax.f32 %v1498, %v2056
  %v2302 = vmax.f32 %v1500, %v2058
  %v2303 = vmax.f32 %v1711, %v2269
  %v2304 = vmax.f32 %v1713, %v2271
  %v2305 = vmax.f32 %v1502, %v2060
  %v2306 = vmax.f32 %v1504, %v2062
  %v2307 = vmax.f32 %v1715, %v2273
  %v2308 = vmax.f32 %v1717, %v2275
  %v2309 = vmax.f32 %v1508, %v2066
  %v2310 = vmax.f32 %v1510, %v2068
  %v2311 = vmax.f32 %v1721, %v2279
  %v2312 = vmax.f32 %v1723, %v2281
  %v2313 = vmax.f32 %v2285, %v2287
  %v2314 = vmax.f32 %v2286, %v2288
  %v2315 = vmax.f32 %v2289, %v2291
  %v2316 = vmax.f32 %v2290, %v2292
  %v2317 = vmax.f32 %v2293, %v2295
  %v2318 = vmax.f32 %v2294, %v2296
  %v2319 = vmax.f32 %v2297, %v2299
  %v2320 = vmax.f32 %v2298, %v2300
  %v2321 = vmax.f32 %v2301, %v2303
  %v2322 = vmax.f32 %v2302, %v2304
  %v2323 = vmax.f32 %v2305, %v2307
  %v2324 = vmax.f32 %v2306, %v2308
  %v2325 = vmax.f32 %v2309, %v2311
  %v2326 = vmax.f32 %v2310, %v2312
  %v2327 = vld [vmem:[%s3] sm:$0x3]
  %v2329 = vlaneseq
  %v2330 = vshrl.u32 %v2329, 7
  %v2331 = vsub.s32 0, %v2330
  %v2332 = vrot.slane %v2327, %v2331
  %v2333 = vlaneseq
  %v2334 = vshrl.u32 %v2333, 7
  %v2335 = vsub.s32 1, %v2334
  %v2336 = vrot.slane %v2327, %v2335
  %v2339 = vadd.f32 %v2313, %v2332
  %v2340 = vadd.f32 %v2314, %v2336
  %v2341 = vadd.f32 %v2315, %v2332
  %v2342 = vadd.f32 %v2316, %v2336
  %v2343 = vadd.f32 %v2317, %v2332
  %v2344 = vadd.f32 %v2318, %v2336
  %v2345 = vadd.f32 %v2319, %v2332
  %v2346 = vadd.f32 %v2320, %v2336
  %v2347 = vadd.f32 %v2321, %v2332
  %v2348 = vadd.f32 %v2322, %v2336
  %v2349 = vadd.f32 %v2323, %v2332
  %v2350 = vadd.f32 %v2324, %v2336
  %v2351 = vadd.f32 %v2325, %v2332
  %v2352 = vadd.f32 %v2326, %v2336
  %v2353 = vmax.f32 %v2339, 0.0
  %v2354 = vmax.f32 %v2340, 0.0
  %v2355 = vmax.f32 %v2341, 0.0
  %v2356 = vmax.f32 %v2342, 0.0
  %v2357 = vmax.f32 %v2343, 0.0
  %v2358 = vmax.f32 %v2344, 0.0
  %v2359 = vmax.f32 %v2345, 0.0
  %v2360 = vmax.f32 %v2346, 0.0
  %v2361 = vmax.f32 %v2347, 0.0
  %v2362 = vmax.f32 %v2348, 0.0
  %v2363 = vmax.f32 %v2349, 0.0
  %v2364 = vmax.f32 %v2350, 0.0
  %v2365 = vmax.f32 %v2351, 0.0
  %v2366 = vmax.f32 %v2352, 0.0
  %v2367 = vpack.c.bf16 %v2355, %v2353
  %v2368 = vpack.c.bf16 %v2356, %v2354
  %v2369 = vpack.c.bf16 %v2359, %v2357
  %v2370 = vpack.c.bf16 %v2360, %v2358
  %v2371 = vpack.c.bf16 %v2363, %v2361
  %v2372 = vpack.c.bf16 %v2364, %v2362
  %v2373 = vpack.c.bf16 %v2365, %v2365
  %v2374 = vpack.c.bf16 %v2366, %v2366
  %v2383 = vunpack.c.l.b16 %v2367
  %v2384 = vunpack.c.l.b16 %v2368
  %v2385 = vunpack.c.h.b16 %v2367
  %v2386 = vunpack.c.h.b16 %v2368
  %v2387 = vunpack.c.l.b16 %v2369
  %v2388 = vunpack.c.l.b16 %v2370
  %v2389 = vunpack.c.h.b16 %v2369
  %v2390 = vunpack.c.h.b16 %v2370
  %v2391 = vunpack.c.l.b16 %v2371
  %v2392 = vunpack.c.l.b16 %v2372
  %v2393 = vunpack.c.h.b16 %v2371
  %v2394 = vunpack.c.h.b16 %v2372
  %v2395 = vunpack.c.l.b16 %v2373
  %v2396 = vunpack.c.l.b16 %v2374
  %v2397 = vpack.c.b16 %v2384, %v2383
  %v2398 = vpack.c.b16 %v2386, %v2385
  %v2399 = vpack.c.b16 %v2388, %v2387
  %v2400 = vpack.c.b16 %v2390, %v2389
  %v2401 = vpack.c.b16 %v2392, %v2391
  %v2402 = vpack.c.b16 %v2394, %v2393
  %v2403 = vpack.c.b16 %v2396, %v2395
  %2411 = vst [vmem:[%s4] sm:$0xff] %v2397
  %2412 = vst [vmem:[%s4 + $0x8] sm:$0xff] %v2398
  %2413 = vst [vmem:[%s4 + $0x10] sm:$0xff] %v2399
  %2414 = vst [vmem:[%s4 + $0x18] sm:$0xff] %v2400
  %2415 = vst [vmem:[%s4 + $0x20] sm:$0xff] %v2401
  %2416 = vst [vmem:[%s4 + $0x28] sm:$0xff] %v2402
  %2417 = vst [vmem:[%s4 + $0x30] sm:$0xff] %v2403
  // Predicated region
  $region18: #{cnn_forward.4} parent=0 // pred_check
    _
  $region19: #{cnn_forward.4} parent=0 // pred_check_branch
    %2419 = sbr.rel (0) target = $region21
  $region20: #{cnn_forward.4} parent=0 // pred_region
    _
  $region21: #{cnn_forward.4} parent=0 // pred_fallthru
    _
  // Predicated region
  $region22: #{cnn_forward.4} parent=0 // pred_check
    _
  $region23: #{cnn_forward.4} parent=0 // pred_check_branch
    %2421 = sbr.rel (0) target = $region25
  $region24: #{cnn_forward.4} parent=0 // pred_region
    _
  $region25: #{cnn_forward.4} parent=0 // pred_fallthru
    _

</llo_original>
